<compile_context>
chip_gen: v6e
topology: v6e:2x2x1
jax: 0.10.0
libtpu: 0.0.40
codegen_flags: <defaults>
</compile_context>

<pallas_src>
import functools

import numpy as np
import jax
import jax.numpy as jnp
from jax import lax
from jax.experimental import pallas as pl
from jax.experimental.pallas import tpu as pltpu

BN_EPS = 1e-5
LRELU_SLOPE = 0.2


def _vmem_spec():
    return pl.BlockSpec(memory_space=pltpu.MemorySpace.VMEM)


# ---------------------------------------------------------------------------
# In-kernel helpers
# ---------------------------------------------------------------------------
def _bn_lrelu(y, gamma, beta, n_count):
    """Training-mode BatchNorm2d + LeakyReLU(0.2) on an (R, G*C) f32 slab whose
    columns are (group-major, channel-minor); gamma/beta are (1, C).

    One-pass stats (sum / sum-of-squares), log2 tree reduction over the G column
    groups, log2 doubling broadcast of the per-channel affine."""
    c = gamma.shape[1]
    n_cols = y.shape[1]
    s = jnp.sum(y, axis=0, keepdims=True)          # (1, G*C)
    sq = jnp.sum(y * y, axis=0, keepdims=True)     # (1, G*C)
    while s.shape[1] > c:                          # fold groups pairwise
        half = s.shape[1] // 2
        s = s[:, :half] + s[:, half:]
        sq = sq[:, :half] + sq[:, half:]
    inv_n = 1.0 / float(n_count)
    mean = s * inv_n
    var = sq * inv_n - mean * mean                 # biased, as in torch BN training
    scale = gamma * lax.rsqrt(var + BN_EPS)        # (1, C)
    shift = beta - mean * scale
    while scale.shape[1] < n_cols:                 # broadcast back to (1, G*C)
        scale = jnp.concatenate([scale, scale], axis=1)
        shift = jnp.concatenate([shift, shift], axis=1)
    yn = y * scale + shift
    return jnp.where(yn > 0, yn, LRELU_SLOPE * yn)


# ---------------------------------------------------------------------------
# The fused generator kernel
# ---------------------------------------------------------------------------
def _make_generator_kernel(batch, c2, c3, c4p):
    B = batch
    H1, W1 = 8, 8        # block1 output spatial
    H2, W2 = 16, 16      # block2 output spatial
    H3, W3 = 32, 32      # block3 output spatial
    row1 = W1 * c2       # 256: row width of block2's padded input scratch (w, c)
    row2 = W2 * c3       # 256: row width of block3's padded input scratch
    row3 = W3 * c4p      # 128: row width of the output

    def kernel(z_ref, a1_ref, ab1_ref, g1_ref, bt1_ref,
               w2_ref, g2_ref, bt2_ref,
               w3_ref, g3_ref, bt3_ref,
               out_ref, s2_ref, s3_ref):
        # ---- block 1: fused Linear + ConvT + BN + LeakyReLU ----------------
        # y1 cols: (h in [0,8), w in [0,8), c2) -> width already interleaved
        y1 = jnp.dot(z_ref[...].astype(jnp.bfloat16), a1_ref[...],
                     preferred_element_type=jnp.float32) + ab1_ref[...]
        y1 = _bn_lrelu(y1, g1_ref[...], bt1_ref[...], B * H1 * W1)

        # height interleave: one store per output pixel row into the padded
        # (B*(H1+1), row1) scratch; the pad row stays zero.
        s2_ref[...] = jnp.zeros(s2_ref.shape, s2_ref.dtype)
        for n in range(B):
            for h in range(H1):
                s2_ref[n * (H1 + 1) + h:n * (H1 + 1) + h + 1, :] = (
                    y1[n:n + 1, h * row1:(h + 1) * row1])

        # ---- block 2: ConvT + BN + LeakyReLU --------------------------------
        pieces = []
        for dh in range(2):                       # two height taps = shifted windows
            rows = [s2_ref[n * (H1 + 1) + dh:n * (H1 + 1) + dh + H1, :]
                    for n in range(B)]
            pieces.append(jnp.concatenate(rows, axis=0))
        patch2 = jnp.concatenate(pieces, axis=1).astype(jnp.bfloat16)   # (B*8, 512)
        y2 = jnp.dot(patch2, w2_ref[...], preferred_element_type=jnp.float32)
        y2 = _bn_lrelu(y2, g2_ref[...], bt2_ref[...], B * H2 * W2)      # (B*8, 512)

        s3_ref[...] = jnp.zeros(s3_ref.shape, s3_ref.dtype)
        for n in range(B):
            for m in range(H1):
                for ph in range(2):
                    s3_ref[n * (H2 + 1) + 2 * m + ph:
                           n * (H2 + 1) + 2 * m + ph + 1, :] = (
                        y2[n * H1 + m:n * H1 + m + 1, ph * row2:(ph + 1) * row2])

        # ---- block 3: ConvT + BN + LeakyReLU --------------------------------
        pieces = []
        for dh in range(2):
            rows = [s3_ref[n * (H2 + 1) + dh:n * (H2 + 1) + dh + H2, :]
                    for n in range(B)]
            pieces.append(jnp.concatenate(rows, axis=0))
        patch3 = jnp.concatenate(pieces, axis=1).astype(jnp.bfloat16)   # (B*16, 512)
        y3 = jnp.dot(patch3, w3_ref[...], preferred_element_type=jnp.float32)
        y3 = _bn_lrelu(y3, g3_ref[...], bt3_ref[...], B * H3 * W3)      # (B*16, 256)

        # final height interleave straight into the (B*32, 128) output
        for n in range(B):
            for m in range(H2):
                for ph in range(2):
                    out_ref[n * H3 + 2 * m + ph:n * H3 + 2 * m + ph + 1, :] = (
                        y3[n * H2 + m:n * H2 + m + 1, ph * row3:(ph + 1) * row3])

    return kernel


def generator_forward(z, prep, hidden_dim, channel_dim):
    B = z.shape[0]
    c2, c3 = hidden_dim // 2, hidden_dim // 4
    c4p = prep["g3"].shape[1]
    out = pl.pallas_call(
        _make_generator_kernel(B, c2, c3, c4p),
        out_shape=jax.ShapeDtypeStruct((B * 32, 32 * c4p), jnp.float32),
        in_specs=[_vmem_spec()] * 11,
        out_specs=_vmem_spec(),
        scratch_shapes=[
            pltpu.VMEM((B * 9, 8 * c2), jnp.float32),    # block2 padded input rows
            pltpu.VMEM((B * 17, 16 * c3), jnp.float32),  # block3 padded input rows
        ],
    )(z, prep["a1"], prep["ab1"], prep["g1"], prep["b1"],
      prep["w2"], prep["g2"], prep["b2"],
      prep["w3"], prep["g3"], prep["b3"])
    out = out.reshape(B, 32, 32, c4p)[..., :channel_dim]     # NHWC, drop pad chans
    return jnp.transpose(out, (0, 3, 1, 2))                  # NCHW


# ---------------------------------------------------------------------------
# One-time (hoisted) parameter preprocessing
# ---------------------------------------------------------------------------
def _banded_conv_matrix(w_conv, w_in, c_out_pad):
    """ConvTranspose2d(s=2,k=3,p=1,op=1) weight (Cin,Cout,3,3) -> block-banded
    matrix mapping patch columns (dh, w_in, cin) to output columns
    (ph, w_out, cout_padded).  All width taps / phases / boundary handling are
    folded in host-side."""
    w_conv = np.asarray(w_conv, np.float32)
    cin, cout = w_conv.shape[0], w_conv.shape[1]
    w_out_n = 2 * w_in
    mat = np.zeros((2, w_in, cin, 2, w_out_n, c_out_pad), np.float32)
    for dh in range(2):
        for ph in range(2):
            kh = ph - 2 * dh + 1                 # oh = 2*(m+dh) + kh - 1 = 2m+ph
            if not (0 <= kh < 3):
                continue
            for ow in range(w_out_n):
                p, pw = ow // 2, ow % 2
                for dw in range(2):
                    iw = p + dw
                    kw = pw - 2 * dw + 1
                    if iw >= w_in or not (0 <= kw < 3):
                        continue
                    mat[dh, iw, :, ph, ow, :cout] += w_conv[:, :, kh, kw]
    return mat.reshape(2 * w_in * cin, 2 * w_out_n * c_out_pad)


def _block1_fused_matrix(lin_w_t, lin_b, w1):
    """Fold Linear(latent -> c1*4*4) and block1's ConvT into one matrix:
    z @ A1 + ab1 gives block1's pre-BN output with columns (h, w, cout)."""
    lin_w_t = np.asarray(lin_w_t, np.float32)
    lin_b = np.asarray(lin_b, np.float32)
    w1 = np.asarray(w1, np.float32)
    cin, cout = w1.shape[0], w1.shape[1]
    hi = wi = 4
    ho = wo = 8
    # conv-as-matrix: rows (ci, ih, iw) in torch (c,h,w) view order, cols (oh, ow, co)
    K = np.zeros((cin, hi, wi, ho, wo, cout), np.float32)
    for oh in range(ho):
        m, ph = oh // 2, oh % 2
        for dh in range(2):
            ih = m + dh
            kh = ph - 2 * dh + 1
            if ih >= hi or not (0 <= kh < 3):
                continue
            for ow in range(wo):
                p, pw = ow // 2, ow % 2
                for dw in range(2):
                    iw = p + dw
                    kw = pw - 2 * dw + 1
                    if iw >= wi or not (0 <= kw < 3):
                        continue
                    K[:, ih, iw, oh, ow, :] += w1[:, :, kh, kw]
    K = K.reshape(cin * hi * wi, ho * wo * cout)
    a1 = lin_w_t @ K                                  # (latent, 2048)
    ab1 = (lin_b @ K).reshape(1, -1)                  # (1, 2048)
    return a1, ab1


def prepare_params(params, hidden_dim, channel_dim):
    c2, c3 = hidden_dim // 2, hidden_dim // 4
    c4p = ((channel_dim + 3) // 4) * 4   # pad out channels -> 128-lane-dense rows

    a1, ab1 = _block1_fused_matrix(params["lin_w_t"], params["lin_b"], params["w1"])

    def vec(v, n):                        # (1, n) f32, zero-padded
        o = np.zeros((1, n), np.float32)
        v = np.asarray(v, np.float32).reshape(-1)
        o[0, :v.shape[0]] = v
        return jnp.asarray(o)

    return {
        "a1": jnp.asarray(a1, jnp.bfloat16),
        "ab1": jnp.asarray(ab1, jnp.float32),
        "g1": vec(params["g1"], c2), "b1": vec(params["b1"], c2),
        "w2": jnp.asarray(_banded_conv_matrix(params["w2"], 8, c3), jnp.bfloat16),
        "g2": vec(params["g2"], c3), "b2": vec(params["b2"], c3),
        "w3": jnp.asarray(_banded_conv_matrix(params["w3"], 16, c4p), jnp.bfloat16),
        "g3": vec(params["g3"], c4p), "b3": vec(params["b3"], c4p),
    }


# ---------------------------------------------------------------------------
# Pure-numpy reference (silent correctness check)
# ---------------------------------------------------------------------------
def _np_convt(x, w):  # x: (N,Cin,H,W), w: (Cin,Cout,3,3); s=2,p=1,op=1
    N, Cin, H, W = x.shape
    Cout = w.shape[1]
    Ho, Wo = 2 * H, 2 * W
    out = np.zeros((N, Cout, Ho, Wo), np.float32)
    for ih in range(H):
        for iw in range(W):
            for kh in range(3):
                for kw in range(3):
                    oh = 2 * ih + kh - 1
                    ow = 2 * iw + kw - 1
                    if 0 <= oh < Ho and 0 <= ow < Wo:
                        out[:, :, oh, ow] += x[:, :, ih, iw] @ w[:, :, kh, kw]
    return out


def _np_bn_lrelu(x, gamma, beta):
    mean = x.mean(axis=(0, 2, 3), keepdims=True)
    var = x.var(axis=(0, 2, 3), keepdims=True)   # biased, as in torch BN training
    y = (x - mean) / np.sqrt(var + BN_EPS)
    y = y * gamma.reshape(1, -1, 1, 1) + beta.reshape(1, -1, 1, 1)
    return np.where(y > 0, y, LRELU_SLOPE * y)


def _np_forward(z, params, hidden_dim):
    z = np.asarray(z)
    x = z @ np.asarray(params["lin_w_t"]) + np.asarray(params["lin_b"])
    x = x.reshape(z.shape[0], hidden_dim, 4, 4)
    for i in (1, 2, 3):
        x = _np_convt(x, np.asarray(params[f"w{i}"]))
        x = _np_bn_lrelu(x, np.asarray(params[f"g{i}"]), np.asarray(params[f"b{i}"]))
    return x


# ---------------------------------------------------------------------------
# Main
# ---------------------------------------------------------------------------
if __name__ == "__main__":
    channel_dim, hidden_dim, latent_dim = 3, 64, 128
    batch = 2

    key = jax.random.PRNGKey(0)
    k_z, k_lw, k_lb, k_w1, k_w2, k_w3 = jax.random.split(key, 6)

    # PyTorch-layout synthetic parameters (conv weights ~ N(0, 0.02); BN gamma=1,
    # beta=0 as in torch defaults).
    params = {
        "lin_w_t": 0.02 * jax.random.normal(k_lw, (latent_dim, hidden_dim * 4 * 4), jnp.float32),
        "lin_b": 0.01 * jax.random.normal(k_lb, (hidden_dim * 4 * 4,), jnp.float32),
        "w1": 0.02 * jax.random.normal(k_w1, (hidden_dim, hidden_dim // 2, 3, 3), jnp.float32),
        "g1": jnp.ones((hidden_dim // 2,), jnp.float32),
        "b1": jnp.zeros((hidden_dim // 2,), jnp.float32),
        "w2": 0.02 * jax.random.normal(k_w2, (hidden_dim // 2, hidden_dim // 4, 3, 3), jnp.float32),
        "g2": jnp.ones((hidden_dim // 4,), jnp.float32),
        "b2": jnp.zeros((hidden_dim // 4,), jnp.float32),
        "w3": 0.02 * jax.random.normal(k_w3, (hidden_dim // 4, channel_dim, 3, 3), jnp.float32),
        "g3": jnp.ones((channel_dim,), jnp.float32),
        "b3": jnp.zeros((channel_dim,), jnp.float32),
    }

    prep = prepare_params(params, hidden_dim, channel_dim)        # hoisted, once
    z = jax.random.normal(k_z, (batch, latent_dim), jnp.float32)

    fwd = jax.jit(functools.partial(generator_forward,
                                    hidden_dim=hidden_dim,
                                    channel_dim=channel_dim))
    out = jax.block_until_ready(fwd(z, prep))
    assert out.shape == (batch, channel_dim, 32, 32)

    # Silent correctness check (f32 reference; the kernel's matmuls use bf16
    # operands with f32 accumulation and BN renormalizes, so a few % is the
    # expected gap).
    ref = _np_forward(z, params, hidden_dim)
    assert np.all(np.isfinite(np.asarray(out)))
    np.testing.assert_allclose(np.asarray(out), ref, rtol=5e-2, atol=5e-2)

    print("KERNEL_OK")
</pallas_src>

<mosaic_0001>
module attributes {stable_mosaic.version = 11 : i64} {
  func.func @kernel(%arg0: memref<2x128xf32, #tpu.memory_space<vmem>>, %arg1: memref<128x2048xbf16, #tpu.memory_space<vmem>>, %arg2: memref<1x2048xf32, #tpu.memory_space<vmem>>, %arg3: memref<1x32xf32, #tpu.memory_space<vmem>>, %arg4: memref<1x32xf32, #tpu.memory_space<vmem>>, %arg5: memref<512x512xbf16, #tpu.memory_space<vmem>>, %arg6: memref<1x16xf32, #tpu.memory_space<vmem>>, %arg7: memref<1x16xf32, #tpu.memory_space<vmem>>, %arg8: memref<512x256xbf16, #tpu.memory_space<vmem>>, %arg9: memref<1x4xf32, #tpu.memory_space<vmem>>, %arg10: memref<1x4xf32, #tpu.memory_space<vmem>>, %arg11: memref<64x128xf32, #tpu.memory_space<vmem>>, %arg12: memref<18x256xf32, #tpu.memory_space<vmem>>, %arg13: memref<34x256xf32, #tpu.memory_space<vmem>>) attributes {dimension_semantics = [], scalar_prefetch = 0 : i64, scratch_operands = 2 : i64, tpu.core_type = #tpu.core_type<tc>} {
    %c0 = arith.constant 0 : index
    %c0_0 = arith.constant 0 : index
    %0 = vector.load %arg0[%c0, %c0_0] : memref<2x128xf32, #tpu.memory_space<vmem>>, vector<2x128xf32>
    %1 = arith.truncf %0 : vector<2x128xf32> to vector<2x128xbf16>
    %c0_1 = arith.constant 0 : index
    %c0_2 = arith.constant 0 : index
    %2 = vector.load %arg1[%c0_1, %c0_2] : memref<128x2048xbf16, #tpu.memory_space<vmem>>, vector<128x2048xbf16>
    %cst = arith.constant dense<0.000000e+00> : vector<2x2048xf32>
    %3 = tpu.matmul %1, %2, %cst {dimension_numbers = #tpu.dot_dimension_numbers<[1], [0], [0], [1], [0, 0, 1, 1], [], []>} : vector<2x128xbf16>, vector<128x2048xbf16>, vector<2x2048xf32> -> vector<2x2048xf32>
    %c0_3 = arith.constant 0 : index
    %c0_4 = arith.constant 0 : index
    %4 = vector.load %arg2[%c0_3, %c0_4] : memref<1x2048xf32, #tpu.memory_space<vmem>>, vector<1x2048xf32>
    %5 = vector.broadcast %4 : vector<1x2048xf32> to vector<2x2048xf32>
    %6 = arith.addf %3, %5 : vector<2x2048xf32>
    %c0_5 = arith.constant 0 : index
    %c0_6 = arith.constant 0 : index
    %7 = vector.load %arg3[%c0_5, %c0_6] : memref<1x32xf32, #tpu.memory_space<vmem>>, vector<1x32xf32>
    %c0_7 = arith.constant 0 : index
    %c0_8 = arith.constant 0 : index
    %8 = vector.load %arg4[%c0_7, %c0_8] : memref<1x32xf32, #tpu.memory_space<vmem>>, vector<1x32xf32>
    %cst_9 = arith.constant dense<0.000000e+00> : vector<2048xf32>
    %9 = vector.multi_reduction <add>, %6, %cst_9 [0] : vector<2x2048xf32> to vector<2048xf32>
    %10 = vector.shape_cast %9 : vector<2048xf32> to vector<1x2048xf32>
    %11 = arith.mulf %6, %6 : vector<2x2048xf32>
    %cst_10 = arith.constant dense<0.000000e+00> : vector<2048xf32>
    %12 = vector.multi_reduction <add>, %11, %cst_10 [0] : vector<2x2048xf32> to vector<2048xf32>
    %13 = vector.shape_cast %12 : vector<2048xf32> to vector<1x2048xf32>
    %14 = vector.extract_strided_slice %10 {offsets = [0, 0], sizes = [1, 1024], strides = [1, 1]} : vector<1x2048xf32> to vector<1x1024xf32>
    %15 = vector.extract_strided_slice %10 {offsets = [0, 1024], sizes = [1, 1024], strides = [1, 1]} : vector<1x2048xf32> to vector<1x1024xf32>
    %16 = arith.addf %14, %15 : vector<1x1024xf32>
    %17 = vector.extract_strided_slice %13 {offsets = [0, 0], sizes = [1, 1024], strides = [1, 1]} : vector<1x2048xf32> to vector<1x1024xf32>
    %18 = vector.extract_strided_slice %13 {offsets = [0, 1024], sizes = [1, 1024], strides = [1, 1]} : vector<1x2048xf32> to vector<1x1024xf32>
    %19 = arith.addf %17, %18 : vector<1x1024xf32>
    %20 = vector.extract_strided_slice %16 {offsets = [0, 0], sizes = [1, 512], strides = [1, 1]} : vector<1x1024xf32> to vector<1x512xf32>
    %21 = vector.extract_strided_slice %16 {offsets = [0, 512], sizes = [1, 512], strides = [1, 1]} : vector<1x1024xf32> to vector<1x512xf32>
    %22 = arith.addf %20, %21 : vector<1x512xf32>
    %23 = vector.extract_strided_slice %19 {offsets = [0, 0], sizes = [1, 512], strides = [1, 1]} : vector<1x1024xf32> to vector<1x512xf32>
    %24 = vector.extract_strided_slice %19 {offsets = [0, 512], sizes = [1, 512], strides = [1, 1]} : vector<1x1024xf32> to vector<1x512xf32>
    %25 = arith.addf %23, %24 : vector<1x512xf32>
    %26 = vector.extract_strided_slice %22 {offsets = [0, 0], sizes = [1, 256], strides = [1, 1]} : vector<1x512xf32> to vector<1x256xf32>
    %27 = vector.extract_strided_slice %22 {offsets = [0, 256], sizes = [1, 256], strides = [1, 1]} : vector<1x512xf32> to vector<1x256xf32>
    %28 = arith.addf %26, %27 : vector<1x256xf32>
    %29 = vector.extract_strided_slice %25 {offsets = [0, 0], sizes = [1, 256], strides = [1, 1]} : vector<1x512xf32> to vector<1x256xf32>
    %30 = vector.extract_strided_slice %25 {offsets = [0, 256], sizes = [1, 256], strides = [1, 1]} : vector<1x512xf32> to vector<1x256xf32>
    %31 = arith.addf %29, %30 : vector<1x256xf32>
    %32 = vector.extract_strided_slice %28 {offsets = [0, 0], sizes = [1, 128], strides = [1, 1]} : vector<1x256xf32> to vector<1x128xf32>
    %33 = vector.extract_strided_slice %28 {offsets = [0, 128], sizes = [1, 128], strides = [1, 1]} : vector<1x256xf32> to vector<1x128xf32>
    %34 = arith.addf %32, %33 : vector<1x128xf32>
    %35 = vector.extract_strided_slice %31 {offsets = [0, 0], sizes = [1, 128], strides = [1, 1]} : vector<1x256xf32> to vector<1x128xf32>
    %36 = vector.extract_strided_slice %31 {offsets = [0, 128], sizes = [1, 128], strides = [1, 1]} : vector<1x256xf32> to vector<1x128xf32>
    %37 = arith.addf %35, %36 : vector<1x128xf32>
    %38 = vector.extract_strided_slice %34 {offsets = [0, 0], sizes = [1, 64], strides = [1, 1]} : vector<1x128xf32> to vector<1x64xf32>
    %39 = vector.extract_strided_slice %34 {offsets = [0, 64], sizes = [1, 64], strides = [1, 1]} : vector<1x128xf32> to vector<1x64xf32>
    %40 = arith.addf %38, %39 : vector<1x64xf32>
    %41 = vector.extract_strided_slice %37 {offsets = [0, 0], sizes = [1, 64], strides = [1, 1]} : vector<1x128xf32> to vector<1x64xf32>
    %42 = vector.extract_strided_slice %37 {offsets = [0, 64], sizes = [1, 64], strides = [1, 1]} : vector<1x128xf32> to vector<1x64xf32>
    %43 = arith.addf %41, %42 : vector<1x64xf32>
    %44 = vector.extract_strided_slice %40 {offsets = [0, 0], sizes = [1, 32], strides = [1, 1]} : vector<1x64xf32> to vector<1x32xf32>
    %45 = vector.extract_strided_slice %40 {offsets = [0, 32], sizes = [1, 32], strides = [1, 1]} : vector<1x64xf32> to vector<1x32xf32>
    %46 = arith.addf %44, %45 : vector<1x32xf32>
    %47 = vector.extract_strided_slice %43 {offsets = [0, 0], sizes = [1, 32], strides = [1, 1]} : vector<1x64xf32> to vector<1x32xf32>
    %48 = vector.extract_strided_slice %43 {offsets = [0, 32], sizes = [1, 32], strides = [1, 1]} : vector<1x64xf32> to vector<1x32xf32>
    %49 = arith.addf %47, %48 : vector<1x32xf32>
    %cst_11 = arith.constant 7.812500e-03 : f32
    %50 = vector.broadcast %cst_11 : f32 to vector<1x32xf32>
    %51 = arith.mulf %46, %50 : vector<1x32xf32>
    %cst_12 = arith.constant 7.812500e-03 : f32
    %52 = vector.broadcast %cst_12 : f32 to vector<1x32xf32>
    %53 = arith.mulf %49, %52 : vector<1x32xf32>
    %54 = arith.mulf %51, %51 : vector<1x32xf32>
    %55 = arith.subf %53, %54 : vector<1x32xf32>
    %cst_13 = arith.constant 9.99999974E-6 : f32
    %56 = vector.broadcast %cst_13 : f32 to vector<1x32xf32>
    %57 = arith.addf %55, %56 : vector<1x32xf32>
    %58 = math.rsqrt %57 : vector<1x32xf32>
    %59 = arith.mulf %7, %58 : vector<1x32xf32>
    %60 = arith.mulf %51, %59 : vector<1x32xf32>
    %61 = arith.subf %8, %60 : vector<1x32xf32>
    %62 = tpu.concatenate %59, %59 in 1 : vector<1x32xf32>, vector<1x32xf32> -> vector<1x64xf32>
    %63 = tpu.concatenate %61, %61 in 1 : vector<1x32xf32>, vector<1x32xf32> -> vector<1x64xf32>
    %64 = tpu.concatenate %62, %62 in 1 : vector<1x64xf32>, vector<1x64xf32> -> vector<1x128xf32>
    %65 = tpu.concatenate %63, %63 in 1 : vector<1x64xf32>, vector<1x64xf32> -> vector<1x128xf32>
    %66 = tpu.concatenate %64, %64 in 1 : vector<1x128xf32>, vector<1x128xf32> -> vector<1x256xf32>
    %67 = tpu.concatenate %65, %65 in 1 : vector<1x128xf32>, vector<1x128xf32> -> vector<1x256xf32>
    %68 = tpu.concatenate %66, %66 in 1 : vector<1x256xf32>, vector<1x256xf32> -> vector<1x512xf32>
    %69 = tpu.concatenate %67, %67 in 1 : vector<1x256xf32>, vector<1x256xf32> -> vector<1x512xf32>
    %70 = tpu.concatenate %68, %68 in 1 : vector<1x512xf32>, vector<1x512xf32> -> vector<1x1024xf32>
    %71 = tpu.concatenate %69, %69 in 1 : vector<1x512xf32>, vector<1x512xf32> -> vector<1x1024xf32>
    %72 = tpu.concatenate %70, %70 in 1 : vector<1x1024xf32>, vector<1x1024xf32> -> vector<1x2048xf32>
    %73 = tpu.concatenate %71, %71 in 1 : vector<1x1024xf32>, vector<1x1024xf32> -> vector<1x2048xf32>
    %74 = vector.broadcast %72 : vector<1x2048xf32> to vector<2x2048xf32>
    %75 = arith.mulf %6, %74 : vector<2x2048xf32>
    %76 = vector.broadcast %73 : vector<1x2048xf32> to vector<2x2048xf32>
    %77 = arith.addf %75, %76 : vector<2x2048xf32>
    %cst_14 = arith.constant 0.000000e+00 : f32
    %78 = vector.broadcast %cst_14 : f32 to vector<2x2048xf32>
    %79 = arith.cmpf ogt, %77, %78 : vector<2x2048xf32>
    %cst_15 = arith.constant 2.000000e-01 : f32
    %80 = vector.broadcast %cst_15 : f32 to vector<2x2048xf32>
    %81 = arith.mulf %80, %77 : vector<2x2048xf32>
    %82 = arith.select %79, %77, %81 : vector<2x2048xi1>, vector<2x2048xf32>
    %cst_16 = arith.constant 0.000000e+00 : f32
    %83 = vector.broadcast %cst_16 : f32 to vector<18x256xf32>
    %c0_17 = arith.constant 0 : index
    %c0_18 = arith.constant 0 : index
    %84 = vector.load %arg12[%c0_17, %c0_18] : memref<18x256xf32, #tpu.memory_space<vmem>>, vector<18x256xf32>
    tpu.vector_store %arg12[%c0_17, %c0_18], %83 {strides = array<i32>} : memref<18x256xf32, #tpu.memory_space<vmem>>, vector<18x256xf32>,
    %85 = vector.extract_strided_slice %82 {offsets = [0, 0], sizes = [1, 256], strides = [1, 1]} : vector<2x2048xf32> to vector<1x256xf32>
    %c0_19 = arith.constant 0 : index
    %c0_20 = arith.constant 0 : index
    %86 = vector.load %arg12[%c0_19, %c0_20] : memref<18x256xf32, #tpu.memory_space<vmem>>, vector<1x256xf32>
    tpu.vector_store %arg12[%c0_19, %c0_20], %85 {strides = array<i32>} : memref<18x256xf32, #tpu.memory_space<vmem>>, vector<1x256xf32>,
    %87 = vector.extract_strided_slice %82 {offsets = [0, 256], sizes = [1, 256], strides = [1, 1]} : vector<2x2048xf32> to vector<1x256xf32>
    %c1 = arith.constant 1 : index
    %c0_21 = arith.constant 0 : index
    %88 = vector.load %arg12[%c1, %c0_21] : memref<18x256xf32, #tpu.memory_space<vmem>>, vector<1x256xf32>
    tpu.vector_store %arg12[%c1, %c0_21], %87 {strides = array<i32>} : memref<18x256xf32, #tpu.memory_space<vmem>>, vector<1x256xf32>,
    %89 = vector.extract_strided_slice %82 {offsets = [0, 512], sizes = [1, 256], strides = [1, 1]} : vector<2x2048xf32> to vector<1x256xf32>
    %c2 = arith.constant 2 : index
    %c0_22 = arith.constant 0 : index
    %90 = vector.load %arg12[%c2, %c0_22] : memref<18x256xf32, #tpu.memory_space<vmem>>, vector<1x256xf32>
    tpu.vector_store %arg12[%c2, %c0_22], %89 {strides = array<i32>} : memref<18x256xf32, #tpu.memory_space<vmem>>, vector<1x256xf32>,
    %91 = vector.extract_strided_slice %82 {offsets = [0, 768], sizes = [1, 256], strides = [1, 1]} : vector<2x2048xf32> to vector<1x256xf32>
    %c3 = arith.constant 3 : index
    %c0_23 = arith.constant 0 : index
    %92 = vector.load %arg12[%c3, %c0_23] : memref<18x256xf32, #tpu.memory_space<vmem>>, vector<1x256xf32>
    tpu.vector_store %arg12[%c3, %c0_23], %91 {strides = array<i32>} : memref<18x256xf32, #tpu.memory_space<vmem>>, vector<1x256xf32>,
    %93 = vector.extract_strided_slice %82 {offsets = [0, 1024], sizes = [1, 256], strides = [1, 1]} : vector<2x2048xf32> to vector<1x256xf32>
    %c4 = arith.constant 4 : index
    %c0_24 = arith.constant 0 : index
    %94 = vector.load %arg12[%c4, %c0_24] : memref<18x256xf32, #tpu.memory_space<vmem>>, vector<1x256xf32>
    tpu.vector_store %arg12[%c4, %c0_24], %93 {strides = array<i32>} : memref<18x256xf32, #tpu.memory_space<vmem>>, vector<1x256xf32>,
    %95 = vector.extract_strided_slice %82 {offsets = [0, 1280], sizes = [1, 256], strides = [1, 1]} : vector<2x2048xf32> to vector<1x256xf32>
    %c5 = arith.constant 5 : index
    %c0_25 = arith.constant 0 : index
    %96 = vector.load %arg12[%c5, %c0_25] : memref<18x256xf32, #tpu.memory_space<vmem>>, vector<1x256xf32>
    tpu.vector_store %arg12[%c5, %c0_25], %95 {strides = array<i32>} : memref<18x256xf32, #tpu.memory_space<vmem>>, vector<1x256xf32>,
    %97 = vector.extract_strided_slice %82 {offsets = [0, 1536], sizes = [1, 256], strides = [1, 1]} : vector<2x2048xf32> to vector<1x256xf32>
    %c6 = arith.constant 6 : index
    %c0_26 = arith.constant 0 : index
    %98 = vector.load %arg12[%c6, %c0_26] : memref<18x256xf32, #tpu.memory_space<vmem>>, vector<1x256xf32>
    tpu.vector_store %arg12[%c6, %c0_26], %97 {strides = array<i32>} : memref<18x256xf32, #tpu.memory_space<vmem>>, vector<1x256xf32>,
    %99 = vector.extract_strided_slice %82 {offsets = [0, 1792], sizes = [1, 256], strides = [1, 1]} : vector<2x2048xf32> to vector<1x256xf32>
    %c7 = arith.constant 7 : index
    %c0_27 = arith.constant 0 : index
    %100 = vector.load %arg12[%c7, %c0_27] : memref<18x256xf32, #tpu.memory_space<vmem>>, vector<1x256xf32>
    tpu.vector_store %arg12[%c7, %c0_27], %99 {strides = array<i32>} : memref<18x256xf32, #tpu.memory_space<vmem>>, vector<1x256xf32>,
    %101 = vector.extract_strided_slice %82 {offsets = [1, 0], sizes = [1, 256], strides = [1, 1]} : vector<2x2048xf32> to vector<1x256xf32>
    %c9 = arith.constant 9 : index
    %c0_28 = arith.constant 0 : index
    %102 = vector.load %arg12[%c9, %c0_28] : memref<18x256xf32, #tpu.memory_space<vmem>>, vector<1x256xf32>
    tpu.vector_store %arg12[%c9, %c0_28], %101 {strides = array<i32>} : memref<18x256xf32, #tpu.memory_space<vmem>>, vector<1x256xf32>,
    %103 = vector.extract_strided_slice %82 {offsets = [1, 256], sizes = [1, 256], strides = [1, 1]} : vector<2x2048xf32> to vector<1x256xf32>
    %c10 = arith.constant 10 : index
    %c0_29 = arith.constant 0 : index
    %104 = vector.load %arg12[%c10, %c0_29] : memref<18x256xf32, #tpu.memory_space<vmem>>, vector<1x256xf32>
    tpu.vector_store %arg12[%c10, %c0_29], %103 {strides = array<i32>} : memref<18x256xf32, #tpu.memory_space<vmem>>, vector<1x256xf32>,
    %105 = vector.extract_strided_slice %82 {offsets = [1, 512], sizes = [1, 256], strides = [1, 1]} : vector<2x2048xf32> to vector<1x256xf32>
    %c11 = arith.constant 11 : index
    %c0_30 = arith.constant 0 : index
    %106 = vector.load %arg12[%c11, %c0_30] : memref<18x256xf32, #tpu.memory_space<vmem>>, vector<1x256xf32>
    tpu.vector_store %arg12[%c11, %c0_30], %105 {strides = array<i32>} : memref<18x256xf32, #tpu.memory_space<vmem>>, vector<1x256xf32>,
    %107 = vector.extract_strided_slice %82 {offsets = [1, 768], sizes = [1, 256], strides = [1, 1]} : vector<2x2048xf32> to vector<1x256xf32>
    %c12 = arith.constant 12 : index
    %c0_31 = arith.constant 0 : index
    %108 = vector.load %arg12[%c12, %c0_31] : memref<18x256xf32, #tpu.memory_space<vmem>>, vector<1x256xf32>
    tpu.vector_store %arg12[%c12, %c0_31], %107 {strides = array<i32>} : memref<18x256xf32, #tpu.memory_space<vmem>>, vector<1x256xf32>,
    %109 = vector.extract_strided_slice %82 {offsets = [1, 1024], sizes = [1, 256], strides = [1, 1]} : vector<2x2048xf32> to vector<1x256xf32>
    %c13 = arith.constant 13 : index
    %c0_32 = arith.constant 0 : index
    %110 = vector.load %arg12[%c13, %c0_32] : memref<18x256xf32, #tpu.memory_space<vmem>>, vector<1x256xf32>
    tpu.vector_store %arg12[%c13, %c0_32], %109 {strides = array<i32>} : memref<18x256xf32, #tpu.memory_space<vmem>>, vector<1x256xf32>,
    %111 = vector.extract_strided_slice %82 {offsets = [1, 1280], sizes = [1, 256], strides = [1, 1]} : vector<2x2048xf32> to vector<1x256xf32>
    %c14 = arith.constant 14 : index
    %c0_33 = arith.constant 0 : index
    %112 = vector.load %arg12[%c14, %c0_33] : memref<18x256xf32, #tpu.memory_space<vmem>>, vector<1x256xf32>
    tpu.vector_store %arg12[%c14, %c0_33], %111 {strides = array<i32>} : memref<18x256xf32, #tpu.memory_space<vmem>>, vector<1x256xf32>,
    %113 = vector.extract_strided_slice %82 {offsets = [1, 1536], sizes = [1, 256], strides = [1, 1]} : vector<2x2048xf32> to vector<1x256xf32>
    %c15 = arith.constant 15 : index
    %c0_34 = arith.constant 0 : index
    %114 = vector.load %arg12[%c15, %c0_34] : memref<18x256xf32, #tpu.memory_space<vmem>>, vector<1x256xf32>
    tpu.vector_store %arg12[%c15, %c0_34], %113 {strides = array<i32>} : memref<18x256xf32, #tpu.memory_space<vmem>>, vector<1x256xf32>,
    %115 = vector.extract_strided_slice %82 {offsets = [1, 1792], sizes = [1, 256], strides = [1, 1]} : vector<2x2048xf32> to vector<1x256xf32>
    %c16 = arith.constant 16 : index
    %c0_35 = arith.constant 0 : index
    %116 = vector.load %arg12[%c16, %c0_35] : memref<18x256xf32, #tpu.memory_space<vmem>>, vector<1x256xf32>
    tpu.vector_store %arg12[%c16, %c0_35], %115 {strides = array<i32>} : memref<18x256xf32, #tpu.memory_space<vmem>>, vector<1x256xf32>,
    %c0_36 = arith.constant 0 : index
    %c0_37 = arith.constant 0 : index
    %117 = vector.load %arg12[%c0_36, %c0_37] : memref<18x256xf32, #tpu.memory_space<vmem>>, vector<8x256xf32>
    %c9_38 = arith.constant 9 : index
    %c0_39 = arith.constant 0 : index
    %118 = vector.load %arg12[%c9_38, %c0_39] : memref<18x256xf32, #tpu.memory_space<vmem>>, vector<8x256xf32>
    %119 = tpu.concatenate %117, %118 in 0 : vector<8x256xf32>, vector<8x256xf32> -> vector<16x256xf32>
    %c1_40 = arith.constant 1 : index
    %c0_41 = arith.constant 0 : index
    %120 = vector.load %arg12[%c1_40, %c0_41] : memref<18x256xf32, #tpu.memory_space<vmem>>, vector<8x256xf32>
    %c10_42 = arith.constant 10 : index
    %c0_43 = arith.constant 0 : index
    %121 = vector.load %arg12[%c10_42, %c0_43] : memref<18x256xf32, #tpu.memory_space<vmem>>, vector<8x256xf32>
    %122 = tpu.concatenate %120, %121 in 0 : vector<8x256xf32>, vector<8x256xf32> -> vector<16x256xf32>
    %123 = tpu.concatenate %119, %122 in 1 : vector<16x256xf32>, vector<16x256xf32> -> vector<16x512xf32>
    %124 = arith.truncf %123 : vector<16x512xf32> to vector<16x512xbf16>
    %c0_44 = arith.constant 0 : index
    %c0_45 = arith.constant 0 : index
    %125 = vector.load %arg5[%c0_44, %c0_45] : memref<512x512xbf16, #tpu.memory_space<vmem>>, vector<512x512xbf16>
    %cst_46 = arith.constant dense<0.000000e+00> : vector<16x512xf32>
    %126 = tpu.matmul %124, %125, %cst_46 {dimension_numbers = #tpu.dot_dimension_numbers<[1], [0], [0], [1], [0, 0, 1, 1], [], []>} : vector<16x512xbf16>, vector<512x512xbf16>, vector<16x512xf32> -> vector<16x512xf32>
    %c0_47 = arith.constant 0 : index
    %c0_48 = arith.constant 0 : index
    %127 = vector.load %arg6[%c0_47, %c0_48] : memref<1x16xf32, #tpu.memory_space<vmem>>, vector<1x16xf32>
    %c0_49 = arith.constant 0 : index
    %c0_50 = arith.constant 0 : index
    %128 = vector.load %arg7[%c0_49, %c0_50] : memref<1x16xf32, #tpu.memory_space<vmem>>, vector<1x16xf32>
    %cst_51 = arith.constant dense<0.000000e+00> : vector<512xf32>
    %129 = vector.multi_reduction <add>, %126, %cst_51 [0] : vector<16x512xf32> to vector<512xf32>
    %130 = vector.shape_cast %129 : vector<512xf32> to vector<1x512xf32>
    %131 = arith.mulf %126, %126 : vector<16x512xf32>
    %cst_52 = arith.constant dense<0.000000e+00> : vector<512xf32>
    %132 = vector.multi_reduction <add>, %131, %cst_52 [0] : vector<16x512xf32> to vector<512xf32>
    %133 = vector.shape_cast %132 : vector<512xf32> to vector<1x512xf32>
    %134 = vector.extract_strided_slice %130 {offsets = [0, 0], sizes = [1, 256], strides = [1, 1]} : vector<1x512xf32> to vector<1x256xf32>
    %135 = vector.extract_strided_slice %130 {offsets = [0, 256], sizes = [1, 256], strides = [1, 1]} : vector<1x512xf32> to vector<1x256xf32>
    %136 = arith.addf %134, %135 : vector<1x256xf32>
    %137 = vector.extract_strided_slice %133 {offsets = [0, 0], sizes = [1, 256], strides = [1, 1]} : vector<1x512xf32> to vector<1x256xf32>
    %138 = vector.extract_strided_slice %133 {offsets = [0, 256], sizes = [1, 256], strides = [1, 1]} : vector<1x512xf32> to vector<1x256xf32>
    %139 = arith.addf %137, %138 : vector<1x256xf32>
    %140 = vector.extract_strided_slice %136 {offsets = [0, 0], sizes = [1, 128], strides = [1, 1]} : vector<1x256xf32> to vector<1x128xf32>
    %141 = vector.extract_strided_slice %136 {offsets = [0, 128], sizes = [1, 128], strides = [1, 1]} : vector<1x256xf32> to vector<1x128xf32>
    %142 = arith.addf %140, %141 : vector<1x128xf32>
    %143 = vector.extract_strided_slice %139 {offsets = [0, 0], sizes = [1, 128], strides = [1, 1]} : vector<1x256xf32> to vector<1x128xf32>
    %144 = vector.extract_strided_slice %139 {offsets = [0, 128], sizes = [1, 128], strides = [1, 1]} : vector<1x256xf32> to vector<1x128xf32>
    %145 = arith.addf %143, %144 : vector<1x128xf32>
    %146 = vector.extract_strided_slice %142 {offsets = [0, 0], sizes = [1, 64], strides = [1, 1]} : vector<1x128xf32> to vector<1x64xf32>
    %147 = vector.extract_strided_slice %142 {offsets = [0, 64], sizes = [1, 64], strides = [1, 1]} : vector<1x128xf32> to vector<1x64xf32>
    %148 = arith.addf %146, %147 : vector<1x64xf32>
    %149 = vector.extract_strided_slice %145 {offsets = [0, 0], sizes = [1, 64], strides = [1, 1]} : vector<1x128xf32> to vector<1x64xf32>
    %150 = vector.extract_strided_slice %145 {offsets = [0, 64], sizes = [1, 64], strides = [1, 1]} : vector<1x128xf32> to vector<1x64xf32>
    %151 = arith.addf %149, %150 : vector<1x64xf32>
    %152 = vector.extract_strided_slice %148 {offsets = [0, 0], sizes = [1, 32], strides = [1, 1]} : vector<1x64xf32> to vector<1x32xf32>
    %153 = vector.extract_strided_slice %148 {offsets = [0, 32], sizes = [1, 32], strides = [1, 1]} : vector<1x64xf32> to vector<1x32xf32>
    %154 = arith.addf %152, %153 : vector<1x32xf32>
    %155 = vector.extract_strided_slice %151 {offsets = [0, 0], sizes = [1, 32], strides = [1, 1]} : vector<1x64xf32> to vector<1x32xf32>
    %156 = vector.extract_strided_slice %151 {offsets = [0, 32], sizes = [1, 32], strides = [1, 1]} : vector<1x64xf32> to vector<1x32xf32>
    %157 = arith.addf %155, %156 : vector<1x32xf32>
    %158 = vector.extract_strided_slice %154 {offsets = [0, 0], sizes = [1, 16], strides = [1, 1]} : vector<1x32xf32> to vector<1x16xf32>
    %159 = vector.extract_strided_slice %154 {offsets = [0, 16], sizes = [1, 16], strides = [1, 1]} : vector<1x32xf32> to vector<1x16xf32>
    %160 = arith.addf %158, %159 : vector<1x16xf32>
    %161 = vector.extract_strided_slice %157 {offsets = [0, 0], sizes = [1, 16], strides = [1, 1]} : vector<1x32xf32> to vector<1x16xf32>
    %162 = vector.extract_strided_slice %157 {offsets = [0, 16], sizes = [1, 16], strides = [1, 1]} : vector<1x32xf32> to vector<1x16xf32>
    %163 = arith.addf %161, %162 : vector<1x16xf32>
    %cst_53 = arith.constant 0.001953125 : f32
    %164 = vector.broadcast %cst_53 : f32 to vector<1x16xf32>
    %165 = arith.mulf %160, %164 : vector<1x16xf32>
    %cst_54 = arith.constant 0.001953125 : f32
    %166 = vector.broadcast %cst_54 : f32 to vector<1x16xf32>
    %167 = arith.mulf %163, %166 : vector<1x16xf32>
    %168 = arith.mulf %165, %165 : vector<1x16xf32>
    %169 = arith.subf %167, %168 : vector<1x16xf32>
    %cst_55 = arith.constant 9.99999974E-6 : f32
    %170 = vector.broadcast %cst_55 : f32 to vector<1x16xf32>
    %171 = arith.addf %169, %170 : vector<1x16xf32>
    %172 = math.rsqrt %171 : vector<1x16xf32>
    %173 = arith.mulf %127, %172 : vector<1x16xf32>
    %174 = arith.mulf %165, %173 : vector<1x16xf32>
    %175 = arith.subf %128, %174 : vector<1x16xf32>
    %176 = tpu.concatenate %173, %173 in 1 : vector<1x16xf32>, vector<1x16xf32> -> vector<1x32xf32>
    %177 = tpu.concatenate %175, %175 in 1 : vector<1x16xf32>, vector<1x16xf32> -> vector<1x32xf32>
    %178 = tpu.concatenate %176, %176 in 1 : vector<1x32xf32>, vector<1x32xf32> -> vector<1x64xf32>
    %179 = tpu.concatenate %177, %177 in 1 : vector<1x32xf32>, vector<1x32xf32> -> vector<1x64xf32>
    %180 = tpu.concatenate %178, %178 in 1 : vector<1x64xf32>, vector<1x64xf32> -> vector<1x128xf32>
    %181 = tpu.concatenate %179, %179 in 1 : vector<1x64xf32>, vector<1x64xf32> -> vector<1x128xf32>
    %182 = tpu.concatenate %180, %180 in 1 : vector<1x128xf32>, vector<1x128xf32> -> vector<1x256xf32>
    %183 = tpu.concatenate %181, %181 in 1 : vector<1x128xf32>, vector<1x128xf32> -> vector<1x256xf32>
    %184 = tpu.concatenate %182, %182 in 1 : vector<1x256xf32>, vector<1x256xf32> -> vector<1x512xf32>
    %185 = tpu.concatenate %183, %183 in 1 : vector<1x256xf32>, vector<1x256xf32> -> vector<1x512xf32>
    %186 = vector.broadcast %184 : vector<1x512xf32> to vector<16x512xf32>
    %187 = arith.mulf %126, %186 : vector<16x512xf32>
    %188 = vector.broadcast %185 : vector<1x512xf32> to vector<16x512xf32>
    %189 = arith.addf %187, %188 : vector<16x512xf32>
    %cst_56 = arith.constant 0.000000e+00 : f32
    %190 = vector.broadcast %cst_56 : f32 to vector<16x512xf32>
    %191 = arith.cmpf ogt, %189, %190 : vector<16x512xf32>
    %cst_57 = arith.constant 2.000000e-01 : f32
    %192 = vector.broadcast %cst_57 : f32 to vector<16x512xf32>
    %193 = arith.mulf %192, %189 : vector<16x512xf32>
    %194 = arith.select %191, %189, %193 : vector<16x512xi1>, vector<16x512xf32>
    %cst_58 = arith.constant 0.000000e+00 : f32
    %195 = vector.broadcast %cst_58 : f32 to vector<34x256xf32>
    %c0_59 = arith.constant 0 : index
    %c0_60 = arith.constant 0 : index
    %196 = vector.load %arg13[%c0_59, %c0_60] : memref<34x256xf32, #tpu.memory_space<vmem>>, vector<34x256xf32>
    tpu.vector_store %arg13[%c0_59, %c0_60], %195 {strides = array<i32>} : memref<34x256xf32, #tpu.memory_space<vmem>>, vector<34x256xf32>,
    %197 = vector.extract_strided_slice %194 {offsets = [0, 0], sizes = [1, 256], strides = [1, 1]} : vector<16x512xf32> to vector<1x256xf32>
    %c0_61 = arith.constant 0 : index
    %c0_62 = arith.constant 0 : index
    %198 = vector.load %arg13[%c0_61, %c0_62] : memref<34x256xf32, #tpu.memory_space<vmem>>, vector<1x256xf32>
    tpu.vector_store %arg13[%c0_61, %c0_62], %197 {strides = array<i32>} : memref<34x256xf32, #tpu.memory_space<vmem>>, vector<1x256xf32>,
    %199 = vector.extract_strided_slice %194 {offsets = [0, 256], sizes = [1, 256], strides = [1, 1]} : vector<16x512xf32> to vector<1x256xf32>
    %c1_63 = arith.constant 1 : index
    %c0_64 = arith.constant 0 : index
    %200 = vector.load %arg13[%c1_63, %c0_64] : memref<34x256xf32, #tpu.memory_space<vmem>>, vector<1x256xf32>
    tpu.vector_store %arg13[%c1_63, %c0_64], %199 {strides = array<i32>} : memref<34x256xf32, #tpu.memory_space<vmem>>, vector<1x256xf32>,
    %201 = vector.extract_strided_slice %194 {offsets = [1, 0], sizes = [1, 256], strides = [1, 1]} : vector<16x512xf32> to vector<1x256xf32>
    %c2_65 = arith.constant 2 : index
    %c0_66 = arith.constant 0 : index
    %202 = vector.load %arg13[%c2_65, %c0_66] : memref<34x256xf32, #tpu.memory_space<vmem>>, vector<1x256xf32>
    tpu.vector_store %arg13[%c2_65, %c0_66], %201 {strides = array<i32>} : memref<34x256xf32, #tpu.memory_space<vmem>>, vector<1x256xf32>,
    %203 = vector.extract_strided_slice %194 {offsets = [1, 256], sizes = [1, 256], strides = [1, 1]} : vector<16x512xf32> to vector<1x256xf32>
    %c3_67 = arith.constant 3 : index
    %c0_68 = arith.constant 0 : index
    %204 = vector.load %arg13[%c3_67, %c0_68] : memref<34x256xf32, #tpu.memory_space<vmem>>, vector<1x256xf32>
    tpu.vector_store %arg13[%c3_67, %c0_68], %203 {strides = array<i32>} : memref<34x256xf32, #tpu.memory_space<vmem>>, vector<1x256xf32>,
    %205 = vector.extract_strided_slice %194 {offsets = [2, 0], sizes = [1, 256], strides = [1, 1]} : vector<16x512xf32> to vector<1x256xf32>
    %c4_69 = arith.constant 4 : index
    %c0_70 = arith.constant 0 : index
    %206 = vector.load %arg13[%c4_69, %c0_70] : memref<34x256xf32, #tpu.memory_space<vmem>>, vector<1x256xf32>
    tpu.vector_store %arg13[%c4_69, %c0_70], %205 {strides = array<i32>} : memref<34x256xf32, #tpu.memory_space<vmem>>, vector<1x256xf32>,
    %207 = vector.extract_strided_slice %194 {offsets = [2, 256], sizes = [1, 256], strides = [1, 1]} : vector<16x512xf32> to vector<1x256xf32>
    %c5_71 = arith.constant 5 : index
    %c0_72 = arith.constant 0 : index
    %208 = vector.load %arg13[%c5_71, %c0_72] : memref<34x256xf32, #tpu.memory_space<vmem>>, vector<1x256xf32>
    tpu.vector_store %arg13[%c5_71, %c0_72], %207 {strides = array<i32>} : memref<34x256xf32, #tpu.memory_space<vmem>>, vector<1x256xf32>,
    %209 = vector.extract_strided_slice %194 {offsets = [3, 0], sizes = [1, 256], strides = [1, 1]} : vector<16x512xf32> to vector<1x256xf32>
    %c6_73 = arith.constant 6 : index
    %c0_74 = arith.constant 0 : index
    %210 = vector.load %arg13[%c6_73, %c0_74] : memref<34x256xf32, #tpu.memory_space<vmem>>, vector<1x256xf32>
    tpu.vector_store %arg13[%c6_73, %c0_74], %209 {strides = array<i32>} : memref<34x256xf32, #tpu.memory_space<vmem>>, vector<1x256xf32>,
    %211 = vector.extract_strided_slice %194 {offsets = [3, 256], sizes = [1, 256], strides = [1, 1]} : vector<16x512xf32> to vector<1x256xf32>
    %c7_75 = arith.constant 7 : index
    %c0_76 = arith.constant 0 : index
    %212 = vector.load %arg13[%c7_75, %c0_76] : memref<34x256xf32, #tpu.memory_space<vmem>>, vector<1x256xf32>
    tpu.vector_store %arg13[%c7_75, %c0_76], %211 {strides = array<i32>} : memref<34x256xf32, #tpu.memory_space<vmem>>, vector<1x256xf32>,
    %213 = vector.extract_strided_slice %194 {offsets = [4, 0], sizes = [1, 256], strides = [1, 1]} : vector<16x512xf32> to vector<1x256xf32>
    %c8 = arith.constant 8 : index
    %c0_77 = arith.constant 0 : index
    %214 = vector.load %arg13[%c8, %c0_77] : memref<34x256xf32, #tpu.memory_space<vmem>>, vector<1x256xf32>
    tpu.vector_store %arg13[%c8, %c0_77], %213 {strides = array<i32>} : memref<34x256xf32, #tpu.memory_space<vmem>>, vector<1x256xf32>,
    %215 = vector.extract_strided_slice %194 {offsets = [4, 256], sizes = [1, 256], strides = [1, 1]} : vector<16x512xf32> to vector<1x256xf32>
    %c9_78 = arith.constant 9 : index
    %c0_79 = arith.constant 0 : index
    %216 = vector.load %arg13[%c9_78, %c0_79] : memref<34x256xf32, #tpu.memory_space<vmem>>, vector<1x256xf32>
    tpu.vector_store %arg13[%c9_78, %c0_79], %215 {strides = array<i32>} : memref<34x256xf32, #tpu.memory_space<vmem>>, vector<1x256xf32>,
    %217 = vector.extract_strided_slice %194 {offsets = [5, 0], sizes = [1, 256], strides = [1, 1]} : vector<16x512xf32> to vector<1x256xf32>
    %c10_80 = arith.constant 10 : index
    %c0_81 = arith.constant 0 : index
    %218 = vector.load %arg13[%c10_80, %c0_81] : memref<34x256xf32, #tpu.memory_space<vmem>>, vector<1x256xf32>
    tpu.vector_store %arg13[%c10_80, %c0_81], %217 {strides = array<i32>} : memref<34x256xf32, #tpu.memory_space<vmem>>, vector<1x256xf32>,
    %219 = vector.extract_strided_slice %194 {offsets = [5, 256], sizes = [1, 256], strides = [1, 1]} : vector<16x512xf32> to vector<1x256xf32>
    %c11_82 = arith.constant 11 : index
    %c0_83 = arith.constant 0 : index
    %220 = vector.load %arg13[%c11_82, %c0_83] : memref<34x256xf32, #tpu.memory_space<vmem>>, vector<1x256xf32>
    tpu.vector_store %arg13[%c11_82, %c0_83], %219 {strides = array<i32>} : memref<34x256xf32, #tpu.memory_space<vmem>>, vector<1x256xf32>,
    %221 = vector.extract_strided_slice %194 {offsets = [6, 0], sizes = [1, 256], strides = [1, 1]} : vector<16x512xf32> to vector<1x256xf32>
    %c12_84 = arith.constant 12 : index
    %c0_85 = arith.constant 0 : index
    %222 = vector.load %arg13[%c12_84, %c0_85] : memref<34x256xf32, #tpu.memory_space<vmem>>, vector<1x256xf32>
    tpu.vector_store %arg13[%c12_84, %c0_85], %221 {strides = array<i32>} : memref<34x256xf32, #tpu.memory_space<vmem>>, vector<1x256xf32>,
    %223 = vector.extract_strided_slice %194 {offsets = [6, 256], sizes = [1, 256], strides = [1, 1]} : vector<16x512xf32> to vector<1x256xf32>
    %c13_86 = arith.constant 13 : index
    %c0_87 = arith.constant 0 : index
    %224 = vector.load %arg13[%c13_86, %c0_87] : memref<34x256xf32, #tpu.memory_space<vmem>>, vector<1x256xf32>
    tpu.vector_store %arg13[%c13_86, %c0_87], %223 {strides = array<i32>} : memref<34x256xf32, #tpu.memory_space<vmem>>, vector<1x256xf32>,
    %225 = vector.extract_strided_slice %194 {offsets = [7, 0], sizes = [1, 256], strides = [1, 1]} : vector<16x512xf32> to vector<1x256xf32>
    %c14_88 = arith.constant 14 : index
    %c0_89 = arith.constant 0 : index
    %226 = vector.load %arg13[%c14_88, %c0_89] : memref<34x256xf32, #tpu.memory_space<vmem>>, vector<1x256xf32>
    tpu.vector_store %arg13[%c14_88, %c0_89], %225 {strides = array<i32>} : memref<34x256xf32, #tpu.memory_space<vmem>>, vector<1x256xf32>,
    %227 = vector.extract_strided_slice %194 {offsets = [7, 256], sizes = [1, 256], strides = [1, 1]} : vector<16x512xf32> to vector<1x256xf32>
    %c15_90 = arith.constant 15 : index
    %c0_91 = arith.constant 0 : index
    %228 = vector.load %arg13[%c15_90, %c0_91] : memref<34x256xf32, #tpu.memory_space<vmem>>, vector<1x256xf32>
    tpu.vector_store %arg13[%c15_90, %c0_91], %227 {strides = array<i32>} : memref<34x256xf32, #tpu.memory_space<vmem>>, vector<1x256xf32>,
    %229 = vector.extract_strided_slice %194 {offsets = [8, 0], sizes = [1, 256], strides = [1, 1]} : vector<16x512xf32> to vector<1x256xf32>
    %c17 = arith.constant 17 : index
    %c0_92 = arith.constant 0 : index
    %230 = vector.load %arg13[%c17, %c0_92] : memref<34x256xf32, #tpu.memory_space<vmem>>, vector<1x256xf32>
    tpu.vector_store %arg13[%c17, %c0_92], %229 {strides = array<i32>} : memref<34x256xf32, #tpu.memory_space<vmem>>, vector<1x256xf32>,
    %231 = vector.extract_strided_slice %194 {offsets = [8, 256], sizes = [1, 256], strides = [1, 1]} : vector<16x512xf32> to vector<1x256xf32>
    %c18 = arith.constant 18 : index
    %c0_93 = arith.constant 0 : index
    %232 = vector.load %arg13[%c18, %c0_93] : memref<34x256xf32, #tpu.memory_space<vmem>>, vector<1x256xf32>
    tpu.vector_store %arg13[%c18, %c0_93], %231 {strides = array<i32>} : memref<34x256xf32, #tpu.memory_space<vmem>>, vector<1x256xf32>,
    %233 = vector.extract_strided_slice %194 {offsets = [9, 0], sizes = [1, 256], strides = [1, 1]} : vector<16x512xf32> to vector<1x256xf32>
    %c19 = arith.constant 19 : index
    %c0_94 = arith.constant 0 : index
    %234 = vector.load %arg13[%c19, %c0_94] : memref<34x256xf32, #tpu.memory_space<vmem>>, vector<1x256xf32>
    tpu.vector_store %arg13[%c19, %c0_94], %233 {strides = array<i32>} : memref<34x256xf32, #tpu.memory_space<vmem>>, vector<1x256xf32>,
    %235 = vector.extract_strided_slice %194 {offsets = [9, 256], sizes = [1, 256], strides = [1, 1]} : vector<16x512xf32> to vector<1x256xf32>
    %c20 = arith.constant 20 : index
    %c0_95 = arith.constant 0 : index
    %236 = vector.load %arg13[%c20, %c0_95] : memref<34x256xf32, #tpu.memory_space<vmem>>, vector<1x256xf32>
    tpu.vector_store %arg13[%c20, %c0_95], %235 {strides = array<i32>} : memref<34x256xf32, #tpu.memory_space<vmem>>, vector<1x256xf32>,
    %237 = vector.extract_strided_slice %194 {offsets = [10, 0], sizes = [1, 256], strides = [1, 1]} : vector<16x512xf32> to vector<1x256xf32>
    %c21 = arith.constant 21 : index
    %c0_96 = arith.constant 0 : index
    %238 = vector.load %arg13[%c21, %c0_96] : memref<34x256xf32, #tpu.memory_space<vmem>>, vector<1x256xf32>
    tpu.vector_store %arg13[%c21, %c0_96], %237 {strides = array<i32>} : memref<34x256xf32, #tpu.memory_space<vmem>>, vector<1x256xf32>,
    %239 = vector.extract_strided_slice %194 {offsets = [10, 256], sizes = [1, 256], strides = [1, 1]} : vector<16x512xf32> to vector<1x256xf32>
    %c22 = arith.constant 22 : index
    %c0_97 = arith.constant 0 : index
    %240 = vector.load %arg13[%c22, %c0_97] : memref<34x256xf32, #tpu.memory_space<vmem>>, vector<1x256xf32>
    tpu.vector_store %arg13[%c22, %c0_97], %239 {strides = array<i32>} : memref<34x256xf32, #tpu.memory_space<vmem>>, vector<1x256xf32>,
    %241 = vector.extract_strided_slice %194 {offsets = [11, 0], sizes = [1, 256], strides = [1, 1]} : vector<16x512xf32> to vector<1x256xf32>
    %c23 = arith.constant 23 : index
    %c0_98 = arith.constant 0 : index
    %242 = vector.load %arg13[%c23, %c0_98] : memref<34x256xf32, #tpu.memory_space<vmem>>, vector<1x256xf32>
    tpu.vector_store %arg13[%c23, %c0_98], %241 {strides = array<i32>} : memref<34x256xf32, #tpu.memory_space<vmem>>, vector<1x256xf32>,
    %243 = vector.extract_strided_slice %194 {offsets = [11, 256], sizes = [1, 256], strides = [1, 1]} : vector<16x512xf32> to vector<1x256xf32>
    %c24 = arith.constant 24 : index
    %c0_99 = arith.constant 0 : index
    %244 = vector.load %arg13[%c24, %c0_99] : memref<34x256xf32, #tpu.memory_space<vmem>>, vector<1x256xf32>
    tpu.vector_store %arg13[%c24, %c0_99], %243 {strides = array<i32>} : memref<34x256xf32, #tpu.memory_space<vmem>>, vector<1x256xf32>,
    %245 = vector.extract_strided_slice %194 {offsets = [12, 0], sizes = [1, 256], strides = [1, 1]} : vector<16x512xf32> to vector<1x256xf32>
    %c25 = arith.constant 25 : index
    %c0_100 = arith.constant 0 : index
    %246 = vector.load %arg13[%c25, %c0_100] : memref<34x256xf32, #tpu.memory_space<vmem>>, vector<1x256xf32>
    tpu.vector_store %arg13[%c25, %c0_100], %245 {strides = array<i32>} : memref<34x256xf32, #tpu.memory_space<vmem>>, vector<1x256xf32>,
    %247 = vector.extract_strided_slice %194 {offsets = [12, 256], sizes = [1, 256], strides = [1, 1]} : vector<16x512xf32> to vector<1x256xf32>
    %c26 = arith.constant 26 : index
    %c0_101 = arith.constant 0 : index
    %248 = vector.load %arg13[%c26, %c0_101] : memref<34x256xf32, #tpu.memory_space<vmem>>, vector<1x256xf32>
    tpu.vector_store %arg13[%c26, %c0_101], %247 {strides = array<i32>} : memref<34x256xf32, #tpu.memory_space<vmem>>, vector<1x256xf32>,
    %249 = vector.extract_strided_slice %194 {offsets = [13, 0], sizes = [1, 256], strides = [1, 1]} : vector<16x512xf32> to vector<1x256xf32>
    %c27 = arith.constant 27 : index
    %c0_102 = arith.constant 0 : index
    %250 = vector.load %arg13[%c27, %c0_102] : memref<34x256xf32, #tpu.memory_space<vmem>>, vector<1x256xf32>
    tpu.vector_store %arg13[%c27, %c0_102], %249 {strides = array<i32>} : memref<34x256xf32, #tpu.memory_space<vmem>>, vector<1x256xf32>,
    %251 = vector.extract_strided_slice %194 {offsets = [13, 256], sizes = [1, 256], strides = [1, 1]} : vector<16x512xf32> to vector<1x256xf32>
    %c28 = arith.constant 28 : index
    %c0_103 = arith.constant 0 : index
    %252 = vector.load %arg13[%c28, %c0_103] : memref<34x256xf32, #tpu.memory_space<vmem>>, vector<1x256xf32>
    tpu.vector_store %arg13[%c28, %c0_103], %251 {strides = array<i32>} : memref<34x256xf32, #tpu.memory_space<vmem>>, vector<1x256xf32>,
    %253 = vector.extract_strided_slice %194 {offsets = [14, 0], sizes = [1, 256], strides = [1, 1]} : vector<16x512xf32> to vector<1x256xf32>
    %c29 = arith.constant 29 : index
    %c0_104 = arith.constant 0 : index
    %254 = vector.load %arg13[%c29, %c0_104] : memref<34x256xf32, #tpu.memory_space<vmem>>, vector<1x256xf32>
    tpu.vector_store %arg13[%c29, %c0_104], %253 {strides = array<i32>} : memref<34x256xf32, #tpu.memory_space<vmem>>, vector<1x256xf32>,
    %255 = vector.extract_strided_slice %194 {offsets = [14, 256], sizes = [1, 256], strides = [1, 1]} : vector<16x512xf32> to vector<1x256xf32>
    %c30 = arith.constant 30 : index
    %c0_105 = arith.constant 0 : index
    %256 = vector.load %arg13[%c30, %c0_105] : memref<34x256xf32, #tpu.memory_space<vmem>>, vector<1x256xf32>
    tpu.vector_store %arg13[%c30, %c0_105], %255 {strides = array<i32>} : memref<34x256xf32, #tpu.memory_space<vmem>>, vector<1x256xf32>,
    %257 = vector.extract_strided_slice %194 {offsets = [15, 0], sizes = [1, 256], strides = [1, 1]} : vector<16x512xf32> to vector<1x256xf32>
    %c31 = arith.constant 31 : index
    %c0_106 = arith.constant 0 : index
    %258 = vector.load %arg13[%c31, %c0_106] : memref<34x256xf32, #tpu.memory_space<vmem>>, vector<1x256xf32>
    tpu.vector_store %arg13[%c31, %c0_106], %257 {strides = array<i32>} : memref<34x256xf32, #tpu.memory_space<vmem>>, vector<1x256xf32>,
    %259 = vector.extract_strided_slice %194 {offsets = [15, 256], sizes = [1, 256], strides = [1, 1]} : vector<16x512xf32> to vector<1x256xf32>
    %c32 = arith.constant 32 : index
    %c0_107 = arith.constant 0 : index
    %260 = vector.load %arg13[%c32, %c0_107] : memref<34x256xf32, #tpu.memory_space<vmem>>, vector<1x256xf32>
    tpu.vector_store %arg13[%c32, %c0_107], %259 {strides = array<i32>} : memref<34x256xf32, #tpu.memory_space<vmem>>, vector<1x256xf32>,
    %c0_108 = arith.constant 0 : index
    %c0_109 = arith.constant 0 : index
    %261 = vector.load %arg13[%c0_108, %c0_109] : memref<34x256xf32, #tpu.memory_space<vmem>>, vector<16x256xf32>
    %c17_110 = arith.constant 17 : index
    %c0_111 = arith.constant 0 : index
    %262 = vector.load %arg13[%c17_110, %c0_111] : memref<34x256xf32, #tpu.memory_space<vmem>>, vector<16x256xf32>
    %263 = tpu.concatenate %261, %262 in 0 : vector<16x256xf32>, vector<16x256xf32> -> vector<32x256xf32>
    %c1_112 = arith.constant 1 : index
    %c0_113 = arith.constant 0 : index
    %264 = vector.load %arg13[%c1_112, %c0_113] : memref<34x256xf32, #tpu.memory_space<vmem>>, vector<16x256xf32>
    %c18_114 = arith.constant 18 : index
    %c0_115 = arith.constant 0 : index
    %265 = vector.load %arg13[%c18_114, %c0_115] : memref<34x256xf32, #tpu.memory_space<vmem>>, vector<16x256xf32>
    %266 = tpu.concatenate %264, %265 in 0 : vector<16x256xf32>, vector<16x256xf32> -> vector<32x256xf32>
    %267 = tpu.concatenate %263, %266 in 1 : vector<32x256xf32>, vector<32x256xf32> -> vector<32x512xf32>
    %268 = arith.truncf %267 : vector<32x512xf32> to vector<32x512xbf16>
    %c0_116 = arith.constant 0 : index
    %c0_117 = arith.constant 0 : index
    %269 = vector.load %arg8[%c0_116, %c0_117] : memref<512x256xbf16, #tpu.memory_space<vmem>>, vector<512x256xbf16>
    %cst_118 = arith.constant dense<0.000000e+00> : vector<32x256xf32>
    %270 = tpu.matmul %268, %269, %cst_118 {dimension_numbers = #tpu.dot_dimension_numbers<[1], [0], [0], [1], [0, 0, 1, 1], [], []>} : vector<32x512xbf16>, vector<512x256xbf16>, vector<32x256xf32> -> vector<32x256xf32>
    %c0_119 = arith.constant 0 : index
    %c0_120 = arith.constant 0 : index
    %271 = vector.load %arg9[%c0_119, %c0_120] : memref<1x4xf32, #tpu.memory_space<vmem>>, vector<1x4xf32>
    %c0_121 = arith.constant 0 : index
    %c0_122 = arith.constant 0 : index
    %272 = vector.load %arg10[%c0_121, %c0_122] : memref<1x4xf32, #tpu.memory_space<vmem>>, vector<1x4xf32>
    %cst_123 = arith.constant dense<0.000000e+00> : vector<256xf32>
    %273 = vector.multi_reduction <add>, %270, %cst_123 [0] : vector<32x256xf32> to vector<256xf32>
    %274 = vector.shape_cast %273 : vector<256xf32> to vector<1x256xf32>
    %275 = arith.mulf %270, %270 : vector<32x256xf32>
    %cst_124 = arith.constant dense<0.000000e+00> : vector<256xf32>
    %276 = vector.multi_reduction <add>, %275, %cst_124 [0] : vector<32x256xf32> to vector<256xf32>
    %277 = vector.shape_cast %276 : vector<256xf32> to vector<1x256xf32>
    %278 = vector.extract_strided_slice %274 {offsets = [0, 0], sizes = [1, 128], strides = [1, 1]} : vector<1x256xf32> to vector<1x128xf32>
    %279 = vector.extract_strided_slice %274 {offsets = [0, 128], sizes = [1, 128], strides = [1, 1]} : vector<1x256xf32> to vector<1x128xf32>
    %280 = arith.addf %278, %279 : vector<1x128xf32>
    %281 = vector.extract_strided_slice %277 {offsets = [0, 0], sizes = [1, 128], strides = [1, 1]} : vector<1x256xf32> to vector<1x128xf32>
    %282 = vector.extract_strided_slice %277 {offsets = [0, 128], sizes = [1, 128], strides = [1, 1]} : vector<1x256xf32> to vector<1x128xf32>
    %283 = arith.addf %281, %282 : vector<1x128xf32>
    %284 = vector.extract_strided_slice %280 {offsets = [0, 0], sizes = [1, 64], strides = [1, 1]} : vector<1x128xf32> to vector<1x64xf32>
    %285 = vector.extract_strided_slice %280 {offsets = [0, 64], sizes = [1, 64], strides = [1, 1]} : vector<1x128xf32> to vector<1x64xf32>
    %286 = arith.addf %284, %285 : vector<1x64xf32>
    %287 = vector.extract_strided_slice %283 {offsets = [0, 0], sizes = [1, 64], strides = [1, 1]} : vector<1x128xf32> to vector<1x64xf32>
    %288 = vector.extract_strided_slice %283 {offsets = [0, 64], sizes = [1, 64], strides = [1, 1]} : vector<1x128xf32> to vector<1x64xf32>
    %289 = arith.addf %287, %288 : vector<1x64xf32>
    %290 = vector.extract_strided_slice %286 {offsets = [0, 0], sizes = [1, 32], strides = [1, 1]} : vector<1x64xf32> to vector<1x32xf32>
    %291 = vector.extract_strided_slice %286 {offsets = [0, 32], sizes = [1, 32], strides = [1, 1]} : vector<1x64xf32> to vector<1x32xf32>
    %292 = arith.addf %290, %291 : vector<1x32xf32>
    %293 = vector.extract_strided_slice %289 {offsets = [0, 0], sizes = [1, 32], strides = [1, 1]} : vector<1x64xf32> to vector<1x32xf32>
    %294 = vector.extract_strided_slice %289 {offsets = [0, 32], sizes = [1, 32], strides = [1, 1]} : vector<1x64xf32> to vector<1x32xf32>
    %295 = arith.addf %293, %294 : vector<1x32xf32>
    %296 = vector.extract_strided_slice %292 {offsets = [0, 0], sizes = [1, 16], strides = [1, 1]} : vector<1x32xf32> to vector<1x16xf32>
    %297 = vector.extract_strided_slice %292 {offsets = [0, 16], sizes = [1, 16], strides = [1, 1]} : vector<1x32xf32> to vector<1x16xf32>
    %298 = arith.addf %296, %297 : vector<1x16xf32>
    %299 = vector.extract_strided_slice %295 {offsets = [0, 0], sizes = [1, 16], strides = [1, 1]} : vector<1x32xf32> to vector<1x16xf32>
    %300 = vector.extract_strided_slice %295 {offsets = [0, 16], sizes = [1, 16], strides = [1, 1]} : vector<1x32xf32> to vector<1x16xf32>
    %301 = arith.addf %299, %300 : vector<1x16xf32>
    %302 = vector.extract_strided_slice %298 {offsets = [0, 0], sizes = [1, 8], strides = [1, 1]} : vector<1x16xf32> to vector<1x8xf32>
    %303 = vector.extract_strided_slice %298 {offsets = [0, 8], sizes = [1, 8], strides = [1, 1]} : vector<1x16xf32> to vector<1x8xf32>
    %304 = arith.addf %302, %303 : vector<1x8xf32>
    %305 = vector.extract_strided_slice %301 {offsets = [0, 0], sizes = [1, 8], strides = [1, 1]} : vector<1x16xf32> to vector<1x8xf32>
    %306 = vector.extract_strided_slice %301 {offsets = [0, 8], sizes = [1, 8], strides = [1, 1]} : vector<1x16xf32> to vector<1x8xf32>
    %307 = arith.addf %305, %306 : vector<1x8xf32>
    %308 = vector.extract_strided_slice %304 {offsets = [0, 0], sizes = [1, 4], strides = [1, 1]} : vector<1x8xf32> to vector<1x4xf32>
    %309 = vector.extract_strided_slice %304 {offsets = [0, 4], sizes = [1, 4], strides = [1, 1]} : vector<1x8xf32> to vector<1x4xf32>
    %310 = arith.addf %308, %309 : vector<1x4xf32>
    %311 = vector.extract_strided_slice %307 {offsets = [0, 0], sizes = [1, 4], strides = [1, 1]} : vector<1x8xf32> to vector<1x4xf32>
    %312 = vector.extract_strided_slice %307 {offsets = [0, 4], sizes = [1, 4], strides = [1, 1]} : vector<1x8xf32> to vector<1x4xf32>
    %313 = arith.addf %311, %312 : vector<1x4xf32>
    %cst_125 = arith.constant 4.8828125E-4 : f32
    %314 = vector.broadcast %cst_125 : f32 to vector<1x4xf32>
    %315 = arith.mulf %310, %314 : vector<1x4xf32>
    %cst_126 = arith.constant 4.8828125E-4 : f32
    %316 = vector.broadcast %cst_126 : f32 to vector<1x4xf32>
    %317 = arith.mulf %313, %316 : vector<1x4xf32>
    %318 = arith.mulf %315, %315 : vector<1x4xf32>
    %319 = arith.subf %317, %318 : vector<1x4xf32>
    %cst_127 = arith.constant 9.99999974E-6 : f32
    %320 = vector.broadcast %cst_127 : f32 to vector<1x4xf32>
    %321 = arith.addf %319, %320 : vector<1x4xf32>
    %322 = math.rsqrt %321 : vector<1x4xf32>
    %323 = arith.mulf %271, %322 : vector<1x4xf32>
    %324 = arith.mulf %315, %323 : vector<1x4xf32>
    %325 = arith.subf %272, %324 : vector<1x4xf32>
    %326 = tpu.concatenate %323, %323 in 1 : vector<1x4xf32>, vector<1x4xf32> -> vector<1x8xf32>
    %327 = tpu.concatenate %325, %325 in 1 : vector<1x4xf32>, vector<1x4xf32> -> vector<1x8xf32>
    %328 = tpu.concatenate %326, %326 in 1 : vector<1x8xf32>, vector<1x8xf32> -> vector<1x16xf32>
    %329 = tpu.concatenate %327, %327 in 1 : vector<1x8xf32>, vector<1x8xf32> -> vector<1x16xf32>
    %330 = tpu.concatenate %328, %328 in 1 : vector<1x16xf32>, vector<1x16xf32> -> vector<1x32xf32>
    %331 = tpu.concatenate %329, %329 in 1 : vector<1x16xf32>, vector<1x16xf32> -> vector<1x32xf32>
    %332 = tpu.concatenate %330, %330 in 1 : vector<1x32xf32>, vector<1x32xf32> -> vector<1x64xf32>
    %333 = tpu.concatenate %331, %331 in 1 : vector<1x32xf32>, vector<1x32xf32> -> vector<1x64xf32>
    %334 = tpu.concatenate %332, %332 in 1 : vector<1x64xf32>, vector<1x64xf32> -> vector<1x128xf32>
    %335 = tpu.concatenate %333, %333 in 1 : vector<1x64xf32>, vector<1x64xf32> -> vector<1x128xf32>
    %336 = tpu.concatenate %334, %334 in 1 : vector<1x128xf32>, vector<1x128xf32> -> vector<1x256xf32>
    %337 = tpu.concatenate %335, %335 in 1 : vector<1x128xf32>, vector<1x128xf32> -> vector<1x256xf32>
    %338 = vector.broadcast %336 : vector<1x256xf32> to vector<32x256xf32>
    %339 = arith.mulf %270, %338 : vector<32x256xf32>
    %340 = vector.broadcast %337 : vector<1x256xf32> to vector<32x256xf32>
    %341 = arith.addf %339, %340 : vector<32x256xf32>
    %cst_128 = arith.constant 0.000000e+00 : f32
    %342 = vector.broadcast %cst_128 : f32 to vector<32x256xf32>
    %343 = arith.cmpf ogt, %341, %342 : vector<32x256xf32>
    %cst_129 = arith.constant 2.000000e-01 : f32
    %344 = vector.broadcast %cst_129 : f32 to vector<32x256xf32>
    %345 = arith.mulf %344, %341 : vector<32x256xf32>
    %346 = arith.select %343, %341, %345 : vector<32x256xi1>, vector<32x256xf32>
    %347 = vector.extract_strided_slice %346 {offsets = [0, 0], sizes = [1, 128], strides = [1, 1]} : vector<32x256xf32> to vector<1x128xf32>
    %c0_130 = arith.constant 0 : index
    %c0_131 = arith.constant 0 : index
    %348 = vector.load %arg11[%c0_130, %c0_131] : memref<64x128xf32, #tpu.memory_space<vmem>>, vector<1x128xf32>
    tpu.vector_store %arg11[%c0_130, %c0_131], %347 {strides = array<i32>} : memref<64x128xf32, #tpu.memory_space<vmem>>, vector<1x128xf32>,
    %349 = vector.extract_strided_slice %346 {offsets = [0, 128], sizes = [1, 128], strides = [1, 1]} : vector<32x256xf32> to vector<1x128xf32>
    %c1_132 = arith.constant 1 : index
    %c0_133 = arith.constant 0 : index
    %350 = vector.load %arg11[%c1_132, %c0_133] : memref<64x128xf32, #tpu.memory_space<vmem>>, vector<1x128xf32>
    tpu.vector_store %arg11[%c1_132, %c0_133], %349 {strides = array<i32>} : memref<64x128xf32, #tpu.memory_space<vmem>>, vector<1x128xf32>,
    %351 = vector.extract_strided_slice %346 {offsets = [1, 0], sizes = [1, 128], strides = [1, 1]} : vector<32x256xf32> to vector<1x128xf32>
    %c2_134 = arith.constant 2 : index
    %c0_135 = arith.constant 0 : index
    %352 = vector.load %arg11[%c2_134, %c0_135] : memref<64x128xf32, #tpu.memory_space<vmem>>, vector<1x128xf32>
    tpu.vector_store %arg11[%c2_134, %c0_135], %351 {strides = array<i32>} : memref<64x128xf32, #tpu.memory_space<vmem>>, vector<1x128xf32>,
    %353 = vector.extract_strided_slice %346 {offsets = [1, 128], sizes = [1, 128], strides = [1, 1]} : vector<32x256xf32> to vector<1x128xf32>
    %c3_136 = arith.constant 3 : index
    %c0_137 = arith.constant 0 : index
    %354 = vector.load %arg11[%c3_136, %c0_137] : memref<64x128xf32, #tpu.memory_space<vmem>>, vector<1x128xf32>
    tpu.vector_store %arg11[%c3_136, %c0_137], %353 {strides = array<i32>} : memref<64x128xf32, #tpu.memory_space<vmem>>, vector<1x128xf32>,
    %355 = vector.extract_strided_slice %346 {offsets = [2, 0], sizes = [1, 128], strides = [1, 1]} : vector<32x256xf32> to vector<1x128xf32>
    %c4_138 = arith.constant 4 : index
    %c0_139 = arith.constant 0 : index
    %356 = vector.load %arg11[%c4_138, %c0_139] : memref<64x128xf32, #tpu.memory_space<vmem>>, vector<1x128xf32>
    tpu.vector_store %arg11[%c4_138, %c0_139], %355 {strides = array<i32>} : memref<64x128xf32, #tpu.memory_space<vmem>>, vector<1x128xf32>,
    %357 = vector.extract_strided_slice %346 {offsets = [2, 128], sizes = [1, 128], strides = [1, 1]} : vector<32x256xf32> to vector<1x128xf32>
    %c5_140 = arith.constant 5 : index
    %c0_141 = arith.constant 0 : index
    %358 = vector.load %arg11[%c5_140, %c0_141] : memref<64x128xf32, #tpu.memory_space<vmem>>, vector<1x128xf32>
    tpu.vector_store %arg11[%c5_140, %c0_141], %357 {strides = array<i32>} : memref<64x128xf32, #tpu.memory_space<vmem>>, vector<1x128xf32>,
    %359 = vector.extract_strided_slice %346 {offsets = [3, 0], sizes = [1, 128], strides = [1, 1]} : vector<32x256xf32> to vector<1x128xf32>
    %c6_142 = arith.constant 6 : index
    %c0_143 = arith.constant 0 : index
    %360 = vector.load %arg11[%c6_142, %c0_143] : memref<64x128xf32, #tpu.memory_space<vmem>>, vector<1x128xf32>
    tpu.vector_store %arg11[%c6_142, %c0_143], %359 {strides = array<i32>} : memref<64x128xf32, #tpu.memory_space<vmem>>, vector<1x128xf32>,
    %361 = vector.extract_strided_slice %346 {offsets = [3, 128], sizes = [1, 128], strides = [1, 1]} : vector<32x256xf32> to vector<1x128xf32>
    %c7_144 = arith.constant 7 : index
    %c0_145 = arith.constant 0 : index
    %362 = vector.load %arg11[%c7_144, %c0_145] : memref<64x128xf32, #tpu.memory_space<vmem>>, vector<1x128xf32>
    tpu.vector_store %arg11[%c7_144, %c0_145], %361 {strides = array<i32>} : memref<64x128xf32, #tpu.memory_space<vmem>>, vector<1x128xf32>,
    %363 = vector.extract_strided_slice %346 {offsets = [4, 0], sizes = [1, 128], strides = [1, 1]} : vector<32x256xf32> to vector<1x128xf32>
    %c8_146 = arith.constant 8 : index
    %c0_147 = arith.constant 0 : index
    %364 = vector.load %arg11[%c8_146, %c0_147] : memref<64x128xf32, #tpu.memory_space<vmem>>, vector<1x128xf32>
    tpu.vector_store %arg11[%c8_146, %c0_147], %363 {strides = array<i32>} : memref<64x128xf32, #tpu.memory_space<vmem>>, vector<1x128xf32>,
    %365 = vector.extract_strided_slice %346 {offsets = [4, 128], sizes = [1, 128], strides = [1, 1]} : vector<32x256xf32> to vector<1x128xf32>
    %c9_148 = arith.constant 9 : index
    %c0_149 = arith.constant 0 : index
    %366 = vector.load %arg11[%c9_148, %c0_149] : memref<64x128xf32, #tpu.memory_space<vmem>>, vector<1x128xf32>
    tpu.vector_store %arg11[%c9_148, %c0_149], %365 {strides = array<i32>} : memref<64x128xf32, #tpu.memory_space<vmem>>, vector<1x128xf32>,
    %367 = vector.extract_strided_slice %346 {offsets = [5, 0], sizes = [1, 128], strides = [1, 1]} : vector<32x256xf32> to vector<1x128xf32>
    %c10_150 = arith.constant 10 : index
    %c0_151 = arith.constant 0 : index
    %368 = vector.load %arg11[%c10_150, %c0_151] : memref<64x128xf32, #tpu.memory_space<vmem>>, vector<1x128xf32>
    tpu.vector_store %arg11[%c10_150, %c0_151], %367 {strides = array<i32>} : memref<64x128xf32, #tpu.memory_space<vmem>>, vector<1x128xf32>,
    %369 = vector.extract_strided_slice %346 {offsets = [5, 128], sizes = [1, 128], strides = [1, 1]} : vector<32x256xf32> to vector<1x128xf32>
    %c11_152 = arith.constant 11 : index
    %c0_153 = arith.constant 0 : index
    %370 = vector.load %arg11[%c11_152, %c0_153] : memref<64x128xf32, #tpu.memory_space<vmem>>, vector<1x128xf32>
    tpu.vector_store %arg11[%c11_152, %c0_153], %369 {strides = array<i32>} : memref<64x128xf32, #tpu.memory_space<vmem>>, vector<1x128xf32>,
    %371 = vector.extract_strided_slice %346 {offsets = [6, 0], sizes = [1, 128], strides = [1, 1]} : vector<32x256xf32> to vector<1x128xf32>
    %c12_154 = arith.constant 12 : index
    %c0_155 = arith.constant 0 : index
    %372 = vector.load %arg11[%c12_154, %c0_155] : memref<64x128xf32, #tpu.memory_space<vmem>>, vector<1x128xf32>
    tpu.vector_store %arg11[%c12_154, %c0_155], %371 {strides = array<i32>} : memref<64x128xf32, #tpu.memory_space<vmem>>, vector<1x128xf32>,
    %373 = vector.extract_strided_slice %346 {offsets = [6, 128], sizes = [1, 128], strides = [1, 1]} : vector<32x256xf32> to vector<1x128xf32>
    %c13_156 = arith.constant 13 : index
    %c0_157 = arith.constant 0 : index
    %374 = vector.load %arg11[%c13_156, %c0_157] : memref<64x128xf32, #tpu.memory_space<vmem>>, vector<1x128xf32>
    tpu.vector_store %arg11[%c13_156, %c0_157], %373 {strides = array<i32>} : memref<64x128xf32, #tpu.memory_space<vmem>>, vector<1x128xf32>,
    %375 = vector.extract_strided_slice %346 {offsets = [7, 0], sizes = [1, 128], strides = [1, 1]} : vector<32x256xf32> to vector<1x128xf32>
    %c14_158 = arith.constant 14 : index
    %c0_159 = arith.constant 0 : index
    %376 = vector.load %arg11[%c14_158, %c0_159] : memref<64x128xf32, #tpu.memory_space<vmem>>, vector<1x128xf32>
    tpu.vector_store %arg11[%c14_158, %c0_159], %375 {strides = array<i32>} : memref<64x128xf32, #tpu.memory_space<vmem>>, vector<1x128xf32>,
    %377 = vector.extract_strided_slice %346 {offsets = [7, 128], sizes = [1, 128], strides = [1, 1]} : vector<32x256xf32> to vector<1x128xf32>
    %c15_160 = arith.constant 15 : index
    %c0_161 = arith.constant 0 : index
    %378 = vector.load %arg11[%c15_160, %c0_161] : memref<64x128xf32, #tpu.memory_space<vmem>>, vector<1x128xf32>
    tpu.vector_store %arg11[%c15_160, %c0_161], %377 {strides = array<i32>} : memref<64x128xf32, #tpu.memory_space<vmem>>, vector<1x128xf32>,
    %379 = vector.extract_strided_slice %346 {offsets = [8, 0], sizes = [1, 128], strides = [1, 1]} : vector<32x256xf32> to vector<1x128xf32>
    %c16_162 = arith.constant 16 : index
    %c0_163 = arith.constant 0 : index
    %380 = vector.load %arg11[%c16_162, %c0_163] : memref<64x128xf32, #tpu.memory_space<vmem>>, vector<1x128xf32>
    tpu.vector_store %arg11[%c16_162, %c0_163], %379 {strides = array<i32>} : memref<64x128xf32, #tpu.memory_space<vmem>>, vector<1x128xf32>,
    %381 = vector.extract_strided_slice %346 {offsets = [8, 128], sizes = [1, 128], strides = [1, 1]} : vector<32x256xf32> to vector<1x128xf32>
    %c17_164 = arith.constant 17 : index
    %c0_165 = arith.constant 0 : index
    %382 = vector.load %arg11[%c17_164, %c0_165] : memref<64x128xf32, #tpu.memory_space<vmem>>, vector<1x128xf32>
    tpu.vector_store %arg11[%c17_164, %c0_165], %381 {strides = array<i32>} : memref<64x128xf32, #tpu.memory_space<vmem>>, vector<1x128xf32>,
    %383 = vector.extract_strided_slice %346 {offsets = [9, 0], sizes = [1, 128], strides = [1, 1]} : vector<32x256xf32> to vector<1x128xf32>
    %c18_166 = arith.constant 18 : index
    %c0_167 = arith.constant 0 : index
    %384 = vector.load %arg11[%c18_166, %c0_167] : memref<64x128xf32, #tpu.memory_space<vmem>>, vector<1x128xf32>
    tpu.vector_store %arg11[%c18_166, %c0_167], %383 {strides = array<i32>} : memref<64x128xf32, #tpu.memory_space<vmem>>, vector<1x128xf32>,
    %385 = vector.extract_strided_slice %346 {offsets = [9, 128], sizes = [1, 128], strides = [1, 1]} : vector<32x256xf32> to vector<1x128xf32>
    %c19_168 = arith.constant 19 : index
    %c0_169 = arith.constant 0 : index
    %386 = vector.load %arg11[%c19_168, %c0_169] : memref<64x128xf32, #tpu.memory_space<vmem>>, vector<1x128xf32>
    tpu.vector_store %arg11[%c19_168, %c0_169], %385 {strides = array<i32>} : memref<64x128xf32, #tpu.memory_space<vmem>>, vector<1x128xf32>,
    %387 = vector.extract_strided_slice %346 {offsets = [10, 0], sizes = [1, 128], strides = [1, 1]} : vector<32x256xf32> to vector<1x128xf32>
    %c20_170 = arith.constant 20 : index
    %c0_171 = arith.constant 0 : index
    %388 = vector.load %arg11[%c20_170, %c0_171] : memref<64x128xf32, #tpu.memory_space<vmem>>, vector<1x128xf32>
    tpu.vector_store %arg11[%c20_170, %c0_171], %387 {strides = array<i32>} : memref<64x128xf32, #tpu.memory_space<vmem>>, vector<1x128xf32>,
    %389 = vector.extract_strided_slice %346 {offsets = [10, 128], sizes = [1, 128], strides = [1, 1]} : vector<32x256xf32> to vector<1x128xf32>
    %c21_172 = arith.constant 21 : index
    %c0_173 = arith.constant 0 : index
    %390 = vector.load %arg11[%c21_172, %c0_173] : memref<64x128xf32, #tpu.memory_space<vmem>>, vector<1x128xf32>
    tpu.vector_store %arg11[%c21_172, %c0_173], %389 {strides = array<i32>} : memref<64x128xf32, #tpu.memory_space<vmem>>, vector<1x128xf32>,
    %391 = vector.extract_strided_slice %346 {offsets = [11, 0], sizes = [1, 128], strides = [1, 1]} : vector<32x256xf32> to vector<1x128xf32>
    %c22_174 = arith.constant 22 : index
    %c0_175 = arith.constant 0 : index
    %392 = vector.load %arg11[%c22_174, %c0_175] : memref<64x128xf32, #tpu.memory_space<vmem>>, vector<1x128xf32>
    tpu.vector_store %arg11[%c22_174, %c0_175], %391 {strides = array<i32>} : memref<64x128xf32, #tpu.memory_space<vmem>>, vector<1x128xf32>,
    %393 = vector.extract_strided_slice %346 {offsets = [11, 128], sizes = [1, 128], strides = [1, 1]} : vector<32x256xf32> to vector<1x128xf32>
    %c23_176 = arith.constant 23 : index
    %c0_177 = arith.constant 0 : index
    %394 = vector.load %arg11[%c23_176, %c0_177] : memref<64x128xf32, #tpu.memory_space<vmem>>, vector<1x128xf32>
    tpu.vector_store %arg11[%c23_176, %c0_177], %393 {strides = array<i32>} : memref<64x128xf32, #tpu.memory_space<vmem>>, vector<1x128xf32>,
    %395 = vector.extract_strided_slice %346 {offsets = [12, 0], sizes = [1, 128], strides = [1, 1]} : vector<32x256xf32> to vector<1x128xf32>
    %c24_178 = arith.constant 24 : index
    %c0_179 = arith.constant 0 : index
    %396 = vector.load %arg11[%c24_178, %c0_179] : memref<64x128xf32, #tpu.memory_space<vmem>>, vector<1x128xf32>
    tpu.vector_store %arg11[%c24_178, %c0_179], %395 {strides = array<i32>} : memref<64x128xf32, #tpu.memory_space<vmem>>, vector<1x128xf32>,
    %397 = vector.extract_strided_slice %346 {offsets = [12, 128], sizes = [1, 128], strides = [1, 1]} : vector<32x256xf32> to vector<1x128xf32>
    %c25_180 = arith.constant 25 : index
    %c0_181 = arith.constant 0 : index
    %398 = vector.load %arg11[%c25_180, %c0_181] : memref<64x128xf32, #tpu.memory_space<vmem>>, vector<1x128xf32>
    tpu.vector_store %arg11[%c25_180, %c0_181], %397 {strides = array<i32>} : memref<64x128xf32, #tpu.memory_space<vmem>>, vector<1x128xf32>,
    %399 = vector.extract_strided_slice %346 {offsets = [13, 0], sizes = [1, 128], strides = [1, 1]} : vector<32x256xf32> to vector<1x128xf32>
    %c26_182 = arith.constant 26 : index
    %c0_183 = arith.constant 0 : index
    %400 = vector.load %arg11[%c26_182, %c0_183] : memref<64x128xf32, #tpu.memory_space<vmem>>, vector<1x128xf32>
    tpu.vector_store %arg11[%c26_182, %c0_183], %399 {strides = array<i32>} : memref<64x128xf32, #tpu.memory_space<vmem>>, vector<1x128xf32>,
    %401 = vector.extract_strided_slice %346 {offsets = [13, 128], sizes = [1, 128], strides = [1, 1]} : vector<32x256xf32> to vector<1x128xf32>
    %c27_184 = arith.constant 27 : index
    %c0_185 = arith.constant 0 : index
    %402 = vector.load %arg11[%c27_184, %c0_185] : memref<64x128xf32, #tpu.memory_space<vmem>>, vector<1x128xf32>
    tpu.vector_store %arg11[%c27_184, %c0_185], %401 {strides = array<i32>} : memref<64x128xf32, #tpu.memory_space<vmem>>, vector<1x128xf32>,
    %403 = vector.extract_strided_slice %346 {offsets = [14, 0], sizes = [1, 128], strides = [1, 1]} : vector<32x256xf32> to vector<1x128xf32>
    %c28_186 = arith.constant 28 : index
    %c0_187 = arith.constant 0 : index
    %404 = vector.load %arg11[%c28_186, %c0_187] : memref<64x128xf32, #tpu.memory_space<vmem>>, vector<1x128xf32>
    tpu.vector_store %arg11[%c28_186, %c0_187], %403 {strides = array<i32>} : memref<64x128xf32, #tpu.memory_space<vmem>>, vector<1x128xf32>,
    %405 = vector.extract_strided_slice %346 {offsets = [14, 128], sizes = [1, 128], strides = [1, 1]} : vector<32x256xf32> to vector<1x128xf32>
    %c29_188 = arith.constant 29 : index
    %c0_189 = arith.constant 0 : index
    %406 = vector.load %arg11[%c29_188, %c0_189] : memref<64x128xf32, #tpu.memory_space<vmem>>, vector<1x128xf32>
    tpu.vector_store %arg11[%c29_188, %c0_189], %405 {strides = array<i32>} : memref<64x128xf32, #tpu.memory_space<vmem>>, vector<1x128xf32>,
    %407 = vector.extract_strided_slice %346 {offsets = [15, 0], sizes = [1, 128], strides = [1, 1]} : vector<32x256xf32> to vector<1x128xf32>
    %c30_190 = arith.constant 30 : index
    %c0_191 = arith.constant 0 : index
    %408 = vector.load %arg11[%c30_190, %c0_191] : memref<64x128xf32, #tpu.memory_space<vmem>>, vector<1x128xf32>
    tpu.vector_store %arg11[%c30_190, %c0_191], %407 {strides = array<i32>} : memref<64x128xf32, #tpu.memory_space<vmem>>, vector<1x128xf32>,
    %409 = vector.extract_strided_slice %346 {offsets = [15, 128], sizes = [1, 128], strides = [1, 1]} : vector<32x256xf32> to vector<1x128xf32>
    %c31_192 = arith.constant 31 : index
    %c0_193 = arith.constant 0 : index
    %410 = vector.load %arg11[%c31_192, %c0_193] : memref<64x128xf32, #tpu.memory_space<vmem>>, vector<1x128xf32>
    tpu.vector_store %arg11[%c31_192, %c0_193], %409 {strides = array<i32>} : memref<64x128xf32, #tpu.memory_space<vmem>>, vector<1x128xf32>,
    %411 = vector.extract_strided_slice %346 {offsets = [16, 0], sizes = [1, 128], strides = [1, 1]} : vector<32x256xf32> to vector<1x128xf32>
    %c32_194 = arith.constant 32 : index
    %c0_195 = arith.constant 0 : index
    %412 = vector.load %arg11[%c32_194, %c0_195] : memref<64x128xf32, #tpu.memory_space<vmem>>, vector<1x128xf32>
    tpu.vector_store %arg11[%c32_194, %c0_195], %411 {strides = array<i32>} : memref<64x128xf32, #tpu.memory_space<vmem>>, vector<1x128xf32>,
    %413 = vector.extract_strided_slice %346 {offsets = [16, 128], sizes = [1, 128], strides = [1, 1]} : vector<32x256xf32> to vector<1x128xf32>
    %c33 = arith.constant 33 : index
    %c0_196 = arith.constant 0 : index
    %414 = vector.load %arg11[%c33, %c0_196] : memref<64x128xf32, #tpu.memory_space<vmem>>, vector<1x128xf32>
    tpu.vector_store %arg11[%c33, %c0_196], %413 {strides = array<i32>} : memref<64x128xf32, #tpu.memory_space<vmem>>, vector<1x128xf32>,
    %415 = vector.extract_strided_slice %346 {offsets = [17, 0], sizes = [1, 128], strides = [1, 1]} : vector<32x256xf32> to vector<1x128xf32>
    %c34 = arith.constant 34 : index
    %c0_197 = arith.constant 0 : index
    %416 = vector.load %arg11[%c34, %c0_197] : memref<64x128xf32, #tpu.memory_space<vmem>>, vector<1x128xf32>
    tpu.vector_store %arg11[%c34, %c0_197], %415 {strides = array<i32>} : memref<64x128xf32, #tpu.memory_space<vmem>>, vector<1x128xf32>,
    %417 = vector.extract_strided_slice %346 {offsets = [17, 128], sizes = [1, 128], strides = [1, 1]} : vector<32x256xf32> to vector<1x128xf32>
    %c35 = arith.constant 35 : index
    %c0_198 = arith.constant 0 : index
    %418 = vector.load %arg11[%c35, %c0_198] : memref<64x128xf32, #tpu.memory_space<vmem>>, vector<1x128xf32>
    tpu.vector_store %arg11[%c35, %c0_198], %417 {strides = array<i32>} : memref<64x128xf32, #tpu.memory_space<vmem>>, vector<1x128xf32>,
    %419 = vector.extract_strided_slice %346 {offsets = [18, 0], sizes = [1, 128], strides = [1, 1]} : vector<32x256xf32> to vector<1x128xf32>
    %c36 = arith.constant 36 : index
    %c0_199 = arith.constant 0 : index
    %420 = vector.load %arg11[%c36, %c0_199] : memref<64x128xf32, #tpu.memory_space<vmem>>, vector<1x128xf32>
    tpu.vector_store %arg11[%c36, %c0_199], %419 {strides = array<i32>} : memref<64x128xf32, #tpu.memory_space<vmem>>, vector<1x128xf32>,
    %421 = vector.extract_strided_slice %346 {offsets = [18, 128], sizes = [1, 128], strides = [1, 1]} : vector<32x256xf32> to vector<1x128xf32>
    %c37 = arith.constant 37 : index
    %c0_200 = arith.constant 0 : index
    %422 = vector.load %arg11[%c37, %c0_200] : memref<64x128xf32, #tpu.memory_space<vmem>>, vector<1x128xf32>
    tpu.vector_store %arg11[%c37, %c0_200], %421 {strides = array<i32>} : memref<64x128xf32, #tpu.memory_space<vmem>>, vector<1x128xf32>,
    %423 = vector.extract_strided_slice %346 {offsets = [19, 0], sizes = [1, 128], strides = [1, 1]} : vector<32x256xf32> to vector<1x128xf32>
    %c38 = arith.constant 38 : index
    %c0_201 = arith.constant 0 : index
    %424 = vector.load %arg11[%c38, %c0_201] : memref<64x128xf32, #tpu.memory_space<vmem>>, vector<1x128xf32>
    tpu.vector_store %arg11[%c38, %c0_201], %423 {strides = array<i32>} : memref<64x128xf32, #tpu.memory_space<vmem>>, vector<1x128xf32>,
    %425 = vector.extract_strided_slice %346 {offsets = [19, 128], sizes = [1, 128], strides = [1, 1]} : vector<32x256xf32> to vector<1x128xf32>
    %c39 = arith.constant 39 : index
    %c0_202 = arith.constant 0 : index
    %426 = vector.load %arg11[%c39, %c0_202] : memref<64x128xf32, #tpu.memory_space<vmem>>, vector<1x128xf32>
    tpu.vector_store %arg11[%c39, %c0_202], %425 {strides = array<i32>} : memref<64x128xf32, #tpu.memory_space<vmem>>, vector<1x128xf32>,
    %427 = vector.extract_strided_slice %346 {offsets = [20, 0], sizes = [1, 128], strides = [1, 1]} : vector<32x256xf32> to vector<1x128xf32>
    %c40 = arith.constant 40 : index
    %c0_203 = arith.constant 0 : index
    %428 = vector.load %arg11[%c40, %c0_203] : memref<64x128xf32, #tpu.memory_space<vmem>>, vector<1x128xf32>
    tpu.vector_store %arg11[%c40, %c0_203], %427 {strides = array<i32>} : memref<64x128xf32, #tpu.memory_space<vmem>>, vector<1x128xf32>,
    %429 = vector.extract_strided_slice %346 {offsets = [20, 128], sizes = [1, 128], strides = [1, 1]} : vector<32x256xf32> to vector<1x128xf32>
    %c41 = arith.constant 41 : index
    %c0_204 = arith.constant 0 : index
    %430 = vector.load %arg11[%c41, %c0_204] : memref<64x128xf32, #tpu.memory_space<vmem>>, vector<1x128xf32>
    tpu.vector_store %arg11[%c41, %c0_204], %429 {strides = array<i32>} : memref<64x128xf32, #tpu.memory_space<vmem>>, vector<1x128xf32>,
    %431 = vector.extract_strided_slice %346 {offsets = [21, 0], sizes = [1, 128], strides = [1, 1]} : vector<32x256xf32> to vector<1x128xf32>
    %c42 = arith.constant 42 : index
    %c0_205 = arith.constant 0 : index
    %432 = vector.load %arg11[%c42, %c0_205] : memref<64x128xf32, #tpu.memory_space<vmem>>, vector<1x128xf32>
    tpu.vector_store %arg11[%c42, %c0_205], %431 {strides = array<i32>} : memref<64x128xf32, #tpu.memory_space<vmem>>, vector<1x128xf32>,
    %433 = vector.extract_strided_slice %346 {offsets = [21, 128], sizes = [1, 128], strides = [1, 1]} : vector<32x256xf32> to vector<1x128xf32>
    %c43 = arith.constant 43 : index
    %c0_206 = arith.constant 0 : index
    %434 = vector.load %arg11[%c43, %c0_206] : memref<64x128xf32, #tpu.memory_space<vmem>>, vector<1x128xf32>
    tpu.vector_store %arg11[%c43, %c0_206], %433 {strides = array<i32>} : memref<64x128xf32, #tpu.memory_space<vmem>>, vector<1x128xf32>,
    %435 = vector.extract_strided_slice %346 {offsets = [22, 0], sizes = [1, 128], strides = [1, 1]} : vector<32x256xf32> to vector<1x128xf32>
    %c44 = arith.constant 44 : index
    %c0_207 = arith.constant 0 : index
    %436 = vector.load %arg11[%c44, %c0_207] : memref<64x128xf32, #tpu.memory_space<vmem>>, vector<1x128xf32>
    tpu.vector_store %arg11[%c44, %c0_207], %435 {strides = array<i32>} : memref<64x128xf32, #tpu.memory_space<vmem>>, vector<1x128xf32>,
    %437 = vector.extract_strided_slice %346 {offsets = [22, 128], sizes = [1, 128], strides = [1, 1]} : vector<32x256xf32> to vector<1x128xf32>
    %c45 = arith.constant 45 : index
    %c0_208 = arith.constant 0 : index
    %438 = vector.load %arg11[%c45, %c0_208] : memref<64x128xf32, #tpu.memory_space<vmem>>, vector<1x128xf32>
    tpu.vector_store %arg11[%c45, %c0_208], %437 {strides = array<i32>} : memref<64x128xf32, #tpu.memory_space<vmem>>, vector<1x128xf32>,
    %439 = vector.extract_strided_slice %346 {offsets = [23, 0], sizes = [1, 128], strides = [1, 1]} : vector<32x256xf32> to vector<1x128xf32>
    %c46 = arith.constant 46 : index
    %c0_209 = arith.constant 0 : index
    %440 = vector.load %arg11[%c46, %c0_209] : memref<64x128xf32, #tpu.memory_space<vmem>>, vector<1x128xf32>
    tpu.vector_store %arg11[%c46, %c0_209], %439 {strides = array<i32>} : memref<64x128xf32, #tpu.memory_space<vmem>>, vector<1x128xf32>,
    %441 = vector.extract_strided_slice %346 {offsets = [23, 128], sizes = [1, 128], strides = [1, 1]} : vector<32x256xf32> to vector<1x128xf32>
    %c47 = arith.constant 47 : index
    %c0_210 = arith.constant 0 : index
    %442 = vector.load %arg11[%c47, %c0_210] : memref<64x128xf32, #tpu.memory_space<vmem>>, vector<1x128xf32>
    tpu.vector_store %arg11[%c47, %c0_210], %441 {strides = array<i32>} : memref<64x128xf32, #tpu.memory_space<vmem>>, vector<1x128xf32>,
    %443 = vector.extract_strided_slice %346 {offsets = [24, 0], sizes = [1, 128], strides = [1, 1]} : vector<32x256xf32> to vector<1x128xf32>
    %c48 = arith.constant 48 : index
    %c0_211 = arith.constant 0 : index
    %444 = vector.load %arg11[%c48, %c0_211] : memref<64x128xf32, #tpu.memory_space<vmem>>, vector<1x128xf32>
    tpu.vector_store %arg11[%c48, %c0_211], %443 {strides = array<i32>} : memref<64x128xf32, #tpu.memory_space<vmem>>, vector<1x128xf32>,
    %445 = vector.extract_strided_slice %346 {offsets = [24, 128], sizes = [1, 128], strides = [1, 1]} : vector<32x256xf32> to vector<1x128xf32>
    %c49 = arith.constant 49 : index
    %c0_212 = arith.constant 0 : index
    %446 = vector.load %arg11[%c49, %c0_212] : memref<64x128xf32, #tpu.memory_space<vmem>>, vector<1x128xf32>
    tpu.vector_store %arg11[%c49, %c0_212], %445 {strides = array<i32>} : memref<64x128xf32, #tpu.memory_space<vmem>>, vector<1x128xf32>,
    %447 = vector.extract_strided_slice %346 {offsets = [25, 0], sizes = [1, 128], strides = [1, 1]} : vector<32x256xf32> to vector<1x128xf32>
    %c50 = arith.constant 50 : index
    %c0_213 = arith.constant 0 : index
    %448 = vector.load %arg11[%c50, %c0_213] : memref<64x128xf32, #tpu.memory_space<vmem>>, vector<1x128xf32>
    tpu.vector_store %arg11[%c50, %c0_213], %447 {strides = array<i32>} : memref<64x128xf32, #tpu.memory_space<vmem>>, vector<1x128xf32>,
    %449 = vector.extract_strided_slice %346 {offsets = [25, 128], sizes = [1, 128], strides = [1, 1]} : vector<32x256xf32> to vector<1x128xf32>
    %c51 = arith.constant 51 : index
    %c0_214 = arith.constant 0 : index
    %450 = vector.load %arg11[%c51, %c0_214] : memref<64x128xf32, #tpu.memory_space<vmem>>, vector<1x128xf32>
    tpu.vector_store %arg11[%c51, %c0_214], %449 {strides = array<i32>} : memref<64x128xf32, #tpu.memory_space<vmem>>, vector<1x128xf32>,
    %451 = vector.extract_strided_slice %346 {offsets = [26, 0], sizes = [1, 128], strides = [1, 1]} : vector<32x256xf32> to vector<1x128xf32>
    %c52 = arith.constant 52 : index
    %c0_215 = arith.constant 0 : index
    %452 = vector.load %arg11[%c52, %c0_215] : memref<64x128xf32, #tpu.memory_space<vmem>>, vector<1x128xf32>
    tpu.vector_store %arg11[%c52, %c0_215], %451 {strides = array<i32>} : memref<64x128xf32, #tpu.memory_space<vmem>>, vector<1x128xf32>,
    %453 = vector.extract_strided_slice %346 {offsets = [26, 128], sizes = [1, 128], strides = [1, 1]} : vector<32x256xf32> to vector<1x128xf32>
    %c53 = arith.constant 53 : index
    %c0_216 = arith.constant 0 : index
    %454 = vector.load %arg11[%c53, %c0_216] : memref<64x128xf32, #tpu.memory_space<vmem>>, vector<1x128xf32>
    tpu.vector_store %arg11[%c53, %c0_216], %453 {strides = array<i32>} : memref<64x128xf32, #tpu.memory_space<vmem>>, vector<1x128xf32>,
    %455 = vector.extract_strided_slice %346 {offsets = [27, 0], sizes = [1, 128], strides = [1, 1]} : vector<32x256xf32> to vector<1x128xf32>
    %c54 = arith.constant 54 : index
    %c0_217 = arith.constant 0 : index
    %456 = vector.load %arg11[%c54, %c0_217] : memref<64x128xf32, #tpu.memory_space<vmem>>, vector<1x128xf32>
    tpu.vector_store %arg11[%c54, %c0_217], %455 {strides = array<i32>} : memref<64x128xf32, #tpu.memory_space<vmem>>, vector<1x128xf32>,
    %457 = vector.extract_strided_slice %346 {offsets = [27, 128], sizes = [1, 128], strides = [1, 1]} : vector<32x256xf32> to vector<1x128xf32>
    %c55 = arith.constant 55 : index
    %c0_218 = arith.constant 0 : index
    %458 = vector.load %arg11[%c55, %c0_218] : memref<64x128xf32, #tpu.memory_space<vmem>>, vector<1x128xf32>
    tpu.vector_store %arg11[%c55, %c0_218], %457 {strides = array<i32>} : memref<64x128xf32, #tpu.memory_space<vmem>>, vector<1x128xf32>,
    %459 = vector.extract_strided_slice %346 {offsets = [28, 0], sizes = [1, 128], strides = [1, 1]} : vector<32x256xf32> to vector<1x128xf32>
    %c56 = arith.constant 56 : index
    %c0_219 = arith.constant 0 : index
    %460 = vector.load %arg11[%c56, %c0_219] : memref<64x128xf32, #tpu.memory_space<vmem>>, vector<1x128xf32>
    tpu.vector_store %arg11[%c56, %c0_219], %459 {strides = array<i32>} : memref<64x128xf32, #tpu.memory_space<vmem>>, vector<1x128xf32>,
    %461 = vector.extract_strided_slice %346 {offsets = [28, 128], sizes = [1, 128], strides = [1, 1]} : vector<32x256xf32> to vector<1x128xf32>
    %c57 = arith.constant 57 : index
    %c0_220 = arith.constant 0 : index
    %462 = vector.load %arg11[%c57, %c0_220] : memref<64x128xf32, #tpu.memory_space<vmem>>, vector<1x128xf32>
    tpu.vector_store %arg11[%c57, %c0_220], %461 {strides = array<i32>} : memref<64x128xf32, #tpu.memory_space<vmem>>, vector<1x128xf32>,
    %463 = vector.extract_strided_slice %346 {offsets = [29, 0], sizes = [1, 128], strides = [1, 1]} : vector<32x256xf32> to vector<1x128xf32>
    %c58 = arith.constant 58 : index
    %c0_221 = arith.constant 0 : index
    %464 = vector.load %arg11[%c58, %c0_221] : memref<64x128xf32, #tpu.memory_space<vmem>>, vector<1x128xf32>
    tpu.vector_store %arg11[%c58, %c0_221], %463 {strides = array<i32>} : memref<64x128xf32, #tpu.memory_space<vmem>>, vector<1x128xf32>,
    %465 = vector.extract_strided_slice %346 {offsets = [29, 128], sizes = [1, 128], strides = [1, 1]} : vector<32x256xf32> to vector<1x128xf32>
    %c59 = arith.constant 59 : index
    %c0_222 = arith.constant 0 : index
    %466 = vector.load %arg11[%c59, %c0_222] : memref<64x128xf32, #tpu.memory_space<vmem>>, vector<1x128xf32>
    tpu.vector_store %arg11[%c59, %c0_222], %465 {strides = array<i32>} : memref<64x128xf32, #tpu.memory_space<vmem>>, vector<1x128xf32>,
    %467 = vector.extract_strided_slice %346 {offsets = [30, 0], sizes = [1, 128], strides = [1, 1]} : vector<32x256xf32> to vector<1x128xf32>
    %c60 = arith.constant 60 : index
    %c0_223 = arith.constant 0 : index
    %468 = vector.load %arg11[%c60, %c0_223] : memref<64x128xf32, #tpu.memory_space<vmem>>, vector<1x128xf32>
    tpu.vector_store %arg11[%c60, %c0_223], %467 {strides = array<i32>} : memref<64x128xf32, #tpu.memory_space<vmem>>, vector<1x128xf32>,
    %469 = vector.extract_strided_slice %346 {offsets = [30, 128], sizes = [1, 128], strides = [1, 1]} : vector<32x256xf32> to vector<1x128xf32>
    %c61 = arith.constant 61 : index
    %c0_224 = arith.constant 0 : index
    %470 = vector.load %arg11[%c61, %c0_224] : memref<64x128xf32, #tpu.memory_space<vmem>>, vector<1x128xf32>
    tpu.vector_store %arg11[%c61, %c0_224], %469 {strides = array<i32>} : memref<64x128xf32, #tpu.memory_space<vmem>>, vector<1x128xf32>,
    %471 = vector.extract_strided_slice %346 {offsets = [31, 0], sizes = [1, 128], strides = [1, 1]} : vector<32x256xf32> to vector<1x128xf32>
    %c62 = arith.constant 62 : index
    %c0_225 = arith.constant 0 : index
    %472 = vector.load %arg11[%c62, %c0_225] : memref<64x128xf32, #tpu.memory_space<vmem>>, vector<1x128xf32>
    tpu.vector_store %arg11[%c62, %c0_225], %471 {strides = array<i32>} : memref<64x128xf32, #tpu.memory_space<vmem>>, vector<1x128xf32>,
    %473 = vector.extract_strided_slice %346 {offsets = [31, 128], sizes = [1, 128], strides = [1, 1]} : vector<32x256xf32> to vector<1x128xf32>
    %c63 = arith.constant 63 : index
    %c0_226 = arith.constant 0 : index
    %474 = vector.load %arg11[%c63, %c0_226] : memref<64x128xf32, #tpu.memory_space<vmem>>, vector<1x128xf32>
    tpu.vector_store %arg11[%c63, %c0_226], %473 {strides = array<i32>} : memref<64x128xf32, #tpu.memory_space<vmem>>, vector<1x128xf32>,
    return
  }
}

</mosaic_0001>

<llo_original>
// kernel: generator_forward.1
$region0: #{generator_forward.1}
  #allocation0 [shape = 'u32[]', space=smem, size = 0x4, offset = 0x4, fixed_abs, tag = 'smem constant byte address 0x4 - core index']
  #allocation1 [shape = 'u32[144,128]{1,0:T(1,128)}', space=vmem, size = 0x12000, scoped, tag = 'internal scratch']
  #allocation2 [shape = 'f32[18,256]{1,0:T(8,128)}', space=vmem, size = 0x6000, scoped, tag = 'scratch operand']
  #allocation3 [shape = 'f32[34,256]{1,0:T(8,128)}', space=vmem, size = 0xa000, scoped, tag = 'scratch operand']
  %s0 = inlined_call_operand.hbm [shape: f32[2,128], index: 0, kind: input, shape index: {}]
  %s1 = inlined_call_operand.hbm [shape: bf16[128,2048], index: 1, kind: input, shape index: {}]
  %s2 = inlined_call_operand.hbm [shape: f32[1,2048], index: 2, kind: input, shape index: {}]
  %s3 = inlined_call_operand.vmem [shape: f32[1,32], index: 3, kind: input, shape index: {}]
  %s4 = inlined_call_operand.vmem [shape: f32[1,32], index: 4, kind: input, shape index: {}]
  %s5 = inlined_call_operand.hbm [shape: bf16[512,512], index: 5, kind: input, shape index: {}]
  %s6 = inlined_call_operand.vmem [shape: f32[1,16], index: 6, kind: input, shape index: {}]
  %s7 = inlined_call_operand.vmem [shape: f32[1,16], index: 7, kind: input, shape index: {}]
  %s8 = inlined_call_operand.hbm [shape: bf16[512,256], index: 8, kind: input, shape index: {}]
  %s9 = inlined_call_operand.vmem [shape: f32[1,4], index: 9, kind: input, shape index: {}]
  %s10 = inlined_call_operand.vmem [shape: f32[1,4], index: 10, kind: input, shape index: {}]
  %s11 = inlined_call_operand.vmem [shape: f32[64,128], index: 11, kind: output, shape index: {}]
  %s12 = sld [smem:[#allocation0]]
  $region74: #{generator_forward.1} parent=0
    _
  %s14 = ssub.s32 1, %s12
  %s15 = scalar_select 0, %s14, %s12
  $region1: #{generator_forward.1} parent=0
    #allocation4 [shape = 'u8[1024]{0}', space=vmem, size = 0x400, scoped, tag = 'input window, operand 0, single buffered']
    #allocation5 [shape = 's32[1]{0}', space=sflag, size = 0x4, scoped, tag = 'scoped memory for generator_forward.1']
    #allocation6 [shape = 'u8[524288]{0}', space=vmem, size = 0x80000, scoped, tag = 'input window, operand 1, single buffered']
    #allocation7 [shape = 's32[1]{0}', space=sflag, size = 0x4, scoped, tag = 'scoped memory for generator_forward.1']
    #allocation8 [shape = 'u8[8192]{0}', space=vmem, size = 0x2000, scoped, tag = 'input window, operand 2, single buffered']
    #allocation9 [shape = 'u8[524288]{0}', space=vmem, size = 0x80000, scoped, tag = 'input window, operand 5, single buffered']
    #allocation10 [shape = 's32[1]{0}', space=sflag, size = 0x4, scoped, tag = 'scoped memory for generator_forward.1']
    #allocation11 [shape = 'u8[262144]{0}', space=vmem, size = 0x40000, scoped, tag = 'input window, operand 8, single buffered']
    %16 = vsyncpa [#allocation5], 0
    %17 = vsyncpa [#allocation7], 0
    %18 = vsyncpa [#allocation10], 0
    // Predicated region
    $region2: #{generator_forward.1} parent=1 // pred_check
      _
    $region3: #{generator_forward.1} parent=1 // pred_check_branch
      %20 = sbr.rel (0) target = $region5
    $region4: #{generator_forward.1} parent=1 // pred_region
      %s22 = ssub.s32 32, 32
      %23 = vsyncadd [#allocation5], %s22
      %s25 = sshll.u32 [#allocation4], 4
      %s26 = int_to_ptr.vmem [resolvable:$true] %s25
      %28 = dma.hbm_to_vmem [thread:$0]  %s0, 32, %s26, [#allocation5]
    $region5: #{generator_forward.1} parent=1 // pred_fallthru
      _
    // Predicated region
    $region6: #{generator_forward.1} parent=1 // pred_check
      _
    $region7: #{generator_forward.1} parent=1 // pred_check_branch
      %30 = sbr.rel (0) target = $region9
    $region8: #{generator_forward.1} parent=1 // pred_region
      %s32 = ssub.s32 16384, 16384
      %33 = vsyncadd [#allocation7], %s32
      %s34 = sshll.u32 [#allocation6], 4
      %s35 = int_to_ptr.vmem [resolvable:$true] %s34
      %40 = dma.hbm_to_vmem [thread:$0]  %s1, 16384, %s35, [#allocation7], 1024, 1024, 64
    $region9: #{generator_forward.1} parent=1 // pred_fallthru
      _
    // Predicated region
    $region10: #{generator_forward.1} parent=1 // pred_check
      _
    $region11: #{generator_forward.1} parent=1 // pred_check_branch
      %42 = sbr.rel (0) target = $region13
    $region12: #{generator_forward.1} parent=1 // pred_region
      %s44 = ssub.s32 256, 256
      %45 = vsyncadd [#allocation7], %s44
      %s47 = sshll.u32 [#allocation8], 4
      %s48 = int_to_ptr.vmem [resolvable:$true] %s47
      %50 = dma.hbm_to_vmem [thread:$0]  %s2, 256, %s48, [#allocation7]
    $region13: #{generator_forward.1} parent=1 // pred_fallthru
      _
    // Predicated region
    $region14: #{generator_forward.1} parent=1 // pred_check
      _
    $region15: #{generator_forward.1} parent=1 // pred_check_branch
      %52 = sbr.rel (0) target = $region17
    $region16: #{generator_forward.1} parent=1 // pred_region
      _
    $region17: #{generator_forward.1} parent=1 // pred_fallthru
      _
    // Predicated region
    $region18: #{generator_forward.1} parent=1 // pred_check
      _
    $region19: #{generator_forward.1} parent=1 // pred_check_branch
      %54 = sbr.rel (0) target = $region21
    $region20: #{generator_forward.1} parent=1 // pred_region
      _
    $region21: #{generator_forward.1} parent=1 // pred_fallthru
      _
    // Predicated region
    $region22: #{generator_forward.1} parent=1 // pred_check
      _
    $region23: #{generator_forward.1} parent=1 // pred_check_branch
      %56 = sbr.rel (0) target = $region25
    $region24: #{generator_forward.1} parent=1 // pred_region
      %s58 = ssub.s32 16384, 16384
      %59 = vsyncadd [#allocation10], %s58
      %s60 = sshll.u32 [#allocation9], 4
      %s61 = int_to_ptr.vmem [resolvable:$true] %s60
      %66 = dma.hbm_to_vmem [thread:$0]  %s5, 16384, %s61, [#allocation10], 256, 256, 16
    $region25: #{generator_forward.1} parent=1 // pred_fallthru
      _
    // Predicated region
    $region26: #{generator_forward.1} parent=1 // pred_check
      _
    $region27: #{generator_forward.1} parent=1 // pred_check_branch
      %68 = sbr.rel (0) target = $region29
    $region28: #{generator_forward.1} parent=1 // pred_region
      _
    $region29: #{generator_forward.1} parent=1 // pred_fallthru
      _
    // Predicated region
    $region30: #{generator_forward.1} parent=1 // pred_check
      _
    $region31: #{generator_forward.1} parent=1 // pred_check_branch
      %70 = sbr.rel (0) target = $region33
    $region32: #{generator_forward.1} parent=1 // pred_region
      _
    $region33: #{generator_forward.1} parent=1 // pred_fallthru
      _
    // Predicated region
    $region34: #{generator_forward.1} parent=1 // pred_check
      _
    $region35: #{generator_forward.1} parent=1 // pred_check_branch
      %72 = sbr.rel (0) target = $region37
    $region36: #{generator_forward.1} parent=1 // pred_region
      %s74 = ssub.s32 8192, 8192
      %75 = vsyncadd [#allocation10], %s74
      %s76 = sshll.u32 [#allocation11], 4
      %s77 = int_to_ptr.vmem [resolvable:$true] %s76
      %82 = dma.hbm_to_vmem [thread:$0]  %s8, 8192, %s77, [#allocation10], 128, 128, 8
    $region37: #{generator_forward.1} parent=1 // pred_fallthru
      _
    // Predicated region
    $region38: #{generator_forward.1} parent=1 // pred_check
      _
    $region39: #{generator_forward.1} parent=1 // pred_check_branch
      %84 = sbr.rel (0) target = $region41
    $region40: #{generator_forward.1} parent=1 // pred_region
      _
    $region41: #{generator_forward.1} parent=1 // pred_fallthru
      _
    // Predicated region
    $region42: #{generator_forward.1} parent=1 // pred_check
      _
    $region43: #{generator_forward.1} parent=1 // pred_check_branch
      %86 = sbr.rel (0) target = $region45
    $region44: #{generator_forward.1} parent=1 // pred_region
      _
    $region45: #{generator_forward.1} parent=1 // pred_fallthru
      _
    // Predicated region
    $region46: #{generator_forward.1} parent=1 // pred_check
      _
    $region47: #{generator_forward.1} parent=1 // pred_check_branch
      %88 = sbr.rel (0) target = $region49
    $region48: #{generator_forward.1} parent=1 // pred_region
      %89 = dma.done [#allocation5], 32
    $region49: #{generator_forward.1} parent=1 // pred_fallthru
      _
    // Predicated region
    $region50: #{generator_forward.1} parent=1 // pred_check
      _
    $region51: #{generator_forward.1} parent=1 // pred_check_branch
      %91 = sbr.rel (0) target = $region53
    $region52: #{generator_forward.1} parent=1 // pred_region
      %92 = dma.done [#allocation7], 16384
    $region53: #{generator_forward.1} parent=1 // pred_fallthru
      _
    // Predicated region
    $region54: #{generator_forward.1} parent=1 // pred_check
      _
    $region55: #{generator_forward.1} parent=1 // pred_check_branch
      %94 = sbr.rel (0) target = $region57
    $region56: #{generator_forward.1} parent=1 // pred_region
      %95 = dma.done [#allocation7], 256
    $region57: #{generator_forward.1} parent=1 // pred_fallthru
      _
    // Predicated region
    $region58: #{generator_forward.1} parent=1 // pred_check
      _
    $region59: #{generator_forward.1} parent=1 // pred_check_branch
      %97 = sbr.rel (0) target = $region61
    $region60: #{generator_forward.1} parent=1 // pred_region
      %98 = dma.done [#allocation10], 16384
    $region61: #{generator_forward.1} parent=1 // pred_fallthru
      _
    // Predicated region
    $region62: #{generator_forward.1} parent=1 // pred_check
      _
    $region63: #{generator_forward.1} parent=1 // pred_check_branch
      %100 = sbr.rel (0) target = $region65
    $region64: #{generator_forward.1} parent=1 // pred_region
      %101 = dma.done [#allocation10], 8192
    $region65: #{generator_forward.1} parent=1 // pred_fallthru
      _
    %v103 = vld [vmem:[#allocation4] sm:$0x3]
    %v104 = vpack.c.bf16 %v103, %v103
    %v105 = vld [vmem:[#allocation6] sm:$0xff]
    %v106 = vld [vmem:[#allocation6 + $0x8] sm:$0xff]
    %v107 = vld [vmem:[#allocation6 + $0x10] sm:$0xff]
    %v108 = vld [vmem:[#allocation6 + $0x18] sm:$0xff]
    %v109 = vld [vmem:[#allocation6 + $0x20] sm:$0xff]
    %v110 = vld [vmem:[#allocation6 + $0x28] sm:$0xff]
    %v111 = vld [vmem:[#allocation6 + $0x30] sm:$0xff]
    %v112 = vld [vmem:[#allocation6 + $0x38] sm:$0xff]
    %v113 = vld [vmem:[#allocation6 + $0x40] sm:$0xff]
    %v114 = vld [vmem:[#allocation6 + $0x48] sm:$0xff]
    %v115 = vld [vmem:[#allocation6 + $0x50] sm:$0xff]
    %v116 = vld [vmem:[#allocation6 + $0x58] sm:$0xff]
    %v117 = vld [vmem:[#allocation6 + $0x60] sm:$0xff]
    %v118 = vld [vmem:[#allocation6 + $0x68] sm:$0xff]
    %v119 = vld [vmem:[#allocation6 + $0x70] sm:$0xff]
    %v120 = vld [vmem:[#allocation6 + $0x78] sm:$0xff]
    %v121 = vld [vmem:[#allocation6 + $0x80] sm:$0xff]
    %v122 = vld [vmem:[#allocation6 + $0x88] sm:$0xff]
    %v123 = vld [vmem:[#allocation6 + $0x90] sm:$0xff]
    %v124 = vld [vmem:[#allocation6 + $0x98] sm:$0xff]
    %v125 = vld [vmem:[#allocation6 + $0xa0] sm:$0xff]
    %v126 = vld [vmem:[#allocation6 + $0xa8] sm:$0xff]
    %v127 = vld [vmem:[#allocation6 + $0xb0] sm:$0xff]
    %v128 = vld [vmem:[#allocation6 + $0xb8] sm:$0xff]
    %v129 = vld [vmem:[#allocation6 + $0xc0] sm:$0xff]
    %v130 = vld [vmem:[#allocation6 + $0xc8] sm:$0xff]
    %v131 = vld [vmem:[#allocation6 + $0xd0] sm:$0xff]
    %v132 = vld [vmem:[#allocation6 + $0xd8] sm:$0xff]
    %v133 = vld [vmem:[#allocation6 + $0xe0] sm:$0xff]
    %v134 = vld [vmem:[#allocation6 + $0xe8] sm:$0xff]
    %v135 = vld [vmem:[#allocation6 + $0xf0] sm:$0xff]
    %v136 = vld [vmem:[#allocation6 + $0xf8] sm:$0xff]
    %v137 = vld [vmem:[#allocation6 + $0x100] sm:$0xff]
    %v138 = vld [vmem:[#allocation6 + $0x108] sm:$0xff]
    %v139 = vld [vmem:[#allocation6 + $0x110] sm:$0xff]
    %v140 = vld [vmem:[#allocation6 + $0x118] sm:$0xff]
    %v141 = vld [vmem:[#allocation6 + $0x120] sm:$0xff]
    %v142 = vld [vmem:[#allocation6 + $0x128] sm:$0xff]
    %v143 = vld [vmem:[#allocation6 + $0x130] sm:$0xff]
    %v144 = vld [vmem:[#allocation6 + $0x138] sm:$0xff]
    %v145 = vld [vmem:[#allocation6 + $0x140] sm:$0xff]
    %v146 = vld [vmem:[#allocation6 + $0x148] sm:$0xff]
    %v147 = vld [vmem:[#allocation6 + $0x150] sm:$0xff]
    %v148 = vld [vmem:[#allocation6 + $0x158] sm:$0xff]
    %v149 = vld [vmem:[#allocation6 + $0x160] sm:$0xff]
    %v150 = vld [vmem:[#allocation6 + $0x168] sm:$0xff]
    %v151 = vld [vmem:[#allocation6 + $0x170] sm:$0xff]
    %v152 = vld [vmem:[#allocation6 + $0x178] sm:$0xff]
    %v153 = vld [vmem:[#allocation6 + $0x180] sm:$0xff]
    %v154 = vld [vmem:[#allocation6 + $0x188] sm:$0xff]
    %v155 = vld [vmem:[#allocation6 + $0x190] sm:$0xff]
    %v156 = vld [vmem:[#allocation6 + $0x198] sm:$0xff]
    %v157 = vld [vmem:[#allocation6 + $0x1a0] sm:$0xff]
    %v158 = vld [vmem:[#allocation6 + $0x1a8] sm:$0xff]
    %v159 = vld [vmem:[#allocation6 + $0x1b0] sm:$0xff]
    %v160 = vld [vmem:[#allocation6 + $0x1b8] sm:$0xff]
    %v161 = vld [vmem:[#allocation6 + $0x1c0] sm:$0xff]
    %v162 = vld [vmem:[#allocation6 + $0x1c8] sm:$0xff]
    %v163 = vld [vmem:[#allocation6 + $0x1d0] sm:$0xff]
    %v164 = vld [vmem:[#allocation6 + $0x1d8] sm:$0xff]
    %v165 = vld [vmem:[#allocation6 + $0x1e0] sm:$0xff]
    %v166 = vld [vmem:[#allocation6 + $0x1e8] sm:$0xff]
    %v167 = vld [vmem:[#allocation6 + $0x1f0] sm:$0xff]
    %v168 = vld [vmem:[#allocation6 + $0x1f8] sm:$0xff]
    %v169 = vld [vmem:[#allocation6 + $0x200] sm:$0xff]
    %v170 = vld [vmem:[#allocation6 + $0x208] sm:$0xff]
    %v171 = vld [vmem:[#allocation6 + $0x210] sm:$0xff]
    %v172 = vld [vmem:[#allocation6 + $0x218] sm:$0xff]
    %v173 = vld [vmem:[#allocation6 + $0x220] sm:$0xff]
    %v174 = vld [vmem:[#allocation6 + $0x228] sm:$0xff]
    %v175 = vld [vmem:[#allocation6 + $0x230] sm:$0xff]
    %v176 = vld [vmem:[#allocation6 + $0x238] sm:$0xff]
    %v177 = vld [vmem:[#allocation6 + $0x240] sm:$0xff]
    %v178 = vld [vmem:[#allocation6 + $0x248] sm:$0xff]
    %v179 = vld [vmem:[#allocation6 + $0x250] sm:$0xff]
    %v180 = vld [vmem:[#allocation6 + $0x258] sm:$0xff]
    %v181 = vld [vmem:[#allocation6 + $0x260] sm:$0xff]
    %v182 = vld [vmem:[#allocation6 + $0x268] sm:$0xff]
    %v183 = vld [vmem:[#allocation6 + $0x270] sm:$0xff]
    %v184 = vld [vmem:[#allocation6 + $0x278] sm:$0xff]
    %v185 = vld [vmem:[#allocation6 + $0x280] sm:$0xff]
    %v186 = vld [vmem:[#allocation6 + $0x288] sm:$0xff]
    %v187 = vld [vmem:[#allocation6 + $0x290] sm:$0xff]
    %v188 = vld [vmem:[#allocation6 + $0x298] sm:$0xff]
    %v189 = vld [vmem:[#allocation6 + $0x2a0] sm:$0xff]
    %v190 = vld [vmem:[#allocation6 + $0x2a8] sm:$0xff]
    %v191 = vld [vmem:[#allocation6 + $0x2b0] sm:$0xff]
    %v192 = vld [vmem:[#allocation6 + $0x2b8] sm:$0xff]
    %v193 = vld [vmem:[#allocation6 + $0x2c0] sm:$0xff]
    %v194 = vld [vmem:[#allocation6 + $0x2c8] sm:$0xff]
    %v195 = vld [vmem:[#allocation6 + $0x2d0] sm:$0xff]
    %v196 = vld [vmem:[#allocation6 + $0x2d8] sm:$0xff]
    %v197 = vld [vmem:[#allocation6 + $0x2e0] sm:$0xff]
    %v198 = vld [vmem:[#allocation6 + $0x2e8] sm:$0xff]
    %v199 = vld [vmem:[#allocation6 + $0x2f0] sm:$0xff]
    %v200 = vld [vmem:[#allocation6 + $0x2f8] sm:$0xff]
    %v201 = vld [vmem:[#allocation6 + $0x300] sm:$0xff]
    %v202 = vld [vmem:[#allocation6 + $0x308] sm:$0xff]
    %v203 = vld [vmem:[#allocation6 + $0x310] sm:$0xff]
    %v204 = vld [vmem:[#allocation6 + $0x318] sm:$0xff]
    %v205 = vld [vmem:[#allocation6 + $0x320] sm:$0xff]
    %v206 = vld [vmem:[#allocation6 + $0x328] sm:$0xff]
    %v207 = vld [vmem:[#allocation6 + $0x330] sm:$0xff]
    %v208 = vld [vmem:[#allocation6 + $0x338] sm:$0xff]
    %v209 = vld [vmem:[#allocation6 + $0x340] sm:$0xff]
    %v210 = vld [vmem:[#allocation6 + $0x348] sm:$0xff]
    %v211 = vld [vmem:[#allocation6 + $0x350] sm:$0xff]
    %v212 = vld [vmem:[#allocation6 + $0x358] sm:$0xff]
    %v213 = vld [vmem:[#allocation6 + $0x360] sm:$0xff]
    %v214 = vld [vmem:[#allocation6 + $0x368] sm:$0xff]
    %v215 = vld [vmem:[#allocation6 + $0x370] sm:$0xff]
    %v216 = vld [vmem:[#allocation6 + $0x378] sm:$0xff]
    %v217 = vld [vmem:[#allocation6 + $0x380] sm:$0xff]
    %v218 = vld [vmem:[#allocation6 + $0x388] sm:$0xff]
    %v219 = vld [vmem:[#allocation6 + $0x390] sm:$0xff]
    %v220 = vld [vmem:[#allocation6 + $0x398] sm:$0xff]
    %v221 = vld [vmem:[#allocation6 + $0x3a0] sm:$0xff]
    %v222 = vld [vmem:[#allocation6 + $0x3a8] sm:$0xff]
    %v223 = vld [vmem:[#allocation6 + $0x3b0] sm:$0xff]
    %v224 = vld [vmem:[#allocation6 + $0x3b8] sm:$0xff]
    %v225 = vld [vmem:[#allocation6 + $0x3c0] sm:$0xff]
    %v226 = vld [vmem:[#allocation6 + $0x3c8] sm:$0xff]
    %v227 = vld [vmem:[#allocation6 + $0x3d0] sm:$0xff]
    %v228 = vld [vmem:[#allocation6 + $0x3d8] sm:$0xff]
    %v229 = vld [vmem:[#allocation6 + $0x3e0] sm:$0xff]
    %v230 = vld [vmem:[#allocation6 + $0x3e8] sm:$0xff]
    %v231 = vld [vmem:[#allocation6 + $0x3f0] sm:$0xff]
    %v232 = vld [vmem:[#allocation6 + $0x3f8] sm:$0xff]
    %v233 = vld [vmem:[#allocation8] sm:$0xff]
    %v234 = vld [vmem:[#allocation8 + $0x8] sm:$0xff]
    %v237 = vlaneseq
    %v238 = vshrl.u32 %v237, 7
    %v239 = vsub.s32 0, %v238
    %v240 = vrot.slane %v233, %v239
    %v241 = vlaneseq
    %v242 = vshrl.u32 %v241, 7
    %v243 = vsub.s32 1, %v242
    %v244 = vrot.slane %v233, %v243
    %v245 = vlaneseq
    %v246 = vshrl.u32 %v245, 7
    %v247 = vsub.s32 2, %v246
    %v248 = vrot.slane %v233, %v247
    %v249 = vlaneseq
    %v250 = vshrl.u32 %v249, 7
    %v251 = vsub.s32 3, %v250
    %v252 = vrot.slane %v233, %v251
    %v253 = vlaneseq
    %v254 = vshrl.u32 %v253, 7
    %v255 = vsub.s32 4, %v254
    %v256 = vrot.slane %v233, %v255
    %v257 = vlaneseq
    %v258 = vshrl.u32 %v257, 7
    %v259 = vsub.s32 5, %v258
    %v260 = vrot.slane %v233, %v259
    %v261 = vlaneseq
    %v262 = vshrl.u32 %v261, 7
    %v263 = vsub.s32 6, %v262
    %v264 = vrot.slane %v233, %v263
    %v265 = vlaneseq
    %v266 = vshrl.u32 %v265, 7
    %v267 = vsub.s32 7, %v266
    %v268 = vrot.slane %v233, %v267
    %v269 = vlaneseq
    %v270 = vshrl.u32 %v269, 7
    %v271 = vsub.s32 0, %v270
    %v272 = vrot.slane %v234, %v271
    %v273 = vlaneseq
    %v274 = vshrl.u32 %v273, 7
    %v275 = vsub.s32 1, %v274
    %v276 = vrot.slane %v234, %v275
    %v277 = vlaneseq
    %v278 = vshrl.u32 %v277, 7
    %v279 = vsub.s32 2, %v278
    %v280 = vrot.slane %v234, %v279
    %v281 = vlaneseq
    %v282 = vshrl.u32 %v281, 7
    %v283 = vsub.s32 3, %v282
    %v284 = vrot.slane %v234, %v283
    %v285 = vlaneseq
    %v286 = vshrl.u32 %v285, 7
    %v287 = vsub.s32 4, %v286
    %v288 = vrot.slane %v234, %v287
    %v289 = vlaneseq
    %v290 = vshrl.u32 %v289, 7
    %v291 = vsub.s32 5, %v290
    %v292 = vrot.slane %v234, %v291
    %v293 = vlaneseq
    %v294 = vshrl.u32 %v293, 7
    %v295 = vsub.s32 6, %v294
    %v296 = vrot.slane %v234, %v295
    %v297 = vlaneseq
    %v298 = vshrl.u32 %v297, 7
    %v299 = vsub.s32 7, %v298
    %v300 = vrot.slane %v234, %v299
    %v445 = vunpack.c.l.b16 %v105
    %v446 = vunpack.c.h.b16 %v105
    %v447 = vunpack.c.l.b16 %v106
    %v448 = vunpack.c.h.b16 %v106
    %v449 = vunpack.c.l.b16 %v107
    %v450 = vunpack.c.h.b16 %v107
    %v451 = vunpack.c.l.b16 %v108
    %v452 = vunpack.c.h.b16 %v108
    %v453 = vunpack.c.l.b16 %v109
    %v454 = vunpack.c.h.b16 %v109
    %v455 = vunpack.c.l.b16 %v110
    %v456 = vunpack.c.h.b16 %v110
    %v457 = vunpack.c.l.b16 %v111
    %v458 = vunpack.c.h.b16 %v111
    %v459 = vunpack.c.l.b16 %v112
    %v460 = vunpack.c.h.b16 %v112
    %v461 = vunpack.c.l.b16 %v113
    %v462 = vunpack.c.h.b16 %v113
    %v463 = vunpack.c.l.b16 %v114
    %v464 = vunpack.c.h.b16 %v114
    %v465 = vunpack.c.l.b16 %v115
    %v466 = vunpack.c.h.b16 %v115
    %v467 = vunpack.c.l.b16 %v116
    %v468 = vunpack.c.h.b16 %v116
    %v469 = vunpack.c.l.b16 %v117
    %v470 = vunpack.c.h.b16 %v117
    %v471 = vunpack.c.l.b16 %v118
    %v472 = vunpack.c.h.b16 %v118
    %v473 = vunpack.c.l.b16 %v119
    %v474 = vunpack.c.h.b16 %v119
    %v475 = vunpack.c.l.b16 %v120
    %v476 = vunpack.c.h.b16 %v120
    %v477 = vunpack.c.l.b16 %v121
    %v478 = vunpack.c.h.b16 %v121
    %v479 = vunpack.c.l.b16 %v122
    %v480 = vunpack.c.h.b16 %v122
    %v481 = vunpack.c.l.b16 %v123
    %v482 = vunpack.c.h.b16 %v123
    %v483 = vunpack.c.l.b16 %v124
    %v484 = vunpack.c.h.b16 %v124
    %v485 = vunpack.c.l.b16 %v125
    %v486 = vunpack.c.h.b16 %v125
    %v487 = vunpack.c.l.b16 %v126
    %v488 = vunpack.c.h.b16 %v126
    %v489 = vunpack.c.l.b16 %v127
    %v490 = vunpack.c.h.b16 %v127
    %v491 = vunpack.c.l.b16 %v128
    %v492 = vunpack.c.h.b16 %v128
    %v493 = vunpack.c.l.b16 %v129
    %v494 = vunpack.c.h.b16 %v129
    %v495 = vunpack.c.l.b16 %v130
    %v496 = vunpack.c.h.b16 %v130
    %v497 = vunpack.c.l.b16 %v131
    %v498 = vunpack.c.h.b16 %v131
    %v499 = vunpack.c.l.b16 %v132
    %v500 = vunpack.c.h.b16 %v132
    %v501 = vunpack.c.l.b16 %v133
    %v502 = vunpack.c.h.b16 %v133
    %v503 = vunpack.c.l.b16 %v134
    %v504 = vunpack.c.h.b16 %v134
    %v505 = vunpack.c.l.b16 %v135
    %v506 = vunpack.c.h.b16 %v135
    %v507 = vunpack.c.l.b16 %v136
    %v508 = vunpack.c.h.b16 %v136
    %v509 = vunpack.c.l.b16 %v137
    %v510 = vunpack.c.h.b16 %v137
    %v511 = vunpack.c.l.b16 %v138
    %v512 = vunpack.c.h.b16 %v138
    %v513 = vunpack.c.l.b16 %v139
    %v514 = vunpack.c.h.b16 %v139
    %v515 = vunpack.c.l.b16 %v140
    %v516 = vunpack.c.h.b16 %v140
    %v517 = vunpack.c.l.b16 %v141
    %v518 = vunpack.c.h.b16 %v141
    %v519 = vunpack.c.l.b16 %v142
    %v520 = vunpack.c.h.b16 %v142
    %v521 = vunpack.c.l.b16 %v143
    %v522 = vunpack.c.h.b16 %v143
    %v523 = vunpack.c.l.b16 %v144
    %v524 = vunpack.c.h.b16 %v144
    %v525 = vunpack.c.l.b16 %v145
    %v526 = vunpack.c.h.b16 %v145
    %v527 = vunpack.c.l.b16 %v146
    %v528 = vunpack.c.h.b16 %v146
    %v529 = vunpack.c.l.b16 %v147
    %v530 = vunpack.c.h.b16 %v147
    %v531 = vunpack.c.l.b16 %v148
    %v532 = vunpack.c.h.b16 %v148
    %v533 = vunpack.c.l.b16 %v149
    %v534 = vunpack.c.h.b16 %v149
    %v535 = vunpack.c.l.b16 %v150
    %v536 = vunpack.c.h.b16 %v150
    %v537 = vunpack.c.l.b16 %v151
    %v538 = vunpack.c.h.b16 %v151
    %v539 = vunpack.c.l.b16 %v152
    %v540 = vunpack.c.h.b16 %v152
    %v541 = vunpack.c.l.b16 %v153
    %v542 = vunpack.c.h.b16 %v153
    %v543 = vunpack.c.l.b16 %v154
    %v544 = vunpack.c.h.b16 %v154
    %v545 = vunpack.c.l.b16 %v155
    %v546 = vunpack.c.h.b16 %v155
    %v547 = vunpack.c.l.b16 %v156
    %v548 = vunpack.c.h.b16 %v156
    %v549 = vunpack.c.l.b16 %v157
    %v550 = vunpack.c.h.b16 %v157
    %v551 = vunpack.c.l.b16 %v158
    %v552 = vunpack.c.h.b16 %v158
    %v553 = vunpack.c.l.b16 %v159
    %v554 = vunpack.c.h.b16 %v159
    %v555 = vunpack.c.l.b16 %v160
    %v556 = vunpack.c.h.b16 %v160
    %v557 = vunpack.c.l.b16 %v161
    %v558 = vunpack.c.h.b16 %v161
    %v559 = vunpack.c.l.b16 %v162
    %v560 = vunpack.c.h.b16 %v162
    %v561 = vunpack.c.l.b16 %v163
    %v562 = vunpack.c.h.b16 %v163
    %v563 = vunpack.c.l.b16 %v164
    %v564 = vunpack.c.h.b16 %v164
    %v565 = vunpack.c.l.b16 %v165
    %v566 = vunpack.c.h.b16 %v165
    %v567 = vunpack.c.l.b16 %v166
    %v568 = vunpack.c.h.b16 %v166
    %v569 = vunpack.c.l.b16 %v167
    %v570 = vunpack.c.h.b16 %v167
    %v571 = vunpack.c.l.b16 %v168
    %v572 = vunpack.c.h.b16 %v168
    %v573 = vunpack.c.l.b16 %v169
    %v574 = vunpack.c.h.b16 %v169
    %v575 = vunpack.c.l.b16 %v170
    %v576 = vunpack.c.h.b16 %v170
    %v577 = vunpack.c.l.b16 %v171
    %v578 = vunpack.c.h.b16 %v171
    %v579 = vunpack.c.l.b16 %v172
    %v580 = vunpack.c.h.b16 %v172
    %v581 = vunpack.c.l.b16 %v173
    %v582 = vunpack.c.h.b16 %v173
    %v583 = vunpack.c.l.b16 %v174
    %v584 = vunpack.c.h.b16 %v174
    %v585 = vunpack.c.l.b16 %v175
    %v586 = vunpack.c.h.b16 %v175
    %v587 = vunpack.c.l.b16 %v176
    %v588 = vunpack.c.h.b16 %v176
    %v589 = vunpack.c.l.b16 %v177
    %v590 = vunpack.c.h.b16 %v177
    %v591 = vunpack.c.l.b16 %v178
    %v592 = vunpack.c.h.b16 %v178
    %v593 = vunpack.c.l.b16 %v179
    %v594 = vunpack.c.h.b16 %v179
    %v595 = vunpack.c.l.b16 %v180
    %v596 = vunpack.c.h.b16 %v180
    %v597 = vunpack.c.l.b16 %v181
    %v598 = vunpack.c.h.b16 %v181
    %v599 = vunpack.c.l.b16 %v182
    %v600 = vunpack.c.h.b16 %v182
    %v601 = vunpack.c.l.b16 %v183
    %v602 = vunpack.c.h.b16 %v183
    %v603 = vunpack.c.l.b16 %v184
    %v604 = vunpack.c.h.b16 %v184
    %v605 = vunpack.c.l.b16 %v185
    %v606 = vunpack.c.h.b16 %v185
    %v607 = vunpack.c.l.b16 %v186
    %v608 = vunpack.c.h.b16 %v186
    %v609 = vunpack.c.l.b16 %v187
    %v610 = vunpack.c.h.b16 %v187
    %v611 = vunpack.c.l.b16 %v188
    %v612 = vunpack.c.h.b16 %v188
    %v613 = vunpack.c.l.b16 %v189
    %v614 = vunpack.c.h.b16 %v189
    %v615 = vunpack.c.l.b16 %v190
    %v616 = vunpack.c.h.b16 %v190
    %v617 = vunpack.c.l.b16 %v191
    %v618 = vunpack.c.h.b16 %v191
    %v619 = vunpack.c.l.b16 %v192
    %v620 = vunpack.c.h.b16 %v192
    %v621 = vunpack.c.l.b16 %v193
    %v622 = vunpack.c.h.b16 %v193
    %v623 = vunpack.c.l.b16 %v194
    %v624 = vunpack.c.h.b16 %v194
    %v625 = vunpack.c.l.b16 %v195
    %v626 = vunpack.c.h.b16 %v195
    %v627 = vunpack.c.l.b16 %v196
    %v628 = vunpack.c.h.b16 %v196
    %v629 = vunpack.c.l.b16 %v197
    %v630 = vunpack.c.h.b16 %v197
    %v631 = vunpack.c.l.b16 %v198
    %v632 = vunpack.c.h.b16 %v198
    %v633 = vunpack.c.l.b16 %v199
    %v634 = vunpack.c.h.b16 %v199
    %v635 = vunpack.c.l.b16 %v200
    %v636 = vunpack.c.h.b16 %v200
    %v637 = vunpack.c.l.b16 %v201
    %v638 = vunpack.c.h.b16 %v201
    %v639 = vunpack.c.l.b16 %v202
    %v640 = vunpack.c.h.b16 %v202
    %v641 = vunpack.c.l.b16 %v203
    %v642 = vunpack.c.h.b16 %v203
    %v643 = vunpack.c.l.b16 %v204
    %v644 = vunpack.c.h.b16 %v204
    %v645 = vunpack.c.l.b16 %v205
    %v646 = vunpack.c.h.b16 %v205
    %v647 = vunpack.c.l.b16 %v206
    %v648 = vunpack.c.h.b16 %v206
    %v649 = vunpack.c.l.b16 %v207
    %v650 = vunpack.c.h.b16 %v207
    %v651 = vunpack.c.l.b16 %v208
    %v652 = vunpack.c.h.b16 %v208
    %v653 = vunpack.c.l.b16 %v209
    %v654 = vunpack.c.h.b16 %v209
    %v655 = vunpack.c.l.b16 %v210
    %v656 = vunpack.c.h.b16 %v210
    %v657 = vunpack.c.l.b16 %v211
    %v658 = vunpack.c.h.b16 %v211
    %v659 = vunpack.c.l.b16 %v212
    %v660 = vunpack.c.h.b16 %v212
    %v661 = vunpack.c.l.b16 %v213
    %v662 = vunpack.c.h.b16 %v213
    %v663 = vunpack.c.l.b16 %v214
    %v664 = vunpack.c.h.b16 %v214
    %v665 = vunpack.c.l.b16 %v215
    %v666 = vunpack.c.h.b16 %v215
    %v667 = vunpack.c.l.b16 %v216
    %v668 = vunpack.c.h.b16 %v216
    %v669 = vunpack.c.l.b16 %v217
    %v670 = vunpack.c.h.b16 %v217
    %v671 = vunpack.c.l.b16 %v218
    %v672 = vunpack.c.h.b16 %v218
    %v673 = vunpack.c.l.b16 %v219
    %v674 = vunpack.c.h.b16 %v219
    %v675 = vunpack.c.l.b16 %v220
    %v676 = vunpack.c.h.b16 %v220
    %v677 = vunpack.c.l.b16 %v221
    %v678 = vunpack.c.h.b16 %v221
    %v679 = vunpack.c.l.b16 %v222
    %v680 = vunpack.c.h.b16 %v222
    %v681 = vunpack.c.l.b16 %v223
    %v682 = vunpack.c.h.b16 %v223
    %v683 = vunpack.c.l.b16 %v224
    %v684 = vunpack.c.h.b16 %v224
    %v685 = vunpack.c.l.b16 %v225
    %v686 = vunpack.c.h.b16 %v225
    %v687 = vunpack.c.l.b16 %v226
    %v688 = vunpack.c.h.b16 %v226
    %v689 = vunpack.c.l.b16 %v227
    %v690 = vunpack.c.h.b16 %v227
    %v691 = vunpack.c.l.b16 %v228
    %v692 = vunpack.c.h.b16 %v228
    %v693 = vunpack.c.l.b16 %v229
    %v694 = vunpack.c.h.b16 %v229
    %v695 = vunpack.c.l.b16 %v230
    %v696 = vunpack.c.h.b16 %v230
    %v697 = vunpack.c.l.b16 %v231
    %v698 = vunpack.c.h.b16 %v231
    %v699 = vunpack.c.l.b16 %v232
    %v700 = vunpack.c.h.b16 %v232
    %v701 = vpack.c.b16 %v461, %v445
    %v702 = vpack.c.b16 %v462, %v446
    %v703 = vpack.c.b16 %v463, %v447
    %v704 = vpack.c.b16 %v464, %v448
    %v705 = vpack.c.b16 %v465, %v449
    %v706 = vpack.c.b16 %v466, %v450
    %v707 = vpack.c.b16 %v467, %v451
    %v708 = vpack.c.b16 %v468, %v452
    %v709 = vpack.c.b16 %v469, %v453
    %v710 = vpack.c.b16 %v470, %v454
    %v711 = vpack.c.b16 %v471, %v455
    %v712 = vpack.c.b16 %v472, %v456
    %v713 = vpack.c.b16 %v473, %v457
    %v714 = vpack.c.b16 %v474, %v458
    %v715 = vpack.c.b16 %v475, %v459
    %v716 = vpack.c.b16 %v476, %v460
    %v717 = vpack.c.b16 %v493, %v477
    %v718 = vpack.c.b16 %v494, %v478
    %v719 = vpack.c.b16 %v495, %v479
    %v720 = vpack.c.b16 %v496, %v480
    %v721 = vpack.c.b16 %v497, %v481
    %v722 = vpack.c.b16 %v498, %v482
    %v723 = vpack.c.b16 %v499, %v483
    %v724 = vpack.c.b16 %v500, %v484
    %v725 = vpack.c.b16 %v501, %v485
    %v726 = vpack.c.b16 %v502, %v486
    %v727 = vpack.c.b16 %v503, %v487
    %v728 = vpack.c.b16 %v504, %v488
    %v729 = vpack.c.b16 %v505, %v489
    %v730 = vpack.c.b16 %v506, %v490
    %v731 = vpack.c.b16 %v507, %v491
    %v732 = vpack.c.b16 %v508, %v492
    %v733 = vpack.c.b16 %v525, %v509
    %v734 = vpack.c.b16 %v526, %v510
    %v735 = vpack.c.b16 %v527, %v511
    %v736 = vpack.c.b16 %v528, %v512
    %v737 = vpack.c.b16 %v529, %v513
    %v738 = vpack.c.b16 %v530, %v514
    %v739 = vpack.c.b16 %v531, %v515
    %v740 = vpack.c.b16 %v532, %v516
    %v741 = vpack.c.b16 %v533, %v517
    %v742 = vpack.c.b16 %v534, %v518
    %v743 = vpack.c.b16 %v535, %v519
    %v744 = vpack.c.b16 %v536, %v520
    %v745 = vpack.c.b16 %v537, %v521
    %v746 = vpack.c.b16 %v538, %v522
    %v747 = vpack.c.b16 %v539, %v523
    %v748 = vpack.c.b16 %v540, %v524
    %v749 = vpack.c.b16 %v557, %v541
    %v750 = vpack.c.b16 %v558, %v542
    %v751 = vpack.c.b16 %v559, %v543
    %v752 = vpack.c.b16 %v560, %v544
    %v753 = vpack.c.b16 %v561, %v545
    %v754 = vpack.c.b16 %v562, %v546
    %v755 = vpack.c.b16 %v563, %v547
    %v756 = vpack.c.b16 %v564, %v548
    %v757 = vpack.c.b16 %v565, %v549
    %v758 = vpack.c.b16 %v566, %v550
    %v759 = vpack.c.b16 %v567, %v551
    %v760 = vpack.c.b16 %v568, %v552
    %v761 = vpack.c.b16 %v569, %v553
    %v762 = vpack.c.b16 %v570, %v554
    %v763 = vpack.c.b16 %v571, %v555
    %v764 = vpack.c.b16 %v572, %v556
    %v765 = vpack.c.b16 %v589, %v573
    %v766 = vpack.c.b16 %v590, %v574
    %v767 = vpack.c.b16 %v591, %v575
    %v768 = vpack.c.b16 %v592, %v576
    %v769 = vpack.c.b16 %v593, %v577
    %v770 = vpack.c.b16 %v594, %v578
    %v771 = vpack.c.b16 %v595, %v579
    %v772 = vpack.c.b16 %v596, %v580
    %v773 = vpack.c.b16 %v597, %v581
    %v774 = vpack.c.b16 %v598, %v582
    %v775 = vpack.c.b16 %v599, %v583
    %v776 = vpack.c.b16 %v600, %v584
    %v777 = vpack.c.b16 %v601, %v585
    %v778 = vpack.c.b16 %v602, %v586
    %v779 = vpack.c.b16 %v603, %v587
    %v780 = vpack.c.b16 %v604, %v588
    %v781 = vpack.c.b16 %v621, %v605
    %v782 = vpack.c.b16 %v622, %v606
    %v783 = vpack.c.b16 %v623, %v607
    %v784 = vpack.c.b16 %v624, %v608
    %v785 = vpack.c.b16 %v625, %v609
    %v786 = vpack.c.b16 %v626, %v610
    %v787 = vpack.c.b16 %v627, %v611
    %v788 = vpack.c.b16 %v628, %v612
    %v789 = vpack.c.b16 %v629, %v613
    %v790 = vpack.c.b16 %v630, %v614
    %v791 = vpack.c.b16 %v631, %v615
    %v792 = vpack.c.b16 %v632, %v616
    %v793 = vpack.c.b16 %v633, %v617
    %v794 = vpack.c.b16 %v634, %v618
    %v795 = vpack.c.b16 %v635, %v619
    %v796 = vpack.c.b16 %v636, %v620
    %v797 = vpack.c.b16 %v653, %v637
    %v798 = vpack.c.b16 %v654, %v638
    %v799 = vpack.c.b16 %v655, %v639
    %v800 = vpack.c.b16 %v656, %v640
    %v801 = vpack.c.b16 %v657, %v641
    %v802 = vpack.c.b16 %v658, %v642
    %v803 = vpack.c.b16 %v659, %v643
    %v804 = vpack.c.b16 %v660, %v644
    %v805 = vpack.c.b16 %v661, %v645
    %v806 = vpack.c.b16 %v662, %v646
    %v807 = vpack.c.b16 %v663, %v647
    %v808 = vpack.c.b16 %v664, %v648
    %v809 = vpack.c.b16 %v665, %v649
    %v810 = vpack.c.b16 %v666, %v650
    %v811 = vpack.c.b16 %v667, %v651
    %v812 = vpack.c.b16 %v668, %v652
    %v813 = vpack.c.b16 %v685, %v669
    %v814 = vpack.c.b16 %v686, %v670
    %v815 = vpack.c.b16 %v687, %v671
    %v816 = vpack.c.b16 %v688, %v672
    %v817 = vpack.c.b16 %v689, %v673
    %v818 = vpack.c.b16 %v690, %v674
    %v819 = vpack.c.b16 %v691, %v675
    %v820 = vpack.c.b16 %v692, %v676
    %v821 = vpack.c.b16 %v693, %v677
    %v822 = vpack.c.b16 %v694, %v678
    %v823 = vpack.c.b16 %v695, %v679
    %v824 = vpack.c.b16 %v696, %v680
    %v825 = vpack.c.b16 %v697, %v681
    %v826 = vpack.c.b16 %v698, %v682
    %v827 = vpack.c.b16 %v699, %v683
    %v828 = vpack.c.b16 %v700, %v684
    %957 = vmatprep.subr.bf16.mxu0 %v814
    %958 = vmatpush1.bf16.msra.mxu0 %v813
    %959 = vmatprep.subr.bf16.mxu0 %v798
    %960 = vmatpush1.bf16.msra.mxu0 %v797
    %961 = vmatprep.subr.bf16.mxu0 %v782
    %962 = vmatpush1.bf16.msra.mxu0 %v781
    %963 = vmatprep.subr.bf16.mxu0 %v766
    %964 = vmatpush1.bf16.msra.mxu0 %v765
    %965 = vmatprep.subr.bf16.mxu0 %v750
    %966 = vmatpush1.bf16.msra.mxu0 %v749
    %967 = vmatprep.subr.bf16.mxu0 %v734
    %968 = vmatpush1.bf16.msra.mxu0 %v733
    %969 = vmatprep.subr.bf16.mxu0 %v718
    %970 = vmatpush1.bf16.msra.mxu0 %v717
    %971 = vmatprep.subr.bf16.mxu0 %v702
    %972 = vmatpush1.bf16.msra.mxu0 %v701
    %973 = vmatprep.subr.bf16.mxu0 0
    %974 = vmatpush2.bf16.msra.mxu0 0
    %975 = vmatprep.subr.bf16.mxu0 0
    %976 = vmatpush2.bf16.msra.mxu0 0
    %977 = vmatprep.subr.bf16.mxu0 0
    %978 = vmatpush2.bf16.msra.mxu0 0
    %979 = vmatprep.subr.bf16.mxu0 0
    %980 = vmatpush2.bf16.msra.mxu0 0
    %981 = vmatprep.subr.bf16.mxu0 0
    %982 = vmatpush2.bf16.msra.mxu0 0
    %983 = vmatprep.subr.bf16.mxu0 0
    %984 = vmatpush2.bf16.msra.mxu0 0
    %985 = vmatprep.subr.bf16.mxu0 0
    %986 = vmatpush2.bf16.msra.mxu0 0
    %987 = vmatprep.subr.bf16.mxu0 0
    %988 = vmatpush2.bf16.msra.mxu0 0
    %989 = vmatprep.mubr.bf16.mxu0 0
    %990 = vmatmul.mubr.bf16.gmra.mxu0 %v104
    %v991 = vpop.f32.mrf.mxu0
    %v992 = vadd.f32 %v240, %v991
    %v993 = vpop.f32.mrf.mxu0
    %v994 = vadd.f32 %v244, %v993
    %v995 = vpop.f32.mrf.mxu0
    %v996 = vpop.f32.mrf.mxu0
    %997 = vdwg.mxu0
    %998 = vmatprep.subr.bf16.mxu0 %v816
    %999 = vmatpush1.bf16.msra.mxu0 %v815
    %1000 = vmatprep.subr.bf16.mxu0 %v800
    %1001 = vmatpush1.bf16.msra.mxu0 %v799
    %1002 = vmatprep.subr.bf16.mxu0 %v784
    %1003 = vmatpush1.bf16.msra.mxu0 %v783
    %1004 = vmatprep.subr.bf16.mxu0 %v768
    %1005 = vmatpush1.bf16.msra.mxu0 %v767
    %1006 = vmatprep.subr.bf16.mxu0 %v752
    %1007 = vmatpush1.bf16.msra.mxu0 %v751
    %1008 = vmatprep.subr.bf16.mxu0 %v736
    %1009 = vmatpush1.bf16.msra.mxu0 %v735
    %1010 = vmatprep.subr.bf16.mxu0 %v720
    %1011 = vmatpush1.bf16.msra.mxu0 %v719
    %1012 = vmatprep.subr.bf16.mxu0 %v704
    %1013 = vmatpush1.bf16.msra.mxu0 %v703
    %1014 = vmatprep.subr.bf16.mxu0 0
    %1015 = vmatpush2.bf16.msra.mxu0 0
    %1016 = vmatprep.subr.bf16.mxu0 0
    %1017 = vmatpush2.bf16.msra.mxu0 0
    %1018 = vmatprep.subr.bf16.mxu0 0
    %1019 = vmatpush2.bf16.msra.mxu0 0
    %1020 = vmatprep.subr.bf16.mxu0 0
    %1021 = vmatpush2.bf16.msra.mxu0 0
    %1022 = vmatprep.subr.bf16.mxu0 0
    %1023 = vmatpush2.bf16.msra.mxu0 0
    %1024 = vmatprep.subr.bf16.mxu0 0
    %1025 = vmatpush2.bf16.msra.mxu0 0
    %1026 = vmatprep.subr.bf16.mxu0 0
    %1027 = vmatpush2.bf16.msra.mxu0 0
    %1028 = vmatprep.subr.bf16.mxu0 0
    %1029 = vmatpush2.bf16.msra.mxu0 0
    %1030 = vmatprep.mubr.bf16.mxu0 0
    %1031 = vmatmul.mubr.bf16.gmra.mxu0 %v104
    %v1032 = vpop.f32.mrf.mxu0
    %v1033 = vadd.f32 %v248, %v1032
    %v1034 = vpop.f32.mrf.mxu0
    %v1035 = vadd.f32 %v252, %v1034
    %v1036 = vpop.f32.mrf.mxu0
    %v1037 = vpop.f32.mrf.mxu0
    %1038 = vdwg.mxu0
    %1039 = vmatprep.subr.bf16.mxu0 %v818
    %1040 = vmatpush1.bf16.msra.mxu0 %v817
    %1041 = vmatprep.subr.bf16.mxu0 %v802
    %1042 = vmatpush1.bf16.msra.mxu0 %v801
    %1043 = vmatprep.subr.bf16.mxu0 %v786
    %1044 = vmatpush1.bf16.msra.mxu0 %v785
    %1045 = vmatprep.subr.bf16.mxu0 %v770
    %1046 = vmatpush1.bf16.msra.mxu0 %v769
    %1047 = vmatprep.subr.bf16.mxu0 %v754
    %1048 = vmatpush1.bf16.msra.mxu0 %v753
    %1049 = vmatprep.subr.bf16.mxu0 %v738
    %1050 = vmatpush1.bf16.msra.mxu0 %v737
    %1051 = vmatprep.subr.bf16.mxu0 %v722
    %1052 = vmatpush1.bf16.msra.mxu0 %v721
    %1053 = vmatprep.subr.bf16.mxu0 %v706
    %1054 = vmatpush1.bf16.msra.mxu0 %v705
    %1055 = vmatprep.subr.bf16.mxu0 0
    %1056 = vmatpush2.bf16.msra.mxu0 0
    %1057 = vmatprep.subr.bf16.mxu0 0
    %1058 = vmatpush2.bf16.msra.mxu0 0
    %1059 = vmatprep.subr.bf16.mxu0 0
    %1060 = vmatpush2.bf16.msra.mxu0 0
    %1061 = vmatprep.subr.bf16.mxu0 0
    %1062 = vmatpush2.bf16.msra.mxu0 0
    %1063 = vmatprep.subr.bf16.mxu0 0
    %1064 = vmatpush2.bf16.msra.mxu0 0
    %1065 = vmatprep.subr.bf16.mxu0 0
    %1066 = vmatpush2.bf16.msra.mxu0 0
    %1067 = vmatprep.subr.bf16.mxu0 0
    %1068 = vmatpush2.bf16.msra.mxu0 0
    %1069 = vmatprep.subr.bf16.mxu0 0
    %1070 = vmatpush2.bf16.msra.mxu0 0
    %1071 = vmatprep.mubr.bf16.mxu0 0
    %1072 = vmatmul.mubr.bf16.gmra.mxu0 %v104
    %v1073 = vpop.f32.mrf.mxu0
    %v1074 = vadd.f32 %v256, %v1073
    %v1075 = vpop.f32.mrf.mxu0
    %v1076 = vadd.f32 %v260, %v1075
    %v1077 = vpop.f32.mrf.mxu0
    %v1078 = vpop.f32.mrf.mxu0
    %1079 = vdwg.mxu0
    %1080 = vmatprep.subr.bf16.mxu0 %v820
    %1081 = vmatpush1.bf16.msra.mxu0 %v819
    %1082 = vmatprep.subr.bf16.mxu0 %v804
    %1083 = vmatpush1.bf16.msra.mxu0 %v803
    %1084 = vmatprep.subr.bf16.mxu0 %v788
    %1085 = vmatpush1.bf16.msra.mxu0 %v787
    %1086 = vmatprep.subr.bf16.mxu0 %v772
    %1087 = vmatpush1.bf16.msra.mxu0 %v771
    %1088 = vmatprep.subr.bf16.mxu0 %v756
    %1089 = vmatpush1.bf16.msra.mxu0 %v755
    %1090 = vmatprep.subr.bf16.mxu0 %v740
    %1091 = vmatpush1.bf16.msra.mxu0 %v739
    %1092 = vmatprep.subr.bf16.mxu0 %v724
    %1093 = vmatpush1.bf16.msra.mxu0 %v723
    %1094 = vmatprep.subr.bf16.mxu0 %v708
    %1095 = vmatpush1.bf16.msra.mxu0 %v707
    %1096 = vmatprep.subr.bf16.mxu0 0
    %1097 = vmatpush2.bf16.msra.mxu0 0
    %1098 = vmatprep.subr.bf16.mxu0 0
    %1099 = vmatpush2.bf16.msra.mxu0 0
    %1100 = vmatprep.subr.bf16.mxu0 0
    %1101 = vmatpush2.bf16.msra.mxu0 0
    %1102 = vmatprep.subr.bf16.mxu0 0
    %1103 = vmatpush2.bf16.msra.mxu0 0
    %1104 = vmatprep.subr.bf16.mxu0 0
    %1105 = vmatpush2.bf16.msra.mxu0 0
    %1106 = vmatprep.subr.bf16.mxu0 0
    %1107 = vmatpush2.bf16.msra.mxu0 0
    %1108 = vmatprep.subr.bf16.mxu0 0
    %1109 = vmatpush2.bf16.msra.mxu0 0
    %1110 = vmatprep.subr.bf16.mxu0 0
    %1111 = vmatpush2.bf16.msra.mxu0 0
    %1112 = vmatprep.mubr.bf16.mxu0 0
    %1113 = vmatmul.mubr.bf16.gmra.mxu0 %v104
    %v1114 = vpop.f32.mrf.mxu0
    %v1115 = vadd.f32 %v264, %v1114
    %v1116 = vpop.f32.mrf.mxu0
    %v1117 = vadd.f32 %v268, %v1116
    %v1118 = vpop.f32.mrf.mxu0
    %v1119 = vpop.f32.mrf.mxu0
    %1120 = vdwg.mxu0
    %1121 = vmatprep.subr.bf16.mxu0 %v822
    %1122 = vmatpush1.bf16.msra.mxu0 %v821
    %1123 = vmatprep.subr.bf16.mxu0 %v806
    %1124 = vmatpush1.bf16.msra.mxu0 %v805
    %1125 = vmatprep.subr.bf16.mxu0 %v790
    %1126 = vmatpush1.bf16.msra.mxu0 %v789
    %1127 = vmatprep.subr.bf16.mxu0 %v774
    %1128 = vmatpush1.bf16.msra.mxu0 %v773
    %1129 = vmatprep.subr.bf16.mxu0 %v758
    %1130 = vmatpush1.bf16.msra.mxu0 %v757
    %1131 = vmatprep.subr.bf16.mxu0 %v742
    %1132 = vmatpush1.bf16.msra.mxu0 %v741
    %1133 = vmatprep.subr.bf16.mxu0 %v726
    %1134 = vmatpush1.bf16.msra.mxu0 %v725
    %1135 = vmatprep.subr.bf16.mxu0 %v710
    %1136 = vmatpush1.bf16.msra.mxu0 %v709
    %1137 = vmatprep.subr.bf16.mxu0 0
    %1138 = vmatpush2.bf16.msra.mxu0 0
    %1139 = vmatprep.subr.bf16.mxu0 0
    %1140 = vmatpush2.bf16.msra.mxu0 0
    %1141 = vmatprep.subr.bf16.mxu0 0
    %1142 = vmatpush2.bf16.msra.mxu0 0
    %1143 = vmatprep.subr.bf16.mxu0 0
    %1144 = vmatpush2.bf16.msra.mxu0 0
    %1145 = vmatprep.subr.bf16.mxu0 0
    %1146 = vmatpush2.bf16.msra.mxu0 0
    %1147 = vmatprep.subr.bf16.mxu0 0
    %1148 = vmatpush2.bf16.msra.mxu0 0
    %1149 = vmatprep.subr.bf16.mxu0 0
    %1150 = vmatpush2.bf16.msra.mxu0 0
    %1151 = vmatprep.subr.bf16.mxu0 0
    %1152 = vmatpush2.bf16.msra.mxu0 0
    %1153 = vmatprep.mubr.bf16.mxu0 0
    %1154 = vmatmul.mubr.bf16.gmra.mxu0 %v104
    %v1155 = vpop.f32.mrf.mxu0
    %v1156 = vadd.f32 %v272, %v1155
    %v1157 = vpop.f32.mrf.mxu0
    %v1158 = vadd.f32 %v276, %v1157
    %v1159 = vpop.f32.mrf.mxu0
    %v1160 = vpop.f32.mrf.mxu0
    %1161 = vdwg.mxu0
    %1162 = vmatprep.subr.bf16.mxu0 %v824
    %1163 = vmatpush1.bf16.msra.mxu0 %v823
    %1164 = vmatprep.subr.bf16.mxu0 %v808
    %1165 = vmatpush1.bf16.msra.mxu0 %v807
    %1166 = vmatprep.subr.bf16.mxu0 %v792
    %1167 = vmatpush1.bf16.msra.mxu0 %v791
    %1168 = vmatprep.subr.bf16.mxu0 %v776
    %1169 = vmatpush1.bf16.msra.mxu0 %v775
    %1170 = vmatprep.subr.bf16.mxu0 %v760
    %1171 = vmatpush1.bf16.msra.mxu0 %v759
    %1172 = vmatprep.subr.bf16.mxu0 %v744
    %1173 = vmatpush1.bf16.msra.mxu0 %v743
    %1174 = vmatprep.subr.bf16.mxu0 %v728
    %1175 = vmatpush1.bf16.msra.mxu0 %v727
    %1176 = vmatprep.subr.bf16.mxu0 %v712
    %1177 = vmatpush1.bf16.msra.mxu0 %v711
    %1178 = vmatprep.subr.bf16.mxu0 0
    %1179 = vmatpush2.bf16.msra.mxu0 0
    %1180 = vmatprep.subr.bf16.mxu0 0
    %1181 = vmatpush2.bf16.msra.mxu0 0
    %1182 = vmatprep.subr.bf16.mxu0 0
    %1183 = vmatpush2.bf16.msra.mxu0 0
    %1184 = vmatprep.subr.bf16.mxu0 0
    %1185 = vmatpush2.bf16.msra.mxu0 0
    %1186 = vmatprep.subr.bf16.mxu0 0
    %1187 = vmatpush2.bf16.msra.mxu0 0
    %1188 = vmatprep.subr.bf16.mxu0 0
    %1189 = vmatpush2.bf16.msra.mxu0 0
    %1190 = vmatprep.subr.bf16.mxu0 0
    %1191 = vmatpush2.bf16.msra.mxu0 0
    %1192 = vmatprep.subr.bf16.mxu0 0
    %1193 = vmatpush2.bf16.msra.mxu0 0
    %1194 = vmatprep.mubr.bf16.mxu0 0
    %1195 = vmatmul.mubr.bf16.gmra.mxu0 %v104
    %v1196 = vpop.f32.mrf.mxu0
    %v1197 = vadd.f32 %v280, %v1196
    %v1198 = vpop.f32.mrf.mxu0
    %v1199 = vadd.f32 %v284, %v1198
    %v1200 = vpop.f32.mrf.mxu0
    %v1201 = vpop.f32.mrf.mxu0
    %1202 = vdwg.mxu0
    %1203 = vmatprep.subr.bf16.mxu0 %v826
    %1204 = vmatpush1.bf16.msra.mxu0 %v825
    %1205 = vmatprep.subr.bf16.mxu0 %v810
    %1206 = vmatpush1.bf16.msra.mxu0 %v809
    %1207 = vmatprep.subr.bf16.mxu0 %v794
    %1208 = vmatpush1.bf16.msra.mxu0 %v793
    %1209 = vmatprep.subr.bf16.mxu0 %v778
    %1210 = vmatpush1.bf16.msra.mxu0 %v777
    %1211 = vmatprep.subr.bf16.mxu0 %v762
    %1212 = vmatpush1.bf16.msra.mxu0 %v761
    %1213 = vmatprep.subr.bf16.mxu0 %v746
    %1214 = vmatpush1.bf16.msra.mxu0 %v745
    %1215 = vmatprep.subr.bf16.mxu0 %v730
    %1216 = vmatpush1.bf16.msra.mxu0 %v729
    %1217 = vmatprep.subr.bf16.mxu0 %v714
    %1218 = vmatpush1.bf16.msra.mxu0 %v713
    %1219 = vmatprep.subr.bf16.mxu0 0
    %1220 = vmatpush2.bf16.msra.mxu0 0
    %1221 = vmatprep.subr.bf16.mxu0 0
    %1222 = vmatpush2.bf16.msra.mxu0 0
    %1223 = vmatprep.subr.bf16.mxu0 0
    %1224 = vmatpush2.bf16.msra.mxu0 0
    %1225 = vmatprep.subr.bf16.mxu0 0
    %1226 = vmatpush2.bf16.msra.mxu0 0
    %1227 = vmatprep.subr.bf16.mxu0 0
    %1228 = vmatpush2.bf16.msra.mxu0 0
    %1229 = vmatprep.subr.bf16.mxu0 0
    %1230 = vmatpush2.bf16.msra.mxu0 0
    %1231 = vmatprep.subr.bf16.mxu0 0
    %1232 = vmatpush2.bf16.msra.mxu0 0
    %1233 = vmatprep.subr.bf16.mxu0 0
    %1234 = vmatpush2.bf16.msra.mxu0 0
    %1235 = vmatprep.mubr.bf16.mxu0 0
    %1236 = vmatmul.mubr.bf16.gmra.mxu0 %v104
    %v1237 = vpop.f32.mrf.mxu0
    %v1238 = vadd.f32 %v288, %v1237
    %v1239 = vpop.f32.mrf.mxu0
    %v1240 = vadd.f32 %v292, %v1239
    %v1241 = vpop.f32.mrf.mxu0
    %v1242 = vpop.f32.mrf.mxu0
    %1243 = vdwg.mxu0
    %1244 = vmatprep.subr.bf16.mxu0 %v828
    %1245 = vmatpush1.bf16.msra.mxu0 %v827
    %1246 = vmatprep.subr.bf16.mxu0 %v812
    %1247 = vmatpush1.bf16.msra.mxu0 %v811
    %1248 = vmatprep.subr.bf16.mxu0 %v796
    %1249 = vmatpush1.bf16.msra.mxu0 %v795
    %1250 = vmatprep.subr.bf16.mxu0 %v780
    %1251 = vmatpush1.bf16.msra.mxu0 %v779
    %1252 = vmatprep.subr.bf16.mxu0 %v764
    %1253 = vmatpush1.bf16.msra.mxu0 %v763
    %1254 = vmatprep.subr.bf16.mxu0 %v748
    %1255 = vmatpush1.bf16.msra.mxu0 %v747
    %1256 = vmatprep.subr.bf16.mxu0 %v732
    %1257 = vmatpush1.bf16.msra.mxu0 %v731
    %1258 = vmatprep.subr.bf16.mxu0 %v716
    %1259 = vmatpush1.bf16.msra.mxu0 %v715
    %1260 = vmatprep.subr.bf16.mxu0 0
    %1261 = vmatpush2.bf16.msra.mxu0 0
    %1262 = vmatprep.subr.bf16.mxu0 0
    %1263 = vmatpush2.bf16.msra.mxu0 0
    %1264 = vmatprep.subr.bf16.mxu0 0
    %1265 = vmatpush2.bf16.msra.mxu0 0
    %1266 = vmatprep.subr.bf16.mxu0 0
    %1267 = vmatpush2.bf16.msra.mxu0 0
    %1268 = vmatprep.subr.bf16.mxu0 0
    %1269 = vmatpush2.bf16.msra.mxu0 0
    %1270 = vmatprep.subr.bf16.mxu0 0
    %1271 = vmatpush2.bf16.msra.mxu0 0
    %1272 = vmatprep.subr.bf16.mxu0 0
    %1273 = vmatpush2.bf16.msra.mxu0 0
    %1274 = vmatprep.subr.bf16.mxu0 0
    %1275 = vmatpush2.bf16.msra.mxu0 0
    %1276 = vmatprep.mubr.bf16.mxu0 0
    %1277 = vmatmul.mubr.bf16.gmra.mxu0 %v104
    %v1278 = vpop.f32.mrf.mxu0
    %v1279 = vadd.f32 %v296, %v1278
    %v1280 = vpop.f32.mrf.mxu0
    %v1281 = vadd.f32 %v300, %v1280
    %v1282 = vpop.f32.mrf.mxu0
    %v1283 = vpop.f32.mrf.mxu0
    %1284 = vdwg.mxu0
    %v1285 = vld [vmem:[%s3] sm:$0x1]
    %v1286 = vld [vmem:[%s4] sm:$0x1]
    %vm1287 = vcmask 1041408
    %v1288 = vsel %vm1287, %v992, 0.0
    %v1289 = vrot.slane %v1288, 4
    %v1290 = vadd.f32 %v1288, %v1289
    %v1291 = vrot.slane %v1290, 2
    %v1292 = vadd.f32 %v1290, %v1291
    %v1293 = vrot.slane %v1292, 1
    %v1294 = vadd.f32 %v1292, %v1293
    %v1295 = vsel %vm1287, %v994, 0.0
    %v1296 = vrot.slane %v1295, 4
    %v1297 = vadd.f32 %v1295, %v1296
    %v1298 = vrot.slane %v1297, 2
    %v1299 = vadd.f32 %v1297, %v1298
    %v1300 = vrot.slane %v1299, 1
    %v1301 = vadd.f32 %v1299, %v1300
    %v1302 = vsel %vm1287, %v1033, 0.0
    %v1303 = vrot.slane %v1302, 4
    %v1304 = vadd.f32 %v1302, %v1303
    %v1305 = vrot.slane %v1304, 2
    %v1306 = vadd.f32 %v1304, %v1305
    %v1307 = vrot.slane %v1306, 1
    %v1308 = vadd.f32 %v1306, %v1307
    %v1309 = vsel %vm1287, %v1035, 0.0
    %v1310 = vrot.slane %v1309, 4
    %v1311 = vadd.f32 %v1309, %v1310
    %v1312 = vrot.slane %v1311, 2
    %v1313 = vadd.f32 %v1311, %v1312
    %v1314 = vrot.slane %v1313, 1
    %v1315 = vadd.f32 %v1313, %v1314
    %v1316 = vsel %vm1287, %v1074, 0.0
    %v1317 = vrot.slane %v1316, 4
    %v1318 = vadd.f32 %v1316, %v1317
    %v1319 = vrot.slane %v1318, 2
    %v1320 = vadd.f32 %v1318, %v1319
    %v1321 = vrot.slane %v1320, 1
    %v1322 = vadd.f32 %v1320, %v1321
    %v1323 = vsel %vm1287, %v1076, 0.0
    %v1324 = vrot.slane %v1323, 4
    %v1325 = vadd.f32 %v1323, %v1324
    %v1326 = vrot.slane %v1325, 2
    %v1327 = vadd.f32 %v1325, %v1326
    %v1328 = vrot.slane %v1327, 1
    %v1329 = vadd.f32 %v1327, %v1328
    %v1330 = vsel %vm1287, %v1115, 0.0
    %v1331 = vrot.slane %v1330, 4
    %v1332 = vadd.f32 %v1330, %v1331
    %v1333 = vrot.slane %v1332, 2
    %v1334 = vadd.f32 %v1332, %v1333
    %v1335 = vrot.slane %v1334, 1
    %v1336 = vadd.f32 %v1334, %v1335
    %v1337 = vsel %vm1287, %v1117, 0.0
    %v1338 = vrot.slane %v1337, 4
    %v1339 = vadd.f32 %v1337, %v1338
    %v1340 = vrot.slane %v1339, 2
    %v1341 = vadd.f32 %v1339, %v1340
    %v1342 = vrot.slane %v1341, 1
    %v1343 = vadd.f32 %v1341, %v1342
    %v1344 = vsel %vm1287, %v1156, 0.0
    %v1345 = vrot.slane %v1344, 4
    %v1346 = vadd.f32 %v1344, %v1345
    %v1347 = vrot.slane %v1346, 2
    %v1348 = vadd.f32 %v1346, %v1347
    %v1349 = vrot.slane %v1348, 1
    %v1350 = vadd.f32 %v1348, %v1349
    %v1351 = vsel %vm1287, %v1158, 0.0
    %v1352 = vrot.slane %v1351, 4
    %v1353 = vadd.f32 %v1351, %v1352
    %v1354 = vrot.slane %v1353, 2
    %v1355 = vadd.f32 %v1353, %v1354
    %v1356 = vrot.slane %v1355, 1
    %v1357 = vadd.f32 %v1355, %v1356
    %v1358 = vsel %vm1287, %v1197, 0.0
    %v1359 = vrot.slane %v1358, 4
    %v1360 = vadd.f32 %v1358, %v1359
    %v1361 = vrot.slane %v1360, 2
    %v1362 = vadd.f32 %v1360, %v1361
    %v1363 = vrot.slane %v1362, 1
    %v1364 = vadd.f32 %v1362, %v1363
    %v1365 = vsel %vm1287, %v1199, 0.0
    %v1366 = vrot.slane %v1365, 4
    %v1367 = vadd.f32 %v1365, %v1366
    %v1368 = vrot.slane %v1367, 2
    %v1369 = vadd.f32 %v1367, %v1368
    %v1370 = vrot.slane %v1369, 1
    %v1371 = vadd.f32 %v1369, %v1370
    %v1372 = vsel %vm1287, %v1238, 0.0
    %v1373 = vrot.slane %v1372, 4
    %v1374 = vadd.f32 %v1372, %v1373
    %v1375 = vrot.slane %v1374, 2
    %v1376 = vadd.f32 %v1374, %v1375
    %v1377 = vrot.slane %v1376, 1
    %v1378 = vadd.f32 %v1376, %v1377
    %v1379 = vsel %vm1287, %v1240, 0.0
    %v1380 = vrot.slane %v1379, 4
    %v1381 = vadd.f32 %v1379, %v1380
    %v1382 = vrot.slane %v1381, 2
    %v1383 = vadd.f32 %v1381, %v1382
    %v1384 = vrot.slane %v1383, 1
    %v1385 = vadd.f32 %v1383, %v1384
    %v1386 = vsel %vm1287, %v1279, 0.0
    %v1387 = vrot.slane %v1386, 4
    %v1388 = vadd.f32 %v1386, %v1387
    %v1389 = vrot.slane %v1388, 2
    %v1390 = vadd.f32 %v1388, %v1389
    %v1391 = vrot.slane %v1390, 1
    %v1392 = vadd.f32 %v1390, %v1391
    %v1393 = vsel %vm1287, %v1281, 0.0
    %v1394 = vrot.slane %v1393, 4
    %v1395 = vadd.f32 %v1393, %v1394
    %v1396 = vrot.slane %v1395, 2
    %v1397 = vadd.f32 %v1395, %v1396
    %v1398 = vrot.slane %v1397, 1
    %v1399 = vadd.f32 %v1397, %v1398
    %v1400 = vmul.f32 %v992, %v992
    %v1401 = vmul.f32 %v994, %v994
    %v1402 = vmul.f32 %v1033, %v1033
    %v1403 = vmul.f32 %v1035, %v1035
    %v1404 = vmul.f32 %v1074, %v1074
    %v1405 = vmul.f32 %v1076, %v1076
    %v1406 = vmul.f32 %v1115, %v1115
    %v1407 = vmul.f32 %v1117, %v1117
    %v1408 = vmul.f32 %v1156, %v1156
    %v1409 = vmul.f32 %v1158, %v1158
    %v1410 = vmul.f32 %v1197, %v1197
    %v1411 = vmul.f32 %v1199, %v1199
    %v1412 = vmul.f32 %v1238, %v1238
    %v1413 = vmul.f32 %v1240, %v1240
    %v1414 = vmul.f32 %v1279, %v1279
    %v1415 = vmul.f32 %v1281, %v1281
    %v1416 = vsel %vm1287, %v1400, 0.0
    %v1417 = vrot.slane %v1416, 4
    %v1418 = vadd.f32 %v1416, %v1417
    %v1419 = vrot.slane %v1418, 2
    %v1420 = vadd.f32 %v1418, %v1419
    %v1421 = vrot.slane %v1420, 1
    %v1422 = vadd.f32 %v1420, %v1421
    %v1423 = vsel %vm1287, %v1401, 0.0
    %v1424 = vrot.slane %v1423, 4
    %v1425 = vadd.f32 %v1423, %v1424
    %v1426 = vrot.slane %v1425, 2
    %v1427 = vadd.f32 %v1425, %v1426
    %v1428 = vrot.slane %v1427, 1
    %v1429 = vadd.f32 %v1427, %v1428
    %v1430 = vsel %vm1287, %v1402, 0.0
    %v1431 = vrot.slane %v1430, 4
    %v1432 = vadd.f32 %v1430, %v1431
    %v1433 = vrot.slane %v1432, 2
    %v1434 = vadd.f32 %v1432, %v1433
    %v1435 = vrot.slane %v1434, 1
    %v1436 = vadd.f32 %v1434, %v1435
    %v1437 = vsel %vm1287, %v1403, 0.0
    %v1438 = vrot.slane %v1437, 4
    %v1439 = vadd.f32 %v1437, %v1438
    %v1440 = vrot.slane %v1439, 2
    %v1441 = vadd.f32 %v1439, %v1440
    %v1442 = vrot.slane %v1441, 1
    %v1443 = vadd.f32 %v1441, %v1442
    %v1444 = vsel %vm1287, %v1404, 0.0
    %v1445 = vrot.slane %v1444, 4
    %v1446 = vadd.f32 %v1444, %v1445
    %v1447 = vrot.slane %v1446, 2
    %v1448 = vadd.f32 %v1446, %v1447
    %v1449 = vrot.slane %v1448, 1
    %v1450 = vadd.f32 %v1448, %v1449
    %v1451 = vsel %vm1287, %v1405, 0.0
    %v1452 = vrot.slane %v1451, 4
    %v1453 = vadd.f32 %v1451, %v1452
    %v1454 = vrot.slane %v1453, 2
    %v1455 = vadd.f32 %v1453, %v1454
    %v1456 = vrot.slane %v1455, 1
    %v1457 = vadd.f32 %v1455, %v1456
    %v1458 = vsel %vm1287, %v1406, 0.0
    %v1459 = vrot.slane %v1458, 4
    %v1460 = vadd.f32 %v1458, %v1459
    %v1461 = vrot.slane %v1460, 2
    %v1462 = vadd.f32 %v1460, %v1461
    %v1463 = vrot.slane %v1462, 1
    %v1464 = vadd.f32 %v1462, %v1463
    %v1465 = vsel %vm1287, %v1407, 0.0
    %v1466 = vrot.slane %v1465, 4
    %v1467 = vadd.f32 %v1465, %v1466
    %v1468 = vrot.slane %v1467, 2
    %v1469 = vadd.f32 %v1467, %v1468
    %v1470 = vrot.slane %v1469, 1
    %v1471 = vadd.f32 %v1469, %v1470
    %v1472 = vsel %vm1287, %v1408, 0.0
    %v1473 = vrot.slane %v1472, 4
    %v1474 = vadd.f32 %v1472, %v1473
    %v1475 = vrot.slane %v1474, 2
    %v1476 = vadd.f32 %v1474, %v1475
    %v1477 = vrot.slane %v1476, 1
    %v1478 = vadd.f32 %v1476, %v1477
    %v1479 = vsel %vm1287, %v1409, 0.0
    %v1480 = vrot.slane %v1479, 4
    %v1481 = vadd.f32 %v1479, %v1480
    %v1482 = vrot.slane %v1481, 2
    %v1483 = vadd.f32 %v1481, %v1482
    %v1484 = vrot.slane %v1483, 1
    %v1485 = vadd.f32 %v1483, %v1484
    %v1486 = vsel %vm1287, %v1410, 0.0
    %v1487 = vrot.slane %v1486, 4
    %v1488 = vadd.f32 %v1486, %v1487
    %v1489 = vrot.slane %v1488, 2
    %v1490 = vadd.f32 %v1488, %v1489
    %v1491 = vrot.slane %v1490, 1
    %v1492 = vadd.f32 %v1490, %v1491
    %v1493 = vsel %vm1287, %v1411, 0.0
    %v1494 = vrot.slane %v1493, 4
    %v1495 = vadd.f32 %v1493, %v1494
    %v1496 = vrot.slane %v1495, 2
    %v1497 = vadd.f32 %v1495, %v1496
    %v1498 = vrot.slane %v1497, 1
    %v1499 = vadd.f32 %v1497, %v1498
    %v1500 = vsel %vm1287, %v1412, 0.0
    %v1501 = vrot.slane %v1500, 4
    %v1502 = vadd.f32 %v1500, %v1501
    %v1503 = vrot.slane %v1502, 2
    %v1504 = vadd.f32 %v1502, %v1503
    %v1505 = vrot.slane %v1504, 1
    %v1506 = vadd.f32 %v1504, %v1505
    %v1507 = vsel %vm1287, %v1413, 0.0
    %v1508 = vrot.slane %v1507, 4
    %v1509 = vadd.f32 %v1507, %v1508
    %v1510 = vrot.slane %v1509, 2
    %v1511 = vadd.f32 %v1509, %v1510
    %v1512 = vrot.slane %v1511, 1
    %v1513 = vadd.f32 %v1511, %v1512
    %v1514 = vsel %vm1287, %v1414, 0.0
    %v1515 = vrot.slane %v1514, 4
    %v1516 = vadd.f32 %v1514, %v1515
    %v1517 = vrot.slane %v1516, 2
    %v1518 = vadd.f32 %v1516, %v1517
    %v1519 = vrot.slane %v1518, 1
    %v1520 = vadd.f32 %v1518, %v1519
    %v1521 = vsel %vm1287, %v1415, 0.0
    %v1522 = vrot.slane %v1521, 4
    %v1523 = vadd.f32 %v1521, %v1522
    %v1524 = vrot.slane %v1523, 2
    %v1525 = vadd.f32 %v1523, %v1524
    %v1526 = vrot.slane %v1525, 1
    %v1527 = vadd.f32 %v1525, %v1526
    %v1528 = vadd.f32 %v1294, %v1350
    %v1529 = vadd.f32 %v1301, %v1357
    %v1530 = vadd.f32 %v1308, %v1364
    %v1531 = vadd.f32 %v1315, %v1371
    %v1532 = vadd.f32 %v1322, %v1378
    %v1533 = vadd.f32 %v1329, %v1385
    %v1534 = vadd.f32 %v1336, %v1392
    %v1535 = vadd.f32 %v1343, %v1399
    %v1536 = vadd.f32 %v1422, %v1478
    %v1537 = vadd.f32 %v1429, %v1485
    %v1538 = vadd.f32 %v1436, %v1492
    %v1539 = vadd.f32 %v1443, %v1499
    %v1540 = vadd.f32 %v1450, %v1506
    %v1541 = vadd.f32 %v1457, %v1513
    %v1542 = vadd.f32 %v1464, %v1520
    %v1543 = vadd.f32 %v1471, %v1527
    %v1544 = vadd.f32 %v1528, %v1532
    %v1545 = vadd.f32 %v1529, %v1533
    %v1546 = vadd.f32 %v1530, %v1534
    %v1547 = vadd.f32 %v1531, %v1535
    %v1548 = vadd.f32 %v1536, %v1540
    %v1549 = vadd.f32 %v1537, %v1541
    %v1550 = vadd.f32 %v1538, %v1542
    %v1551 = vadd.f32 %v1539, %v1543
    %v1552 = vadd.f32 %v1544, %v1546
    %v1553 = vadd.f32 %v1545, %v1547
    %v1554 = vadd.f32 %v1548, %v1550
    %v1555 = vadd.f32 %v1549, %v1551
    %v1556 = vadd.f32 %v1552, %v1553
    %v1557 = vadd.f32 %v1554, %v1555
    %1559 = vrot.lane.b32.xlu0 %v1556, 64
    %v1560 = vpop.permute.xlu0 %1559
    %v1562 = vadd.f32 %v1556, %v1560
    %1564 = vrot.lane.b32.xlu0 %v1557, 64
    %v1565 = vpop.permute.xlu0 %1564
    %v1567 = vadd.f32 %v1557, %v1565
    %1569 = vrot.lane.b32.xlu0 %v1562, 96
    %v1570 = vpop.permute.xlu0 %1569
    %v1572 = vadd.f32 %v1562, %v1570
    %1574 = vrot.lane.b32.xlu0 %v1567, 96
    %v1575 = vpop.permute.xlu0 %1574
    %v1577 = vadd.f32 %v1567, %v1575
    %v1578 = vmul.f32 %v1572, 0.0078125
    %v1579 = vmul.f32 %v1577, 0.0078125
    %v1580 = vmul.f32 %v1578, %v1578
    %v1581 = vsub.f32 %v1579, %v1580
    %v1582 = vadd.f32 %v1581, 1e-05
    %v1583 = vrsqrt.pop %v1582
    %v1584 = vmul.f32 %v1285, %v1583
    %v1585 = vmul.f32 %v1578, %v1584
    %v1586 = vsub.f32 %v1286, %v1585
    %v1588 = vlaneseq
    %v1589 = vshrl.u32 %v1588, 7
    %v1590 = vsub.s32 0, %v1589
    %v1591 = vrot.slane %v1584, %v1590
    %1592 = vrot.lane.b32.xlu0 %v1591, 32
    %v1593 = vpop.permute.xlu0 %1592
    %vm1595 = vcmask 261120
    %v1596 = vsel %vm1595, %v1584, %v1593
    %v1598 = vlaneseq
    %v1599 = vshrl.u32 %v1598, 7
    %v1600 = vsub.s32 0, %v1599
    %v1601 = vrot.slane %v1586, %v1600
    %1602 = vrot.lane.b32.xlu0 %v1601, 32
    %v1603 = vpop.permute.xlu0 %1602
    %v1605 = vsel %vm1595, %v1586, %v1603
    %1607 = vrot.lane.b32.xlu0 %v1596, 64
    %v1608 = vpop.permute.xlu0 %1607
    %vm1610 = vcmask 523264
    %v1611 = vsel %vm1610, %v1596, %v1608
    %1613 = vrot.lane.b32.xlu0 %v1605, 64
    %v1614 = vpop.permute.xlu0 %1613
    %v1616 = vsel %vm1610, %v1605, %v1614
    %v1617 = vlaneseq
    %v1618 = vshrl.u32 %v1617, 7
    %v1619 = vsub.s32 0, %v1618
    %v1620 = vrot.slane %v1611, %v1619
    %v1621 = vmul.f32 %v992, %v1620
    %v1622 = vmul.f32 %v994, %v1620
    %v1623 = vmul.f32 %v1033, %v1620
    %v1624 = vmul.f32 %v1035, %v1620
    %v1625 = vmul.f32 %v1074, %v1620
    %v1626 = vmul.f32 %v1076, %v1620
    %v1627 = vmul.f32 %v1115, %v1620
    %v1628 = vmul.f32 %v1117, %v1620
    %v1629 = vmul.f32 %v1156, %v1620
    %v1630 = vmul.f32 %v1158, %v1620
    %v1631 = vmul.f32 %v1197, %v1620
    %v1632 = vmul.f32 %v1199, %v1620
    %v1633 = vmul.f32 %v1238, %v1620
    %v1634 = vmul.f32 %v1240, %v1620
    %v1635 = vmul.f32 %v1279, %v1620
    %v1636 = vmul.f32 %v1281, %v1620
    %v1637 = vlaneseq
    %v1638 = vshrl.u32 %v1637, 7
    %v1639 = vsub.s32 0, %v1638
    %v1640 = vrot.slane %v1616, %v1639
    %v1641 = vadd.f32 %v1621, %v1640
    %v1642 = vadd.f32 %v1622, %v1640
    %v1643 = vadd.f32 %v1623, %v1640
    %v1644 = vadd.f32 %v1624, %v1640
    %v1645 = vadd.f32 %v1625, %v1640
    %v1646 = vadd.f32 %v1626, %v1640
    %v1647 = vadd.f32 %v1627, %v1640
    %v1648 = vadd.f32 %v1628, %v1640
    %v1649 = vadd.f32 %v1629, %v1640
    %v1650 = vadd.f32 %v1630, %v1640
    %v1651 = vadd.f32 %v1631, %v1640
    %v1652 = vadd.f32 %v1632, %v1640
    %v1653 = vadd.f32 %v1633, %v1640
    %v1654 = vadd.f32 %v1634, %v1640
    %v1655 = vadd.f32 %v1635, %v1640
    %v1656 = vadd.f32 %v1636, %v1640
    %vm1657 = vcmp.gt.f32.partialorder %v1641, 0.0
    %vm1658 = vcmp.gt.f32.partialorder %v1642, 0.0
    %vm1659 = vcmp.gt.f32.partialorder %v1643, 0.0
    %vm1660 = vcmp.gt.f32.partialorder %v1644, 0.0
    %vm1661 = vcmp.gt.f32.partialorder %v1645, 0.0
    %vm1662 = vcmp.gt.f32.partialorder %v1646, 0.0
    %vm1663 = vcmp.gt.f32.partialorder %v1647, 0.0
    %vm1664 = vcmp.gt.f32.partialorder %v1648, 0.0
    %vm1665 = vcmp.gt.f32.partialorder %v1649, 0.0
    %vm1666 = vcmp.gt.f32.partialorder %v1650, 0.0
    %vm1667 = vcmp.gt.f32.partialorder %v1651, 0.0
    %vm1668 = vcmp.gt.f32.partialorder %v1652, 0.0
    %vm1669 = vcmp.gt.f32.partialorder %v1653, 0.0
    %vm1670 = vcmp.gt.f32.partialorder %v1654, 0.0
    %vm1671 = vcmp.gt.f32.partialorder %v1655, 0.0
    %vm1672 = vcmp.gt.f32.partialorder %v1656, 0.0
    %v1673 = vmul.f32 %v1641, 0.2
    %v1674 = vmul.f32 %v1642, 0.2
    %v1675 = vmul.f32 %v1643, 0.2
    %v1676 = vmul.f32 %v1644, 0.2
    %v1677 = vmul.f32 %v1645, 0.2
    %v1678 = vmul.f32 %v1646, 0.2
    %v1679 = vmul.f32 %v1647, 0.2
    %v1680 = vmul.f32 %v1648, 0.2
    %v1681 = vmul.f32 %v1649, 0.2
    %v1682 = vmul.f32 %v1650, 0.2
    %v1683 = vmul.f32 %v1651, 0.2
    %v1684 = vmul.f32 %v1652, 0.2
    %v1685 = vmul.f32 %v1653, 0.2
    %v1686 = vmul.f32 %v1654, 0.2
    %v1687 = vmul.f32 %v1655, 0.2
    %v1688 = vmul.f32 %v1656, 0.2
    %v1689 = vsel %vm1657, %v1641, %v1673
    %v1690 = vsel %vm1658, %v1642, %v1674
    %v1691 = vsel %vm1659, %v1643, %v1675
    %v1692 = vsel %vm1660, %v1644, %v1676
    %v1693 = vsel %vm1661, %v1645, %v1677
    %v1694 = vsel %vm1662, %v1646, %v1678
    %v1695 = vsel %vm1663, %v1647, %v1679
    %v1696 = vsel %vm1664, %v1648, %v1680
    %v1697 = vsel %vm1665, %v1649, %v1681
    %v1698 = vsel %vm1666, %v1650, %v1682
    %v1699 = vsel %vm1667, %v1651, %v1683
    %v1700 = vsel %vm1668, %v1652, %v1684
    %v1701 = vsel %vm1669, %v1653, %v1685
    %v1702 = vsel %vm1670, %v1654, %v1686
    %v1703 = vsel %vm1671, %v1655, %v1687
    %v1704 = vsel %vm1672, %v1656, %v1688
    %1705 = vst [vmem:[#allocation2] sm:$0xff] 0.0
    %1706 = vst [vmem:[#allocation2 + $0x8] sm:$0xff] 0.0
    %1707 = vst [vmem:[#allocation2 + $0x10] sm:$0xff] 0.0
    %1708 = vst [vmem:[#allocation2 + $0x18] sm:$0xff] 0.0
    %1709 = vst [vmem:[#allocation2 + $0x20] sm:$0x3] 0.0
    %1710 = vst [vmem:[#allocation2 + $0x28] sm:$0x3] 0.0
    %v1713 = vcombine.low %v1689, %v1690
    %v1715 = vunpack.c.l.s4 1966171168
    %v1716 = vunpack.c.0.s8 %v1715
    %v1717 = vlaneseq
    %v1718 = vshrl.u32 %v1717, 7
    %v1719 = vsub.s32 %v1716, %v1718
    %v1720 = vrot.slane %v1713, %v1719
    %v1722 = vunpack.c.l.s4 1966171168
    %v1723 = vunpack.c.0.s8 %v1722
    %v1724 = vlaneseq
    %v1725 = vshrl.u32 %v1724, 7
    %v1726 = vsub.s32 %v1723, %v1725
    %v1727 = vrot.slane %v1720, %v1726
    %v1729 = vlaneseq
    %vm1730 = vcmp.ge.s32.totalorder %v1729, 0
    %vm1731 = vcmp.lt.s32.totalorder %v1729, 256
    %vm1732 = vmand %vm1730, %vm1731
    %1733 = vst.msk [vmem:[#allocation2] ss:$8 sm:$0x3] %vm1732, %v1727
    %1734 = vst.msk [vmem:[#allocation2] ss:$8 sm:$0x0] %vm1732, %v1727
    %v1737 = vcombine.low %v1691, %v1692
    %v1739 = vunpack.c.l.s4 1966171168
    %v1740 = vunpack.c.0.s8 %v1739
    %v1741 = vlaneseq
    %v1742 = vshrl.u32 %v1741, 7
    %v1743 = vsub.s32 %v1740, %v1742
    %v1744 = vrot.slane %v1737, %v1743
    %v1746 = vunpack.c.l.s4 1966171168
    %v1747 = vunpack.c.0.s8 %v1746
    %v1748 = vlaneseq
    %v1749 = vshrl.u32 %v1748, 7
    %v1750 = vsub.s32 %v1747, %v1749
    %v1751 = vrot.slane %v1744, %v1750
    %s1753 = scalar_lea.vmem [#allocation2], 1
    %1754 = vst.msk [vmem:[%s1753] ss:$8 sm:$0x3] %vm1732, %v1751
    %1755 = vst.msk [vmem:[%s1753] ss:$8 sm:$0x0] %vm1732, %v1751
    %v1758 = vcombine.low %v1693, %v1694
    %v1760 = vunpack.c.l.s4 1966171168
    %v1761 = vunpack.c.0.s8 %v1760
    %v1762 = vlaneseq
    %v1763 = vshrl.u32 %v1762, 7
    %v1764 = vsub.s32 %v1761, %v1763
    %v1765 = vrot.slane %v1758, %v1764
    %v1767 = vunpack.c.l.s4 1966171168
    %v1768 = vunpack.c.0.s8 %v1767
    %v1769 = vlaneseq
    %v1770 = vshrl.u32 %v1769, 7
    %v1771 = vsub.s32 %v1768, %v1770
    %v1772 = vrot.slane %v1765, %v1771
    %s1774 = scalar_lea.vmem [#allocation2], 2
    %1775 = vst.msk [vmem:[%s1774] ss:$8 sm:$0x3] %vm1732, %v1772
    %1776 = vst.msk [vmem:[%s1774] ss:$8 sm:$0x0] %vm1732, %v1772
    %v1779 = vcombine.low %v1695, %v1696
    %v1781 = vunpack.c.l.s4 1966171168
    %v1782 = vunpack.c.0.s8 %v1781
    %v1783 = vlaneseq
    %v1784 = vshrl.u32 %v1783, 7
    %v1785 = vsub.s32 %v1782, %v1784
    %v1786 = vrot.slane %v1779, %v1785
    %v1788 = vunpack.c.l.s4 1966171168
    %v1789 = vunpack.c.0.s8 %v1788
    %v1790 = vlaneseq
    %v1791 = vshrl.u32 %v1790, 7
    %v1792 = vsub.s32 %v1789, %v1791
    %v1793 = vrot.slane %v1786, %v1792
    %s1795 = scalar_lea.vmem [#allocation2], 3
    %1796 = vst.msk [vmem:[%s1795] ss:$8 sm:$0x3] %vm1732, %v1793
    %1797 = vst.msk [vmem:[%s1795] ss:$8 sm:$0x0] %vm1732, %v1793
    %v1800 = vcombine.low %v1697, %v1698
    %v1802 = vunpack.c.l.s4 1966171168
    %v1803 = vunpack.c.0.s8 %v1802
    %v1804 = vlaneseq
    %v1805 = vshrl.u32 %v1804, 7
    %v1806 = vsub.s32 %v1803, %v1805
    %v1807 = vrot.slane %v1800, %v1806
    %v1809 = vunpack.c.l.s4 1966171168
    %v1810 = vunpack.c.0.s8 %v1809
    %v1811 = vlaneseq
    %v1812 = vshrl.u32 %v1811, 7
    %v1813 = vsub.s32 %v1810, %v1812
    %v1814 = vrot.slane %v1807, %v1813
    %s1816 = scalar_lea.vmem [#allocation2], 4
    %1817 = vst.msk [vmem:[%s1816] ss:$8 sm:$0x3] %vm1732, %v1814
    %1818 = vst.msk [vmem:[%s1816] ss:$8 sm:$0x0] %vm1732, %v1814
    %v1821 = vcombine.low %v1699, %v1700
    %v1823 = vunpack.c.l.s4 1966171168
    %v1824 = vunpack.c.0.s8 %v1823
    %v1825 = vlaneseq
    %v1826 = vshrl.u32 %v1825, 7
    %v1827 = vsub.s32 %v1824, %v1826
    %v1828 = vrot.slane %v1821, %v1827
    %v1830 = vunpack.c.l.s4 1966171168
    %v1831 = vunpack.c.0.s8 %v1830
    %v1832 = vlaneseq
    %v1833 = vshrl.u32 %v1832, 7
    %v1834 = vsub.s32 %v1831, %v1833
    %v1835 = vrot.slane %v1828, %v1834
    %s1837 = scalar_lea.vmem [#allocation2], 5
    %1838 = vst.msk [vmem:[%s1837] ss:$8 sm:$0x3] %vm1732, %v1835
    %1839 = vst.msk [vmem:[%s1837] ss:$8 sm:$0x0] %vm1732, %v1835
    %v1842 = vcombine.low %v1701, %v1702
    %v1844 = vunpack.c.l.s4 1966171168
    %v1845 = vunpack.c.0.s8 %v1844
    %v1846 = vlaneseq
    %v1847 = vshrl.u32 %v1846, 7
    %v1848 = vsub.s32 %v1845, %v1847
    %v1849 = vrot.slane %v1842, %v1848
    %v1851 = vunpack.c.l.s4 1966171168
    %v1852 = vunpack.c.0.s8 %v1851
    %v1853 = vlaneseq
    %v1854 = vshrl.u32 %v1853, 7
    %v1855 = vsub.s32 %v1852, %v1854
    %v1856 = vrot.slane %v1849, %v1855
    %s1858 = scalar_lea.vmem [#allocation2], 6
    %1859 = vst.msk [vmem:[%s1858] ss:$8 sm:$0x3] %vm1732, %v1856
    %1860 = vst.msk [vmem:[%s1858] ss:$8 sm:$0x0] %vm1732, %v1856
    %v1863 = vcombine.low %v1703, %v1704
    %v1865 = vunpack.c.l.s4 1966171168
    %v1866 = vunpack.c.0.s8 %v1865
    %v1867 = vlaneseq
    %v1868 = vshrl.u32 %v1867, 7
    %v1869 = vsub.s32 %v1866, %v1868
    %v1870 = vrot.slane %v1863, %v1869
    %v1872 = vunpack.c.l.s4 1966171168
    %v1873 = vunpack.c.0.s8 %v1872
    %v1874 = vlaneseq
    %v1875 = vshrl.u32 %v1874, 7
    %v1876 = vsub.s32 %v1873, %v1875
    %v1877 = vrot.slane %v1870, %v1876
    %s1879 = scalar_lea.vmem [#allocation2], 7
    %1880 = vst.msk [vmem:[%s1879] ss:$8 sm:$0x3] %vm1732, %v1877
    %1881 = vst.msk [vmem:[%s1879] ss:$8 sm:$0x0] %vm1732, %v1877
    %v1882 = vcombine.high %v1720, %v1720
    %v1884 = vunpack.c.l.s4 1966171168
    %v1885 = vunpack.c.0.s8 %v1884
    %v1886 = vlaneseq
    %v1887 = vshrl.u32 %v1886, 7
    %v1888 = vsub.s32 %v1885, %v1887
    %v1889 = vrot.slane %v1882, %v1888
    %s1891 = scalar_lea.vmem [#allocation2], 17
    %1892 = vst.msk [vmem:[%s1891] ss:$8 sm:$0x3] %vm1732, %v1889
    %1893 = vst.msk [vmem:[%s1891] ss:$8 sm:$0x0] %vm1732, %v1889
    %v1894 = vcombine.high %v1744, %v1744
    %v1896 = vunpack.c.l.s4 1966171168
    %v1897 = vunpack.c.0.s8 %v1896
    %v1898 = vlaneseq
    %v1899 = vshrl.u32 %v1898, 7
    %v1900 = vsub.s32 %v1897, %v1899
    %v1901 = vrot.slane %v1894, %v1900
    %s1903 = scalar_lea.vmem [#allocation2], 18
    %1904 = vst.msk [vmem:[%s1903] ss:$8 sm:$0x3] %vm1732, %v1901
    %1905 = vst.msk [vmem:[%s1903] ss:$8 sm:$0x0] %vm1732, %v1901
    %v1906 = vcombine.high %v1765, %v1765
    %v1908 = vunpack.c.l.s4 1966171168
    %v1909 = vunpack.c.0.s8 %v1908
    %v1910 = vlaneseq
    %v1911 = vshrl.u32 %v1910, 7
    %v1912 = vsub.s32 %v1909, %v1911
    %v1913 = vrot.slane %v1906, %v1912
    %s1915 = scalar_lea.vmem [#allocation2], 19
    %1916 = vst.msk [vmem:[%s1915] ss:$8 sm:$0x3] %vm1732, %v1913
    %1917 = vst.msk [vmem:[%s1915] ss:$8 sm:$0x0] %vm1732, %v1913
    %v1918 = vcombine.high %v1786, %v1786
    %v1920 = vunpack.c.l.s4 1966171168
    %v1921 = vunpack.c.0.s8 %v1920
    %v1922 = vlaneseq
    %v1923 = vshrl.u32 %v1922, 7
    %v1924 = vsub.s32 %v1921, %v1923
    %v1925 = vrot.slane %v1918, %v1924
    %s1927 = scalar_lea.vmem [#allocation2], 20
    %1928 = vst.msk [vmem:[%s1927] ss:$8 sm:$0x3] %vm1732, %v1925
    %1929 = vst.msk [vmem:[%s1927] ss:$8 sm:$0x0] %vm1732, %v1925
    %v1930 = vcombine.high %v1807, %v1807
    %v1932 = vunpack.c.l.s4 1966171168
    %v1933 = vunpack.c.0.s8 %v1932
    %v1934 = vlaneseq
    %v1935 = vshrl.u32 %v1934, 7
    %v1936 = vsub.s32 %v1933, %v1935
    %v1937 = vrot.slane %v1930, %v1936
    %s1939 = scalar_lea.vmem [#allocation2], 21
    %1940 = vst.msk [vmem:[%s1939] ss:$8 sm:$0x3] %vm1732, %v1937
    %1941 = vst.msk [vmem:[%s1939] ss:$8 sm:$0x0] %vm1732, %v1937
    %v1942 = vcombine.high %v1828, %v1828
    %v1944 = vunpack.c.l.s4 1966171168
    %v1945 = vunpack.c.0.s8 %v1944
    %v1946 = vlaneseq
    %v1947 = vshrl.u32 %v1946, 7
    %v1948 = vsub.s32 %v1945, %v1947
    %v1949 = vrot.slane %v1942, %v1948
    %s1951 = scalar_lea.vmem [#allocation2], 22
    %1952 = vst.msk [vmem:[%s1951] ss:$8 sm:$0x3] %vm1732, %v1949
    %1953 = vst.msk [vmem:[%s1951] ss:$8 sm:$0x0] %vm1732, %v1949
    %v1954 = vcombine.high %v1849, %v1849
    %v1956 = vunpack.c.l.s4 1966171168
    %v1957 = vunpack.c.0.s8 %v1956
    %v1958 = vlaneseq
    %v1959 = vshrl.u32 %v1958, 7
    %v1960 = vsub.s32 %v1957, %v1959
    %v1961 = vrot.slane %v1954, %v1960
    %s1963 = scalar_lea.vmem [#allocation2], 23
    %1964 = vst.msk [vmem:[%s1963] ss:$8 sm:$0x3] %vm1732, %v1961
    %1965 = vst.msk [vmem:[%s1963] ss:$8 sm:$0x0] %vm1732, %v1961
    %v1966 = vcombine.high %v1870, %v1870
    %v1968 = vunpack.c.l.s4 1966171168
    %v1969 = vunpack.c.0.s8 %v1968
    %v1970 = vlaneseq
    %v1971 = vshrl.u32 %v1970, 7
    %v1972 = vsub.s32 %v1969, %v1971
    %v1973 = vrot.slane %v1966, %v1972
    %s1975 = scalar_lea.vmem [#allocation2], 32
    %1976 = vst.msk [vmem:[%s1975] ss:$8 sm:$0x3] %vm1732, %v1973
    %1977 = vst.msk [vmem:[%s1975] ss:$8 sm:$0x0] %vm1732, %v1973
    %v1978 = vld [vmem:[#allocation2] sm:$0xff]
    %v1979 = vld [vmem:[#allocation2 + $0x8] sm:$0xff]
    %v1980 = vld [vmem:[#allocation2 + $0x10] sm:$0xfe]
    %v1981 = vld [vmem:[#allocation2 + $0x18] sm:$0xfe]
    %v1982 = vld [vmem:[#allocation2 + $0x20] sm:$0x1]
    %v1983 = vld [vmem:[#allocation2 + $0x28] sm:$0x1]
    %vm1988 = vcmask 1046528
    %v1989 = vrot.slane %v1980, 1
    %v1990 = vrot.slane %v1982, 1
    %v1991 = vsel %vm1988, %v1989, %v1990
    %v1992 = vrot.slane %v1981, 1
    %v1993 = vrot.slane %v1983, 1
    %v1994 = vsel %vm1988, %v1992, %v1993
    %v1997 = vld [vmem:[#allocation2] sm:$0xfe]
    %v1998 = vld [vmem:[#allocation2 + $0x8] sm:$0xfe]
    %v1999 = vld [vmem:[#allocation2 + $0x10] sm:$0x1]
    %v2000 = vld [vmem:[#allocation2 + $0x18] sm:$0x1]
    %v2001 = vld [vmem:[#allocation2 + $0x10] sm:$0xfc]
    %v2002 = vld [vmem:[#allocation2 + $0x18] sm:$0xfc]
    %v2003 = vld [vmem:[#allocation2 + $0x20] sm:$0x3]
    %v2004 = vld [vmem:[#allocation2 + $0x28] sm:$0x3]
    %v2009 = vrot.slane %v1997, 1
    %v2010 = vrot.slane %v1999, 1
    %v2011 = vsel %vm1988, %v2009, %v2010
    %v2012 = vrot.slane %v1998, 1
    %v2013 = vrot.slane %v2000, 1
    %v2014 = vsel %vm1988, %v2012, %v2013
    %vm2021 = vcmask 1045504
    %v2022 = vrot.slane %v2001, 2
    %v2023 = vrot.slane %v2003, 2
    %v2024 = vsel %vm2021, %v2022, %v2023
    %v2025 = vrot.slane %v2002, 2
    %v2026 = vrot.slane %v2004, 2
    %v2027 = vsel %vm2021, %v2025, %v2026
    %v2030 = vpack.c.bf16 %v1991, %v1978
    %v2031 = vpack.c.bf16 %v1994, %v1979
    %v2032 = vpack.c.bf16 %v2024, %v2011
    %v2033 = vpack.c.bf16 %v2027, %v2014
    %v2034 = vld [vmem:[#allocation9] sm:$0xff]
    %v2035 = vld [vmem:[#allocation9 + $0x8] sm:$0xff]
    %v2036 = vld [vmem:[#allocation9 + $0x10] sm:$0xff]
    %v2037 = vld [vmem:[#allocation9 + $0x18] sm:$0xff]
    %v2038 = vld [vmem:[#allocation9 + $0x20] sm:$0xff]
    %v2039 = vld [vmem:[#allocation9 + $0x28] sm:$0xff]
    %v2040 = vld [vmem:[#allocation9 + $0x30] sm:$0xff]
    %v2041 = vld [vmem:[#allocation9 + $0x38] sm:$0xff]
    %v2042 = vld [vmem:[#allocation9 + $0x40] sm:$0xff]
    %v2043 = vld [vmem:[#allocation9 + $0x48] sm:$0xff]
    %v2044 = vld [vmem:[#allocation9 + $0x50] sm:$0xff]
    %v2045 = vld [vmem:[#allocation9 + $0x58] sm:$0xff]
    %v2046 = vld [vmem:[#allocation9 + $0x60] sm:$0xff]
    %v2047 = vld [vmem:[#allocation9 + $0x68] sm:$0xff]
    %v2048 = vld [vmem:[#allocation9 + $0x70] sm:$0xff]
    %v2049 = vld [vmem:[#allocation9 + $0x78] sm:$0xff]
    %v2050 = vld [vmem:[#allocation9 + $0x80] sm:$0xff]
    %v2051 = vld [vmem:[#allocation9 + $0x88] sm:$0xff]
    %v2052 = vld [vmem:[#allocation9 + $0x90] sm:$0xff]
    %v2053 = vld [vmem:[#allocation9 + $0x98] sm:$0xff]
    %v2054 = vld [vmem:[#allocation9 + $0xa0] sm:$0xff]
    %v2055 = vld [vmem:[#allocation9 + $0xa8] sm:$0xff]
    %v2056 = vld [vmem:[#allocation9 + $0xb0] sm:$0xff]
    %v2057 = vld [vmem:[#allocation9 + $0xb8] sm:$0xff]
    %v2058 = vld [vmem:[#allocation9 + $0xc0] sm:$0xff]
    %v2059 = vld [vmem:[#allocation9 + $0xc8] sm:$0xff]
    %v2060 = vld [vmem:[#allocation9 + $0xd0] sm:$0xff]
    %v2061 = vld [vmem:[#allocation9 + $0xd8] sm:$0xff]
    %v2062 = vld [vmem:[#allocation9 + $0xe0] sm:$0xff]
    %v2063 = vld [vmem:[#allocation9 + $0xe8] sm:$0xff]
    %v2064 = vld [vmem:[#allocation9 + $0xf0] sm:$0xff]
    %v2065 = vld [vmem:[#allocation9 + $0xf8] sm:$0xff]
    %v2066 = vld [vmem:[#allocation9 + $0x100] sm:$0xff]
    %v2067 = vld [vmem:[#allocation9 + $0x108] sm:$0xff]
    %v2068 = vld [vmem:[#allocation9 + $0x110] sm:$0xff]
    %v2069 = vld [vmem:[#allocation9 + $0x118] sm:$0xff]
    %v2070 = vld [vmem:[#allocation9 + $0x120] sm:$0xff]
    %v2071 = vld [vmem:[#allocation9 + $0x128] sm:$0xff]
    %v2072 = vld [vmem:[#allocation9 + $0x130] sm:$0xff]
    %v2073 = vld [vmem:[#allocation9 + $0x138] sm:$0xff]
    %v2074 = vld [vmem:[#allocation9 + $0x140] sm:$0xff]
    %v2075 = vld [vmem:[#allocation9 + $0x148] sm:$0xff]
    %v2076 = vld [vmem:[#allocation9 + $0x150] sm:$0xff]
    %v2077 = vld [vmem:[#allocation9 + $0x158] sm:$0xff]
    %v2078 = vld [vmem:[#allocation9 + $0x160] sm:$0xff]
    %v2079 = vld [vmem:[#allocation9 + $0x168] sm:$0xff]
    %v2080 = vld [vmem:[#allocation9 + $0x170] sm:$0xff]
    %v2081 = vld [vmem:[#allocation9 + $0x178] sm:$0xff]
    %v2082 = vld [vmem:[#allocation9 + $0x180] sm:$0xff]
    %v2083 = vld [vmem:[#allocation9 + $0x188] sm:$0xff]
    %v2084 = vld [vmem:[#allocation9 + $0x190] sm:$0xff]
    %v2085 = vld [vmem:[#allocation9 + $0x198] sm:$0xff]
    %v2086 = vld [vmem:[#allocation9 + $0x1a0] sm:$0xff]
    %v2087 = vld [vmem:[#allocation9 + $0x1a8] sm:$0xff]
    %v2088 = vld [vmem:[#allocation9 + $0x1b0] sm:$0xff]
    %v2089 = vld [vmem:[#allocation9 + $0x1b8] sm:$0xff]
    %v2090 = vld [vmem:[#allocation9 + $0x1c0] sm:$0xff]
    %v2091 = vld [vmem:[#allocation9 + $0x1c8] sm:$0xff]
    %v2092 = vld [vmem:[#allocation9 + $0x1d0] sm:$0xff]
    %v2093 = vld [vmem:[#allocation9 + $0x1d8] sm:$0xff]
    %v2094 = vld [vmem:[#allocation9 + $0x1e0] sm:$0xff]
    %v2095 = vld [vmem:[#allocation9 + $0x1e8] sm:$0xff]
    %v2096 = vld [vmem:[#allocation9 + $0x1f0] sm:$0xff]
    %v2097 = vld [vmem:[#allocation9 + $0x1f8] sm:$0xff]
    %v2098 = vld [vmem:[#allocation9 + $0x200] sm:$0xff]
    %v2099 = vld [vmem:[#allocation9 + $0x208] sm:$0xff]
    %v2100 = vld [vmem:[#allocation9 + $0x210] sm:$0xff]
    %v2101 = vld [vmem:[#allocation9 + $0x218] sm:$0xff]
    %v2102 = vld [vmem:[#allocation9 + $0x220] sm:$0xff]
    %v2103 = vld [vmem:[#allocation9 + $0x228] sm:$0xff]
    %v2104 = vld [vmem:[#allocation9 + $0x230] sm:$0xff]
    %v2105 = vld [vmem:[#allocation9 + $0x238] sm:$0xff]
    %v2106 = vld [vmem:[#allocation9 + $0x240] sm:$0xff]
    %v2107 = vld [vmem:[#allocation9 + $0x248] sm:$0xff]
    %v2108 = vld [vmem:[#allocation9 + $0x250] sm:$0xff]
    %v2109 = vld [vmem:[#allocation9 + $0x258] sm:$0xff]
    %v2110 = vld [vmem:[#allocation9 + $0x260] sm:$0xff]
    %v2111 = vld [vmem:[#allocation9 + $0x268] sm:$0xff]
    %v2112 = vld [vmem:[#allocation9 + $0x270] sm:$0xff]
    %v2113 = vld [vmem:[#allocation9 + $0x278] sm:$0xff]
    %v2114 = vld [vmem:[#allocation9 + $0x280] sm:$0xff]
    %v2115 = vld [vmem:[#allocation9 + $0x288] sm:$0xff]
    %v2116 = vld [vmem:[#allocation9 + $0x290] sm:$0xff]
    %v2117 = vld [vmem:[#allocation9 + $0x298] sm:$0xff]
    %v2118 = vld [vmem:[#allocation9 + $0x2a0] sm:$0xff]
    %v2119 = vld [vmem:[#allocation9 + $0x2a8] sm:$0xff]
    %v2120 = vld [vmem:[#allocation9 + $0x2b0] sm:$0xff]
    %v2121 = vld [vmem:[#allocation9 + $0x2b8] sm:$0xff]
    %v2122 = vld [vmem:[#allocation9 + $0x2c0] sm:$0xff]
    %v2123 = vld [vmem:[#allocation9 + $0x2c8] sm:$0xff]
    %v2124 = vld [vmem:[#allocation9 + $0x2d0] sm:$0xff]
    %v2125 = vld [vmem:[#allocation9 + $0x2d8] sm:$0xff]
    %v2126 = vld [vmem:[#allocation9 + $0x2e0] sm:$0xff]
    %v2127 = vld [vmem:[#allocation9 + $0x2e8] sm:$0xff]
    %v2128 = vld [vmem:[#allocation9 + $0x2f0] sm:$0xff]
    %v2129 = vld [vmem:[#allocation9 + $0x2f8] sm:$0xff]
    %v2130 = vld [vmem:[#allocation9 + $0x300] sm:$0xff]
    %v2131 = vld [vmem:[#allocation9 + $0x308] sm:$0xff]
    %v2132 = vld [vmem:[#allocation9 + $0x310] sm:$0xff]
    %v2133 = vld [vmem:[#allocation9 + $0x318] sm:$0xff]
    %v2134 = vld [vmem:[#allocation9 + $0x320] sm:$0xff]
    %v2135 = vld [vmem:[#allocation9 + $0x328] sm:$0xff]
    %v2136 = vld [vmem:[#allocation9 + $0x330] sm:$0xff]
    %v2137 = vld [vmem:[#allocation9 + $0x338] sm:$0xff]
    %v2138 = vld [vmem:[#allocation9 + $0x340] sm:$0xff]
    %v2139 = vld [vmem:[#allocation9 + $0x348] sm:$0xff]
    %v2140 = vld [vmem:[#allocation9 + $0x350] sm:$0xff]
    %v2141 = vld [vmem:[#allocation9 + $0x358] sm:$0xff]
    %v2142 = vld [vmem:[#allocation9 + $0x360] sm:$0xff]
    %v2143 = vld [vmem:[#allocation9 + $0x368] sm:$0xff]
    %v2144 = vld [vmem:[#allocation9 + $0x370] sm:$0xff]
    %v2145 = vld [vmem:[#allocation9 + $0x378] sm:$0xff]
    %v2146 = vld [vmem:[#allocation9 + $0x380] sm:$0xff]
    %v2147 = vld [vmem:[#allocation9 + $0x388] sm:$0xff]
    %v2148 = vld [vmem:[#allocation9 + $0x390] sm:$0xff]
    %v2149 = vld [vmem:[#allocation9 + $0x398] sm:$0xff]
    %v2150 = vld [vmem:[#allocation9 + $0x3a0] sm:$0xff]
    %v2151 = vld [vmem:[#allocation9 + $0x3a8] sm:$0xff]
    %v2152 = vld [vmem:[#allocation9 + $0x3b0] sm:$0xff]
    %v2153 = vld [vmem:[#allocation9 + $0x3b8] sm:$0xff]
    %v2154 = vld [vmem:[#allocation9 + $0x3c0] sm:$0xff]
    %v2155 = vld [vmem:[#allocation9 + $0x3c8] sm:$0xff]
    %v2156 = vld [vmem:[#allocation9 + $0x3d0] sm:$0xff]
    %v2157 = vld [vmem:[#allocation9 + $0x3d8] sm:$0xff]
    %v2158 = vld [vmem:[#allocation9 + $0x3e0] sm:$0xff]
    %v2159 = vld [vmem:[#allocation9 + $0x3e8] sm:$0xff]
    %v2160 = vld [vmem:[#allocation9 + $0x3f0] sm:$0xff]
    %v2161 = vld [vmem:[#allocation9 + $0x3f8] sm:$0xff]
    %v2290 = vunpack.c.l.b16 %v2034
    %v2291 = vunpack.c.h.b16 %v2034
    %v2292 = vunpack.c.l.b16 %v2035
    %v2293 = vunpack.c.h.b16 %v2035
    %v2294 = vunpack.c.l.b16 %v2036
    %v2295 = vunpack.c.h.b16 %v2036
    %v2296 = vunpack.c.l.b16 %v2037
    %v2297 = vunpack.c.h.b16 %v2037
    %v2298 = vunpack.c.l.b16 %v2038
    %v2299 = vunpack.c.h.b16 %v2038
    %v2300 = vunpack.c.l.b16 %v2039
    %v2301 = vunpack.c.h.b16 %v2039
    %v2302 = vunpack.c.l.b16 %v2040
    %v2303 = vunpack.c.h.b16 %v2040
    %v2304 = vunpack.c.l.b16 %v2041
    %v2305 = vunpack.c.h.b16 %v2041
    %v2306 = vunpack.c.l.b16 %v2042
    %v2307 = vunpack.c.h.b16 %v2042
    %v2308 = vunpack.c.l.b16 %v2043
    %v2309 = vunpack.c.h.b16 %v2043
    %v2310 = vunpack.c.l.b16 %v2044
    %v2311 = vunpack.c.h.b16 %v2044
    %v2312 = vunpack.c.l.b16 %v2045
    %v2313 = vunpack.c.h.b16 %v2045
    %v2314 = vunpack.c.l.b16 %v2046
    %v2315 = vunpack.c.h.b16 %v2046
    %v2316 = vunpack.c.l.b16 %v2047
    %v2317 = vunpack.c.h.b16 %v2047
    %v2318 = vunpack.c.l.b16 %v2048
    %v2319 = vunpack.c.h.b16 %v2048
    %v2320 = vunpack.c.l.b16 %v2049
    %v2321 = vunpack.c.h.b16 %v2049
    %v2322 = vunpack.c.l.b16 %v2050
    %v2323 = vunpack.c.h.b16 %v2050
    %v2324 = vunpack.c.l.b16 %v2051
    %v2325 = vunpack.c.h.b16 %v2051
    %v2326 = vunpack.c.l.b16 %v2052
    %v2327 = vunpack.c.h.b16 %v2052
    %v2328 = vunpack.c.l.b16 %v2053
    %v2329 = vunpack.c.h.b16 %v2053
    %v2330 = vunpack.c.l.b16 %v2054
    %v2331 = vunpack.c.h.b16 %v2054
    %v2332 = vunpack.c.l.b16 %v2055
    %v2333 = vunpack.c.h.b16 %v2055
    %v2334 = vunpack.c.l.b16 %v2056
    %v2335 = vunpack.c.h.b16 %v2056
    %v2336 = vunpack.c.l.b16 %v2057
    %v2337 = vunpack.c.h.b16 %v2057
    %v2338 = vunpack.c.l.b16 %v2058
    %v2339 = vunpack.c.h.b16 %v2058
    %v2340 = vunpack.c.l.b16 %v2059
    %v2341 = vunpack.c.h.b16 %v2059
    %v2342 = vunpack.c.l.b16 %v2060
    %v2343 = vunpack.c.h.b16 %v2060
    %v2344 = vunpack.c.l.b16 %v2061
    %v2345 = vunpack.c.h.b16 %v2061
    %v2346 = vunpack.c.l.b16 %v2062
    %v2347 = vunpack.c.h.b16 %v2062
    %v2348 = vunpack.c.l.b16 %v2063
    %v2349 = vunpack.c.h.b16 %v2063
    %v2350 = vunpack.c.l.b16 %v2064
    %v2351 = vunpack.c.h.b16 %v2064
    %v2352 = vunpack.c.l.b16 %v2065
    %v2353 = vunpack.c.h.b16 %v2065
    %v2354 = vunpack.c.l.b16 %v2066
    %v2355 = vunpack.c.h.b16 %v2066
    %v2356 = vunpack.c.l.b16 %v2067
    %v2357 = vunpack.c.h.b16 %v2067
    %v2358 = vunpack.c.l.b16 %v2068
    %v2359 = vunpack.c.h.b16 %v2068
    %v2360 = vunpack.c.l.b16 %v2069
    %v2361 = vunpack.c.h.b16 %v2069
    %v2362 = vunpack.c.l.b16 %v2070
    %v2363 = vunpack.c.h.b16 %v2070
    %v2364 = vunpack.c.l.b16 %v2071
    %v2365 = vunpack.c.h.b16 %v2071
    %v2366 = vunpack.c.l.b16 %v2072
    %v2367 = vunpack.c.h.b16 %v2072
    %v2368 = vunpack.c.l.b16 %v2073
    %v2369 = vunpack.c.h.b16 %v2073
    %v2370 = vunpack.c.l.b16 %v2074
    %v2371 = vunpack.c.h.b16 %v2074
    %v2372 = vunpack.c.l.b16 %v2075
    %v2373 = vunpack.c.h.b16 %v2075
    %v2374 = vunpack.c.l.b16 %v2076
    %v2375 = vunpack.c.h.b16 %v2076
    %v2376 = vunpack.c.l.b16 %v2077
    %v2377 = vunpack.c.h.b16 %v2077
    %v2378 = vunpack.c.l.b16 %v2078
    %v2379 = vunpack.c.h.b16 %v2078
    %v2380 = vunpack.c.l.b16 %v2079
    %v2381 = vunpack.c.h.b16 %v2079
    %v2382 = vunpack.c.l.b16 %v2080
    %v2383 = vunpack.c.h.b16 %v2080
    %v2384 = vunpack.c.l.b16 %v2081
    %v2385 = vunpack.c.h.b16 %v2081
    %v2386 = vunpack.c.l.b16 %v2082
    %v2387 = vunpack.c.h.b16 %v2082
    %v2388 = vunpack.c.l.b16 %v2083
    %v2389 = vunpack.c.h.b16 %v2083
    %v2390 = vunpack.c.l.b16 %v2084
    %v2391 = vunpack.c.h.b16 %v2084
    %v2392 = vunpack.c.l.b16 %v2085
    %v2393 = vunpack.c.h.b16 %v2085
    %v2394 = vunpack.c.l.b16 %v2086
    %v2395 = vunpack.c.h.b16 %v2086
    %v2396 = vunpack.c.l.b16 %v2087
    %v2397 = vunpack.c.h.b16 %v2087
    %v2398 = vunpack.c.l.b16 %v2088
    %v2399 = vunpack.c.h.b16 %v2088
    %v2400 = vunpack.c.l.b16 %v2089
    %v2401 = vunpack.c.h.b16 %v2089
    %v2402 = vunpack.c.l.b16 %v2090
    %v2403 = vunpack.c.h.b16 %v2090
    %v2404 = vunpack.c.l.b16 %v2091
    %v2405 = vunpack.c.h.b16 %v2091
    %v2406 = vunpack.c.l.b16 %v2092
    %v2407 = vunpack.c.h.b16 %v2092
    %v2408 = vunpack.c.l.b16 %v2093
    %v2409 = vunpack.c.h.b16 %v2093
    %v2410 = vunpack.c.l.b16 %v2094
    %v2411 = vunpack.c.h.b16 %v2094
    %v2412 = vunpack.c.l.b16 %v2095
    %v2413 = vunpack.c.h.b16 %v2095
    %v2414 = vunpack.c.l.b16 %v2096
    %v2415 = vunpack.c.h.b16 %v2096
    %v2416 = vunpack.c.l.b16 %v2097
    %v2417 = vunpack.c.h.b16 %v2097
    %v2418 = vunpack.c.l.b16 %v2098
    %v2419 = vunpack.c.h.b16 %v2098
    %v2420 = vunpack.c.l.b16 %v2099
    %v2421 = vunpack.c.h.b16 %v2099
    %v2422 = vunpack.c.l.b16 %v2100
    %v2423 = vunpack.c.h.b16 %v2100
    %v2424 = vunpack.c.l.b16 %v2101
    %v2425 = vunpack.c.h.b16 %v2101
    %v2426 = vunpack.c.l.b16 %v2102
    %v2427 = vunpack.c.h.b16 %v2102
    %v2428 = vunpack.c.l.b16 %v2103
    %v2429 = vunpack.c.h.b16 %v2103
    %v2430 = vunpack.c.l.b16 %v2104
    %v2431 = vunpack.c.h.b16 %v2104
    %v2432 = vunpack.c.l.b16 %v2105
    %v2433 = vunpack.c.h.b16 %v2105
    %v2434 = vunpack.c.l.b16 %v2106
    %v2435 = vunpack.c.h.b16 %v2106
    %v2436 = vunpack.c.l.b16 %v2107
    %v2437 = vunpack.c.h.b16 %v2107
    %v2438 = vunpack.c.l.b16 %v2108
    %v2439 = vunpack.c.h.b16 %v2108
    %v2440 = vunpack.c.l.b16 %v2109
    %v2441 = vunpack.c.h.b16 %v2109
    %v2442 = vunpack.c.l.b16 %v2110
    %v2443 = vunpack.c.h.b16 %v2110
    %v2444 = vunpack.c.l.b16 %v2111
    %v2445 = vunpack.c.h.b16 %v2111
    %v2446 = vunpack.c.l.b16 %v2112
    %v2447 = vunpack.c.h.b16 %v2112
    %v2448 = vunpack.c.l.b16 %v2113
    %v2449 = vunpack.c.h.b16 %v2113
    %v2450 = vunpack.c.l.b16 %v2114
    %v2451 = vunpack.c.h.b16 %v2114
    %v2452 = vunpack.c.l.b16 %v2115
    %v2453 = vunpack.c.h.b16 %v2115
    %v2454 = vunpack.c.l.b16 %v2116
    %v2455 = vunpack.c.h.b16 %v2116
    %v2456 = vunpack.c.l.b16 %v2117
    %v2457 = vunpack.c.h.b16 %v2117
    %v2458 = vunpack.c.l.b16 %v2118
    %v2459 = vunpack.c.h.b16 %v2118
    %v2460 = vunpack.c.l.b16 %v2119
    %v2461 = vunpack.c.h.b16 %v2119
    %v2462 = vunpack.c.l.b16 %v2120
    %v2463 = vunpack.c.h.b16 %v2120
    %v2464 = vunpack.c.l.b16 %v2121
    %v2465 = vunpack.c.h.b16 %v2121
    %v2466 = vunpack.c.l.b16 %v2122
    %v2467 = vunpack.c.h.b16 %v2122
    %v2468 = vunpack.c.l.b16 %v2123
    %v2469 = vunpack.c.h.b16 %v2123
    %v2470 = vunpack.c.l.b16 %v2124
    %v2471 = vunpack.c.h.b16 %v2124
    %v2472 = vunpack.c.l.b16 %v2125
    %v2473 = vunpack.c.h.b16 %v2125
    %v2474 = vunpack.c.l.b16 %v2126
    %v2475 = vunpack.c.h.b16 %v2126
    %v2476 = vunpack.c.l.b16 %v2127
    %v2477 = vunpack.c.h.b16 %v2127
    %v2478 = vunpack.c.l.b16 %v2128
    %v2479 = vunpack.c.h.b16 %v2128
    %v2480 = vunpack.c.l.b16 %v2129
    %v2481 = vunpack.c.h.b16 %v2129
    %v2482 = vunpack.c.l.b16 %v2130
    %v2483 = vunpack.c.h.b16 %v2130
    %v2484 = vunpack.c.l.b16 %v2131
    %v2485 = vunpack.c.h.b16 %v2131
    %v2486 = vunpack.c.l.b16 %v2132
    %v2487 = vunpack.c.h.b16 %v2132
    %v2488 = vunpack.c.l.b16 %v2133
    %v2489 = vunpack.c.h.b16 %v2133
    %v2490 = vunpack.c.l.b16 %v2134
    %v2491 = vunpack.c.h.b16 %v2134
    %v2492 = vunpack.c.l.b16 %v2135
    %v2493 = vunpack.c.h.b16 %v2135
    %v2494 = vunpack.c.l.b16 %v2136
    %v2495 = vunpack.c.h.b16 %v2136
    %v2496 = vunpack.c.l.b16 %v2137
    %v2497 = vunpack.c.h.b16 %v2137
    %v2498 = vunpack.c.l.b16 %v2138
    %v2499 = vunpack.c.h.b16 %v2138
    %v2500 = vunpack.c.l.b16 %v2139
    %v2501 = vunpack.c.h.b16 %v2139
    %v2502 = vunpack.c.l.b16 %v2140
    %v2503 = vunpack.c.h.b16 %v2140
    %v2504 = vunpack.c.l.b16 %v2141
    %v2505 = vunpack.c.h.b16 %v2141
    %v2506 = vunpack.c.l.b16 %v2142
    %v2507 = vunpack.c.h.b16 %v2142
    %v2508 = vunpack.c.l.b16 %v2143
    %v2509 = vunpack.c.h.b16 %v2143
    %v2510 = vunpack.c.l.b16 %v2144
    %v2511 = vunpack.c.h.b16 %v2144
    %v2512 = vunpack.c.l.b16 %v2145
    %v2513 = vunpack.c.h.b16 %v2145
    %v2514 = vunpack.c.l.b16 %v2146
    %v2515 = vunpack.c.h.b16 %v2146
    %v2516 = vunpack.c.l.b16 %v2147
    %v2517 = vunpack.c.h.b16 %v2147
    %v2518 = vunpack.c.l.b16 %v2148
    %v2519 = vunpack.c.h.b16 %v2148
    %v2520 = vunpack.c.l.b16 %v2149
    %v2521 = vunpack.c.h.b16 %v2149
    %v2522 = vunpack.c.l.b16 %v2150
    %v2523 = vunpack.c.h.b16 %v2150
    %v2524 = vunpack.c.l.b16 %v2151
    %v2525 = vunpack.c.h.b16 %v2151
    %v2526 = vunpack.c.l.b16 %v2152
    %v2527 = vunpack.c.h.b16 %v2152
    %v2528 = vunpack.c.l.b16 %v2153
    %v2529 = vunpack.c.h.b16 %v2153
    %v2530 = vunpack.c.l.b16 %v2154
    %v2531 = vunpack.c.h.b16 %v2154
    %v2532 = vunpack.c.l.b16 %v2155
    %v2533 = vunpack.c.h.b16 %v2155
    %v2534 = vunpack.c.l.b16 %v2156
    %v2535 = vunpack.c.h.b16 %v2156
    %v2536 = vunpack.c.l.b16 %v2157
    %v2537 = vunpack.c.h.b16 %v2157
    %v2538 = vunpack.c.l.b16 %v2158
    %v2539 = vunpack.c.h.b16 %v2158
    %v2540 = vunpack.c.l.b16 %v2159
    %v2541 = vunpack.c.h.b16 %v2159
    %v2542 = vunpack.c.l.b16 %v2160
    %v2543 = vunpack.c.h.b16 %v2160
    %v2544 = vunpack.c.l.b16 %v2161
    %v2545 = vunpack.c.h.b16 %v2161
    %v2546 = vpack.c.b16 %v2294, %v2290
    %v2547 = vpack.c.b16 %v2295, %v2291
    %v2548 = vpack.c.b16 %v2296, %v2292
    %v2549 = vpack.c.b16 %v2297, %v2293
    %v2550 = vpack.c.b16 %v2302, %v2298
    %v2551 = vpack.c.b16 %v2303, %v2299
    %v2552 = vpack.c.b16 %v2304, %v2300
    %v2553 = vpack.c.b16 %v2305, %v2301
    %v2554 = vpack.c.b16 %v2310, %v2306
    %v2555 = vpack.c.b16 %v2311, %v2307
    %v2556 = vpack.c.b16 %v2312, %v2308
    %v2557 = vpack.c.b16 %v2313, %v2309
    %v2558 = vpack.c.b16 %v2318, %v2314
    %v2559 = vpack.c.b16 %v2319, %v2315
    %v2560 = vpack.c.b16 %v2320, %v2316
    %v2561 = vpack.c.b16 %v2321, %v2317
    %v2562 = vpack.c.b16 %v2326, %v2322
    %v2563 = vpack.c.b16 %v2327, %v2323
    %v2564 = vpack.c.b16 %v2328, %v2324
    %v2565 = vpack.c.b16 %v2329, %v2325
    %v2566 = vpack.c.b16 %v2334, %v2330
    %v2567 = vpack.c.b16 %v2335, %v2331
    %v2568 = vpack.c.b16 %v2336, %v2332
    %v2569 = vpack.c.b16 %v2337, %v2333
    %v2570 = vpack.c.b16 %v2342, %v2338
    %v2571 = vpack.c.b16 %v2343, %v2339
    %v2572 = vpack.c.b16 %v2344, %v2340
    %v2573 = vpack.c.b16 %v2345, %v2341
    %v2574 = vpack.c.b16 %v2350, %v2346
    %v2575 = vpack.c.b16 %v2351, %v2347
    %v2576 = vpack.c.b16 %v2352, %v2348
    %v2577 = vpack.c.b16 %v2353, %v2349
    %v2578 = vpack.c.b16 %v2358, %v2354
    %v2579 = vpack.c.b16 %v2359, %v2355
    %v2580 = vpack.c.b16 %v2360, %v2356
    %v2581 = vpack.c.b16 %v2361, %v2357
    %v2582 = vpack.c.b16 %v2366, %v2362
    %v2583 = vpack.c.b16 %v2367, %v2363
    %v2584 = vpack.c.b16 %v2368, %v2364
    %v2585 = vpack.c.b16 %v2369, %v2365
    %v2586 = vpack.c.b16 %v2374, %v2370
    %v2587 = vpack.c.b16 %v2375, %v2371
    %v2588 = vpack.c.b16 %v2376, %v2372
    %v2589 = vpack.c.b16 %v2377, %v2373
    %v2590 = vpack.c.b16 %v2382, %v2378
    %v2591 = vpack.c.b16 %v2383, %v2379
    %v2592 = vpack.c.b16 %v2384, %v2380
    %v2593 = vpack.c.b16 %v2385, %v2381
    %v2594 = vpack.c.b16 %v2390, %v2386
    %v2595 = vpack.c.b16 %v2391, %v2387
    %v2596 = vpack.c.b16 %v2392, %v2388
    %v2597 = vpack.c.b16 %v2393, %v2389
    %v2598 = vpack.c.b16 %v2398, %v2394
    %v2599 = vpack.c.b16 %v2399, %v2395
    %v2600 = vpack.c.b16 %v2400, %v2396
    %v2601 = vpack.c.b16 %v2401, %v2397
    %v2602 = vpack.c.b16 %v2406, %v2402
    %v2603 = vpack.c.b16 %v2407, %v2403
    %v2604 = vpack.c.b16 %v2408, %v2404
    %v2605 = vpack.c.b16 %v2409, %v2405
    %v2606 = vpack.c.b16 %v2414, %v2410
    %v2607 = vpack.c.b16 %v2415, %v2411
    %v2608 = vpack.c.b16 %v2416, %v2412
    %v2609 = vpack.c.b16 %v2417, %v2413
    %v2610 = vpack.c.b16 %v2422, %v2418
    %v2611 = vpack.c.b16 %v2423, %v2419
    %v2612 = vpack.c.b16 %v2424, %v2420
    %v2613 = vpack.c.b16 %v2425, %v2421
    %v2614 = vpack.c.b16 %v2430, %v2426
    %v2615 = vpack.c.b16 %v2431, %v2427
    %v2616 = vpack.c.b16 %v2432, %v2428
    %v2617 = vpack.c.b16 %v2433, %v2429
    %v2618 = vpack.c.b16 %v2438, %v2434
    %v2619 = vpack.c.b16 %v2439, %v2435
    %v2620 = vpack.c.b16 %v2440, %v2436
    %v2621 = vpack.c.b16 %v2441, %v2437
    %v2622 = vpack.c.b16 %v2446, %v2442
    %v2623 = vpack.c.b16 %v2447, %v2443
    %v2624 = vpack.c.b16 %v2448, %v2444
    %v2625 = vpack.c.b16 %v2449, %v2445
    %v2626 = vpack.c.b16 %v2454, %v2450
    %v2627 = vpack.c.b16 %v2455, %v2451
    %v2628 = vpack.c.b16 %v2456, %v2452
    %v2629 = vpack.c.b16 %v2457, %v2453
    %v2630 = vpack.c.b16 %v2462, %v2458
    %v2631 = vpack.c.b16 %v2463, %v2459
    %v2632 = vpack.c.b16 %v2464, %v2460
    %v2633 = vpack.c.b16 %v2465, %v2461
    %v2634 = vpack.c.b16 %v2470, %v2466
    %v2635 = vpack.c.b16 %v2471, %v2467
    %v2636 = vpack.c.b16 %v2472, %v2468
    %v2637 = vpack.c.b16 %v2473, %v2469
    %v2638 = vpack.c.b16 %v2478, %v2474
    %v2639 = vpack.c.b16 %v2479, %v2475
    %v2640 = vpack.c.b16 %v2480, %v2476
    %v2641 = vpack.c.b16 %v2481, %v2477
    %v2642 = vpack.c.b16 %v2486, %v2482
    %v2643 = vpack.c.b16 %v2487, %v2483
    %v2644 = vpack.c.b16 %v2488, %v2484
    %v2645 = vpack.c.b16 %v2489, %v2485
    %v2646 = vpack.c.b16 %v2494, %v2490
    %v2647 = vpack.c.b16 %v2495, %v2491
    %v2648 = vpack.c.b16 %v2496, %v2492
    %v2649 = vpack.c.b16 %v2497, %v2493
    %v2650 = vpack.c.b16 %v2502, %v2498
    %v2651 = vpack.c.b16 %v2503, %v2499
    %v2652 = vpack.c.b16 %v2504, %v2500
    %v2653 = vpack.c.b16 %v2505, %v2501
    %v2654 = vpack.c.b16 %v2510, %v2506
    %v2655 = vpack.c.b16 %v2511, %v2507
    %v2656 = vpack.c.b16 %v2512, %v2508
    %v2657 = vpack.c.b16 %v2513, %v2509
    %v2658 = vpack.c.b16 %v2518, %v2514
    %v2659 = vpack.c.b16 %v2519, %v2515
    %v2660 = vpack.c.b16 %v2520, %v2516
    %v2661 = vpack.c.b16 %v2521, %v2517
    %v2662 = vpack.c.b16 %v2526, %v2522
    %v2663 = vpack.c.b16 %v2527, %v2523
    %v2664 = vpack.c.b16 %v2528, %v2524
    %v2665 = vpack.c.b16 %v2529, %v2525
    %v2666 = vpack.c.b16 %v2534, %v2530
    %v2667 = vpack.c.b16 %v2535, %v2531
    %v2668 = vpack.c.b16 %v2536, %v2532
    %v2669 = vpack.c.b16 %v2537, %v2533
    %v2670 = vpack.c.b16 %v2542, %v2538
    %v2671 = vpack.c.b16 %v2543, %v2539
    %v2672 = vpack.c.b16 %v2544, %v2540
    %v2673 = vpack.c.b16 %v2545, %v2541
    %2802 = vmatprep.subr.bf16.mxu0 %v2575
    %2803 = vmatpush1.bf16.msra.mxu0 %v2574
    %2804 = vmatprep.subr.bf16.mxu0 %v2571
    %2805 = vmatpush1.bf16.msra.mxu0 %v2570
    %2806 = vmatprep.subr.bf16.mxu0 %v2567
    %2807 = vmatpush1.bf16.msra.mxu0 %v2566
    %2808 = vmatprep.subr.bf16.mxu0 %v2563
    %2809 = vmatpush1.bf16.msra.mxu0 %v2562
    %2810 = vmatprep.subr.bf16.mxu0 %v2559
    %2811 = vmatpush1.bf16.msra.mxu0 %v2558
    %2812 = vmatprep.subr.bf16.mxu0 %v2555
    %2813 = vmatpush1.bf16.msra.mxu0 %v2554
    %2814 = vmatprep.subr.bf16.mxu0 %v2551
    %2815 = vmatpush1.bf16.msra.mxu0 %v2550
    %2816 = vmatprep.subr.bf16.mxu0 %v2547
    %2817 = vmatpush1.bf16.msra.mxu0 %v2546
    %2818 = vmatprep.subr.bf16.mxu0 %v2607
    %2819 = vmatpush2.bf16.msra.mxu0 %v2606
    %2820 = vmatprep.subr.bf16.mxu0 %v2603
    %2821 = vmatpush2.bf16.msra.mxu0 %v2602
    %2822 = vmatprep.subr.bf16.mxu0 %v2599
    %2823 = vmatpush2.bf16.msra.mxu0 %v2598
    %2824 = vmatprep.subr.bf16.mxu0 %v2595
    %2825 = vmatpush2.bf16.msra.mxu0 %v2594
    %2826 = vmatprep.subr.bf16.mxu0 %v2591
    %2827 = vmatpush2.bf16.msra.mxu0 %v2590
    %2828 = vmatprep.subr.bf16.mxu0 %v2587
    %2829 = vmatpush2.bf16.msra.mxu0 %v2586
    %2830 = vmatprep.subr.bf16.mxu0 %v2583
    %2831 = vmatpush2.bf16.msra.mxu0 %v2582
    %2832 = vmatprep.subr.bf16.mxu0 %v2579
    %2833 = vmatpush2.bf16.msra.mxu0 %v2578
    %2834 = vmatprep.mubr.bf16.mxu0 %v2031
    %2835 = vmatmul.mubr.bf16.gmra.mxu0 %v2030
    %v2836 = vpop.f32.mrf.mxu0
    %v2837 = vadd.f32 0.0, %v2836
    %v2838 = vpop.f32.mrf.mxu0
    %v2839 = vadd.f32 0.0, %v2838
    %v2840 = vpop.f32.mrf.mxu0
    %v2841 = vadd.f32 0.0, %v2840
    %v2842 = vpop.f32.mrf.mxu0
    %v2843 = vadd.f32 0.0, %v2842
    %2844 = vdwg.mxu0
    %2845 = vmatprep.subr.bf16.mxu0 %v2639
    %2846 = vmatpush1.bf16.msra.mxu0 %v2638
    %2847 = vmatprep.subr.bf16.mxu0 %v2635
    %2848 = vmatpush1.bf16.msra.mxu0 %v2634
    %2849 = vmatprep.subr.bf16.mxu0 %v2631
    %2850 = vmatpush1.bf16.msra.mxu0 %v2630
    %2851 = vmatprep.subr.bf16.mxu0 %v2627
    %2852 = vmatpush1.bf16.msra.mxu0 %v2626
    %2853 = vmatprep.subr.bf16.mxu0 %v2623
    %2854 = vmatpush1.bf16.msra.mxu0 %v2622
    %2855 = vmatprep.subr.bf16.mxu0 %v2619
    %2856 = vmatpush1.bf16.msra.mxu0 %v2618
    %2857 = vmatprep.subr.bf16.mxu0 %v2615
    %2858 = vmatpush1.bf16.msra.mxu0 %v2614
    %2859 = vmatprep.subr.bf16.mxu0 %v2611
    %2860 = vmatpush1.bf16.msra.mxu0 %v2610
    %2861 = vmatprep.subr.bf16.mxu0 %v2671
    %2862 = vmatpush2.bf16.msra.mxu0 %v2670
    %2863 = vmatprep.subr.bf16.mxu0 %v2667
    %2864 = vmatpush2.bf16.msra.mxu0 %v2666
    %2865 = vmatprep.subr.bf16.mxu0 %v2663
    %2866 = vmatpush2.bf16.msra.mxu0 %v2662
    %2867 = vmatprep.subr.bf16.mxu0 %v2659
    %2868 = vmatpush2.bf16.msra.mxu0 %v2658
    %2869 = vmatprep.subr.bf16.mxu0 %v2655
    %2870 = vmatpush2.bf16.msra.mxu0 %v2654
    %2871 = vmatprep.subr.bf16.mxu0 %v2651
    %2872 = vmatpush2.bf16.msra.mxu0 %v2650
    %2873 = vmatprep.subr.bf16.mxu0 %v2647
    %2874 = vmatpush2.bf16.msra.mxu0 %v2646
    %2875 = vmatprep.subr.bf16.mxu0 %v2643
    %2876 = vmatpush2.bf16.msra.mxu0 %v2642
    %2877 = vmatprep.mubr.bf16.mxu0 %v2033
    %2878 = vmatmul.mubr.bf16.gmra.mxu0 %v2032
    %v2879 = vpop.f32.mrf.mxu0
    %v2880 = vadd.f32 %v2837, %v2879
    %v2881 = vpop.f32.mrf.mxu0
    %v2882 = vadd.f32 %v2839, %v2881
    %v2883 = vpop.f32.mrf.mxu0
    %v2884 = vadd.f32 %v2841, %v2883
    %v2885 = vpop.f32.mrf.mxu0
    %v2886 = vadd.f32 %v2843, %v2885
    %2887 = vdwg.mxu0
    %2888 = vmatprep.subr.bf16.mxu0 %v2577
    %2889 = vmatpush1.bf16.msra.mxu0 %v2576
    %2890 = vmatprep.subr.bf16.mxu0 %v2573
    %2891 = vmatpush1.bf16.msra.mxu0 %v2572
    %2892 = vmatprep.subr.bf16.mxu0 %v2569
    %2893 = vmatpush1.bf16.msra.mxu0 %v2568
    %2894 = vmatprep.subr.bf16.mxu0 %v2565
    %2895 = vmatpush1.bf16.msra.mxu0 %v2564
    %2896 = vmatprep.subr.bf16.mxu0 %v2561
    %2897 = vmatpush1.bf16.msra.mxu0 %v2560
    %2898 = vmatprep.subr.bf16.mxu0 %v2557
    %2899 = vmatpush1.bf16.msra.mxu0 %v2556
    %2900 = vmatprep.subr.bf16.mxu0 %v2553
    %2901 = vmatpush1.bf16.msra.mxu0 %v2552
    %2902 = vmatprep.subr.bf16.mxu0 %v2549
    %2903 = vmatpush1.bf16.msra.mxu0 %v2548
    %2904 = vmatprep.subr.bf16.mxu0 %v2609
    %2905 = vmatpush2.bf16.msra.mxu0 %v2608
    %2906 = vmatprep.subr.bf16.mxu0 %v2605
    %2907 = vmatpush2.bf16.msra.mxu0 %v2604
    %2908 = vmatprep.subr.bf16.mxu0 %v2601
    %2909 = vmatpush2.bf16.msra.mxu0 %v2600
    %2910 = vmatprep.subr.bf16.mxu0 %v2597
    %2911 = vmatpush2.bf16.msra.mxu0 %v2596
    %2912 = vmatprep.subr.bf16.mxu0 %v2593
    %2913 = vmatpush2.bf16.msra.mxu0 %v2592
    %2914 = vmatprep.subr.bf16.mxu0 %v2589
    %2915 = vmatpush2.bf16.msra.mxu0 %v2588
    %2916 = vmatprep.subr.bf16.mxu0 %v2585
    %2917 = vmatpush2.bf16.msra.mxu0 %v2584
    %2918 = vmatprep.subr.bf16.mxu0 %v2581
    %2919 = vmatpush2.bf16.msra.mxu0 %v2580
    %2920 = vmatprep.mubr.bf16.mxu0 %v2031
    %2921 = vmatmul.mubr.bf16.gmra.mxu0 %v2030
    %v2922 = vpop.f32.mrf.mxu0
    %v2923 = vadd.f32 0.0, %v2922
    %v2924 = vpop.f32.mrf.mxu0
    %v2925 = vadd.f32 0.0, %v2924
    %v2926 = vpop.f32.mrf.mxu0
    %v2927 = vadd.f32 0.0, %v2926
    %v2928 = vpop.f32.mrf.mxu0
    %v2929 = vadd.f32 0.0, %v2928
    %2930 = vdwg.mxu0
    %2931 = vmatprep.subr.bf16.mxu0 %v2641
    %2932 = vmatpush1.bf16.msra.mxu0 %v2640
    %2933 = vmatprep.subr.bf16.mxu0 %v2637
    %2934 = vmatpush1.bf16.msra.mxu0 %v2636
    %2935 = vmatprep.subr.bf16.mxu0 %v2633
    %2936 = vmatpush1.bf16.msra.mxu0 %v2632
    %2937 = vmatprep.subr.bf16.mxu0 %v2629
    %2938 = vmatpush1.bf16.msra.mxu0 %v2628
    %2939 = vmatprep.subr.bf16.mxu0 %v2625
    %2940 = vmatpush1.bf16.msra.mxu0 %v2624
    %2941 = vmatprep.subr.bf16.mxu0 %v2621
    %2942 = vmatpush1.bf16.msra.mxu0 %v2620
    %2943 = vmatprep.subr.bf16.mxu0 %v2617
    %2944 = vmatpush1.bf16.msra.mxu0 %v2616
    %2945 = vmatprep.subr.bf16.mxu0 %v2613
    %2946 = vmatpush1.bf16.msra.mxu0 %v2612
    %2947 = vmatprep.subr.bf16.mxu0 %v2673
    %2948 = vmatpush2.bf16.msra.mxu0 %v2672
    %2949 = vmatprep.subr.bf16.mxu0 %v2669
    %2950 = vmatpush2.bf16.msra.mxu0 %v2668
    %2951 = vmatprep.subr.bf16.mxu0 %v2665
    %2952 = vmatpush2.bf16.msra.mxu0 %v2664
    %2953 = vmatprep.subr.bf16.mxu0 %v2661
    %2954 = vmatpush2.bf16.msra.mxu0 %v2660
    %2955 = vmatprep.subr.bf16.mxu0 %v2657
    %2956 = vmatpush2.bf16.msra.mxu0 %v2656
    %2957 = vmatprep.subr.bf16.mxu0 %v2653
    %2958 = vmatpush2.bf16.msra.mxu0 %v2652
    %2959 = vmatprep.subr.bf16.mxu0 %v2649
    %2960 = vmatpush2.bf16.msra.mxu0 %v2648
    %2961 = vmatprep.subr.bf16.mxu0 %v2645
    %2962 = vmatpush2.bf16.msra.mxu0 %v2644
    %2963 = vmatprep.mubr.bf16.mxu0 %v2033
    %2964 = vmatmul.mubr.bf16.gmra.mxu0 %v2032
    %v2965 = vpop.f32.mrf.mxu0
    %v2966 = vadd.f32 %v2923, %v2965
    %v2967 = vpop.f32.mrf.mxu0
    %v2968 = vadd.f32 %v2925, %v2967
    %v2969 = vpop.f32.mrf.mxu0
    %v2970 = vadd.f32 %v2927, %v2969
    %v2971 = vpop.f32.mrf.mxu0
    %v2972 = vadd.f32 %v2929, %v2971
    %2973 = vdwg.mxu0
    %v2974 = vld [vmem:[%s6] sm:$0x1]
    %v2975 = vld [vmem:[%s7] sm:$0x1]
    %v2976 = vadd.f32 %v2880, %v2884
    %v2977 = vrot.slane %v2976, 4
    %v2978 = vadd.f32 %v2976, %v2977
    %v2979 = vrot.slane %v2978, 2
    %v2980 = vadd.f32 %v2978, %v2979
    %v2981 = vrot.slane %v2980, 1
    %v2982 = vadd.f32 %v2980, %v2981
    %v2983 = vadd.f32 %v2882, %v2886
    %v2984 = vrot.slane %v2983, 4
    %v2985 = vadd.f32 %v2983, %v2984
    %v2986 = vrot.slane %v2985, 2
    %v2987 = vadd.f32 %v2985, %v2986
    %v2988 = vrot.slane %v2987, 1
    %v2989 = vadd.f32 %v2987, %v2988
    %v2990 = vadd.f32 %v2966, %v2970
    %v2991 = vrot.slane %v2990, 4
    %v2992 = vadd.f32 %v2990, %v2991
    %v2993 = vrot.slane %v2992, 2
    %v2994 = vadd.f32 %v2992, %v2993
    %v2995 = vrot.slane %v2994, 1
    %v2996 = vadd.f32 %v2994, %v2995
    %v2997 = vadd.f32 %v2968, %v2972
    %v2998 = vrot.slane %v2997, 4
    %v2999 = vadd.f32 %v2997, %v2998
    %v3000 = vrot.slane %v2999, 2
    %v3001 = vadd.f32 %v2999, %v3000
    %v3002 = vrot.slane %v3001, 1
    %v3003 = vadd.f32 %v3001, %v3002
    %v3004 = vmul.f32 %v2880, %v2880
    %v3005 = vmul.f32 %v2882, %v2882
    %v3006 = vmul.f32 %v2966, %v2966
    %v3007 = vmul.f32 %v2968, %v2968
    %v3008 = vmul.f32 %v2884, %v2884
    %v3009 = vmul.f32 %v2886, %v2886
    %v3010 = vmul.f32 %v2970, %v2970
    %v3011 = vmul.f32 %v2972, %v2972
    %v3012 = vadd.f32 %v3004, %v3008
    %v3013 = vrot.slane %v3012, 4
    %v3014 = vadd.f32 %v3012, %v3013
    %v3015 = vrot.slane %v3014, 2
    %v3016 = vadd.f32 %v3014, %v3015
    %v3017 = vrot.slane %v3016, 1
    %v3018 = vadd.f32 %v3016, %v3017
    %v3019 = vadd.f32 %v3005, %v3009
    %v3020 = vrot.slane %v3019, 4
    %v3021 = vadd.f32 %v3019, %v3020
    %v3022 = vrot.slane %v3021, 2
    %v3023 = vadd.f32 %v3021, %v3022
    %v3024 = vrot.slane %v3023, 1
    %v3025 = vadd.f32 %v3023, %v3024
    %v3026 = vadd.f32 %v3006, %v3010
    %v3027 = vrot.slane %v3026, 4
    %v3028 = vadd.f32 %v3026, %v3027
    %v3029 = vrot.slane %v3028, 2
    %v3030 = vadd.f32 %v3028, %v3029
    %v3031 = vrot.slane %v3030, 1
    %v3032 = vadd.f32 %v3030, %v3031
    %v3033 = vadd.f32 %v3007, %v3011
    %v3034 = vrot.slane %v3033, 4
    %v3035 = vadd.f32 %v3033, %v3034
    %v3036 = vrot.slane %v3035, 2
    %v3037 = vadd.f32 %v3035, %v3036
    %v3038 = vrot.slane %v3037, 1
    %v3039 = vadd.f32 %v3037, %v3038
    %v3040 = vadd.f32 %v2982, %v2996
    %v3041 = vadd.f32 %v2989, %v3003
    %v3042 = vadd.f32 %v3018, %v3032
    %v3043 = vadd.f32 %v3025, %v3039
    %v3044 = vadd.f32 %v3040, %v3041
    %v3045 = vadd.f32 %v3042, %v3043
    %3047 = vrot.lane.b32.xlu0 %v3044, 64
    %v3048 = vpop.permute.xlu0 %3047
    %v3050 = vadd.f32 %v3044, %v3048
    %3052 = vrot.lane.b32.xlu0 %v3045, 64
    %v3053 = vpop.permute.xlu0 %3052
    %v3055 = vadd.f32 %v3045, %v3053
    %3057 = vrot.lane.b32.xlu0 %v3050, 96
    %v3058 = vpop.permute.xlu0 %3057
    %v3060 = vadd.f32 %v3050, %v3058
    %3062 = vrot.lane.b32.xlu0 %v3055, 96
    %v3063 = vpop.permute.xlu0 %3062
    %v3065 = vadd.f32 %v3055, %v3063
    %3067 = vrot.lane.b32.xlu0 %v3060, 112
    %v3068 = vpop.permute.xlu0 %3067
    %v3070 = vadd.f32 %v3060, %v3068
    %3072 = vrot.lane.b32.xlu0 %v3065, 112
    %v3073 = vpop.permute.xlu0 %3072
    %v3075 = vadd.f32 %v3065, %v3073
    %v3076 = vmul.f32 %v3070, 0.001953125
    %v3077 = vmul.f32 %v3075, 0.001953125
    %v3078 = vmul.f32 %v3076, %v3076
    %v3079 = vsub.f32 %v3077, %v3078
    %v3080 = vadd.f32 %v3079, 1e-05
    %v3081 = vrsqrt.pop %v3080
    %v3082 = vmul.f32 %v2974, %v3081
    %v3083 = vmul.f32 %v3076, %v3082
    %v3084 = vsub.f32 %v2975, %v3083
    %v3086 = vlaneseq
    %v3087 = vshrl.u32 %v3086, 7
    %v3088 = vsub.s32 0, %v3087
    %v3089 = vrot.slane %v3082, %v3088
    %3090 = vrot.lane.b32.xlu0 %v3089, 16
    %v3091 = vpop.permute.xlu0 %3090
    %vm3093 = vcmask 130048
    %v3094 = vsel %vm3093, %v3082, %v3091
    %v3096 = vlaneseq
    %v3097 = vshrl.u32 %v3096, 7
    %v3098 = vsub.s32 0, %v3097
    %v3099 = vrot.slane %v3084, %v3098
    %3100 = vrot.lane.b32.xlu0 %v3099, 16
    %v3101 = vpop.permute.xlu0 %3100
    %v3103 = vsel %vm3093, %v3084, %v3101
    %3105 = vrot.lane.b32.xlu0 %v3094, 32
    %v3106 = vpop.permute.xlu0 %3105
    %v3108 = vsel %vm1595, %v3094, %v3106
    %3110 = vrot.lane.b32.xlu0 %v3103, 32
    %v3111 = vpop.permute.xlu0 %3110
    %v3113 = vsel %vm1595, %v3103, %v3111
    %3115 = vrot.lane.b32.xlu0 %v3108, 64
    %v3116 = vpop.permute.xlu0 %3115
    %v3118 = vsel %vm1610, %v3108, %v3116
    %3120 = vrot.lane.b32.xlu0 %v3113, 64
    %v3121 = vpop.permute.xlu0 %3120
    %v3123 = vsel %vm1610, %v3113, %v3121
    %v3124 = vlaneseq
    %v3125 = vshrl.u32 %v3124, 7
    %v3126 = vsub.s32 0, %v3125
    %v3127 = vrot.slane %v3118, %v3126
    %v3128 = vmul.f32 %v2880, %v3127
    %v3129 = vmul.f32 %v2882, %v3127
    %v3130 = vmul.f32 %v2966, %v3127
    %v3131 = vmul.f32 %v2968, %v3127
    %v3132 = vmul.f32 %v2884, %v3127
    %v3133 = vmul.f32 %v2886, %v3127
    %v3134 = vmul.f32 %v2970, %v3127
    %v3135 = vmul.f32 %v2972, %v3127
    %v3136 = vlaneseq
    %v3137 = vshrl.u32 %v3136, 7
    %v3138 = vsub.s32 0, %v3137
    %v3139 = vrot.slane %v3123, %v3138
    %v3140 = vadd.f32 %v3128, %v3139
    %v3141 = vadd.f32 %v3129, %v3139
    %v3142 = vadd.f32 %v3130, %v3139
    %v3143 = vadd.f32 %v3131, %v3139
    %v3144 = vadd.f32 %v3132, %v3139
    %v3145 = vadd.f32 %v3133, %v3139
    %v3146 = vadd.f32 %v3134, %v3139
    %v3147 = vadd.f32 %v3135, %v3139
    %vm3148 = vcmp.gt.f32.partialorder %v3140, 0.0
    %vm3149 = vcmp.gt.f32.partialorder %v3141, 0.0
    %vm3150 = vcmp.gt.f32.partialorder %v3142, 0.0
    %vm3151 = vcmp.gt.f32.partialorder %v3143, 0.0
    %vm3152 = vcmp.gt.f32.partialorder %v3144, 0.0
    %vm3153 = vcmp.gt.f32.partialorder %v3145, 0.0
    %vm3154 = vcmp.gt.f32.partialorder %v3146, 0.0
    %vm3155 = vcmp.gt.f32.partialorder %v3147, 0.0
    %v3156 = vmul.f32 %v3140, 0.2
    %v3157 = vmul.f32 %v3141, 0.2
    %v3158 = vmul.f32 %v3142, 0.2
    %v3159 = vmul.f32 %v3143, 0.2
    %v3160 = vmul.f32 %v3144, 0.2
    %v3161 = vmul.f32 %v3145, 0.2
    %v3162 = vmul.f32 %v3146, 0.2
    %v3163 = vmul.f32 %v3147, 0.2
    %v3164 = vsel %vm3148, %v3140, %v3156
    %v3165 = vsel %vm3149, %v3141, %v3157
    %v3166 = vsel %vm3150, %v3142, %v3158
    %v3167 = vsel %vm3151, %v3143, %v3159
    %v3168 = vsel %vm3152, %v3144, %v3160
    %v3169 = vsel %vm3153, %v3145, %v3161
    %v3170 = vsel %vm3154, %v3146, %v3162
    %v3171 = vsel %vm3155, %v3147, %v3163
    %3172 = vst [vmem:[#allocation3] sm:$0xff] 0.0
    %3173 = vst [vmem:[#allocation3 + $0x8] sm:$0xff] 0.0
    %3174 = vst [vmem:[#allocation3 + $0x10] sm:$0xff] 0.0
    %3175 = vst [vmem:[#allocation3 + $0x18] sm:$0xff] 0.0
    %3176 = vst [vmem:[#allocation3 + $0x20] sm:$0xff] 0.0
    %3177 = vst [vmem:[#allocation3 + $0x28] sm:$0xff] 0.0
    %3178 = vst [vmem:[#allocation3 + $0x30] sm:$0xff] 0.0
    %3179 = vst [vmem:[#allocation3 + $0x38] sm:$0xff] 0.0
    %3180 = vst [vmem:[#allocation3 + $0x40] sm:$0x3] 0.0
    %3181 = vst [vmem:[#allocation3 + $0x48] sm:$0x3] 0.0
    %v3184 = vcombine.low %v3164, %v3165
    %v3186 = vunpack.c.l.s4 1966171168
    %v3187 = vunpack.c.0.s8 %v3186
    %v3188 = vlaneseq
    %v3189 = vshrl.u32 %v3188, 7
    %v3190 = vsub.s32 %v3187, %v3189
    %v3191 = vrot.slane %v3184, %v3190
    %v3193 = vunpack.c.l.s4 1966171168
    %v3194 = vunpack.c.0.s8 %v3193
    %v3195 = vlaneseq
    %v3196 = vshrl.u32 %v3195, 7
    %v3197 = vsub.s32 %v3194, %v3196
    %v3198 = vrot.slane %v3191, %v3197
    %3200 = vst.msk [vmem:[#allocation3] ss:$8 sm:$0x3] %vm1732, %v3198
    %3201 = vst.msk [vmem:[#allocation3] ss:$8 sm:$0x0] %vm1732, %v3198
    %v3204 = vcombine.low %v3166, %v3167
    %v3206 = vunpack.c.l.s4 1966171168
    %v3207 = vunpack.c.0.s8 %v3206
    %v3208 = vlaneseq
    %v3209 = vshrl.u32 %v3208, 7
    %v3210 = vsub.s32 %v3207, %v3209
    %v3211 = vrot.slane %v3204, %v3210
    %v3213 = vunpack.c.l.s4 1966171168
    %v3214 = vunpack.c.0.s8 %v3213
    %v3215 = vlaneseq
    %v3216 = vshrl.u32 %v3215, 7
    %v3217 = vsub.s32 %v3214, %v3216
    %v3218 = vrot.slane %v3211, %v3217
    %s3220 = scalar_lea.vmem [#allocation3], 1
    %3221 = vst.msk [vmem:[%s3220] ss:$8 sm:$0x3] %vm1732, %v3218
    %3222 = vst.msk [vmem:[%s3220] ss:$8 sm:$0x0] %vm1732, %v3218
    %v3223 = vcombine.high %v3191, %v3191
    %v3225 = vunpack.c.l.s4 1966171168
    %v3226 = vunpack.c.0.s8 %v3225
    %v3227 = vlaneseq
    %v3228 = vshrl.u32 %v3227, 7
    %v3229 = vsub.s32 %v3226, %v3228
    %v3230 = vrot.slane %v3223, %v3229
    %s3232 = scalar_lea.vmem [#allocation3], 2
    %3233 = vst.msk [vmem:[%s3232] ss:$8 sm:$0x3] %vm1732, %v3230
    %3234 = vst.msk [vmem:[%s3232] ss:$8 sm:$0x0] %vm1732, %v3230
    %v3235 = vcombine.high %v3211, %v3211
    %v3237 = vunpack.c.l.s4 1966171168
    %v3238 = vunpack.c.0.s8 %v3237
    %v3239 = vlaneseq
    %v3240 = vshrl.u32 %v3239, 7
    %v3241 = vsub.s32 %v3238, %v3240
    %v3242 = vrot.slane %v3235, %v3241
    %s3244 = scalar_lea.vmem [#allocation3], 3
    %3245 = vst.msk [vmem:[%s3244] ss:$8 sm:$0x3] %vm1732, %v3242
    %3246 = vst.msk [vmem:[%s3244] ss:$8 sm:$0x0] %vm1732, %v3242
    %v3247 = vcombine.high %v3198, %v3198
    %s3249 = scalar_lea.vmem [#allocation3], 4
    %3250 = vst.msk [vmem:[%s3249] ss:$8 sm:$0x3] %vm1732, %v3247
    %3251 = vst.msk [vmem:[%s3249] ss:$8 sm:$0x0] %vm1732, %v3247
    %v3252 = vcombine.high %v3218, %v3218
    %s3254 = scalar_lea.vmem [#allocation3], 5
    %3255 = vst.msk [vmem:[%s3254] ss:$8 sm:$0x3] %vm1732, %v3252
    %3256 = vst.msk [vmem:[%s3254] ss:$8 sm:$0x0] %vm1732, %v3252
    %v3257 = vcombine.high %v3230, %v3230
    %s3259 = scalar_lea.vmem [#allocation3], 6
    %3260 = vst.msk [vmem:[%s3259] ss:$8 sm:$0x3] %vm1732, %v3257
    %3261 = vst.msk [vmem:[%s3259] ss:$8 sm:$0x0] %vm1732, %v3257
    %v3262 = vcombine.high %v3242, %v3242
    %s3264 = scalar_lea.vmem [#allocation3], 7
    %3265 = vst.msk [vmem:[%s3264] ss:$8 sm:$0x3] %vm1732, %v3262
    %3266 = vst.msk [vmem:[%s3264] ss:$8 sm:$0x0] %vm1732, %v3262
    %v3267 = vcombine.high %v3164, %v3165
    %v3269 = vunpack.c.l.s4 1966171168
    %v3270 = vunpack.c.0.s8 %v3269
    %v3271 = vlaneseq
    %v3272 = vshrl.u32 %v3271, 7
    %v3273 = vsub.s32 %v3270, %v3272
    %v3274 = vrot.slane %v3267, %v3273
    %v3276 = vunpack.c.l.s4 1966171168
    %v3277 = vunpack.c.0.s8 %v3276
    %v3278 = vlaneseq
    %v3279 = vshrl.u32 %v3278, 7
    %v3280 = vsub.s32 %v3277, %v3279
    %v3281 = vrot.slane %v3274, %v3280
    %s3283 = scalar_lea.vmem [#allocation3], 16
    %3284 = vst.msk [vmem:[%s3283] ss:$8 sm:$0x3] %vm1732, %v3281
    %3285 = vst.msk [vmem:[%s3283] ss:$8 sm:$0x0] %vm1732, %v3281
    %v3286 = vcombine.high %v3166, %v3167
    %v3288 = vunpack.c.l.s4 1966171168
    %v3289 = vunpack.c.0.s8 %v3288
    %v3290 = vlaneseq
    %v3291 = vshrl.u32 %v3290, 7
    %v3292 = vsub.s32 %v3289, %v3291
    %v3293 = vrot.slane %v3286, %v3292
    %v3295 = vunpack.c.l.s4 1966171168
    %v3296 = vunpack.c.0.s8 %v3295
    %v3297 = vlaneseq
    %v3298 = vshrl.u32 %v3297, 7
    %v3299 = vsub.s32 %v3296, %v3298
    %v3300 = vrot.slane %v3293, %v3299
    %s3302 = scalar_lea.vmem [#allocation3], 17
    %3303 = vst.msk [vmem:[%s3302] ss:$8 sm:$0x3] %vm1732, %v3300
    %3304 = vst.msk [vmem:[%s3302] ss:$8 sm:$0x0] %vm1732, %v3300
    %v3305 = vcombine.high %v3274, %v3274
    %v3307 = vunpack.c.l.s4 1966171168
    %v3308 = vunpack.c.0.s8 %v3307
    %v3309 = vlaneseq
    %v3310 = vshrl.u32 %v3309, 7
    %v3311 = vsub.s32 %v3308, %v3310
    %v3312 = vrot.slane %v3305, %v3311
    %s3314 = scalar_lea.vmem [#allocation3], 18
    %3315 = vst.msk [vmem:[%s3314] ss:$8 sm:$0x3] %vm1732, %v3312
    %3316 = vst.msk [vmem:[%s3314] ss:$8 sm:$0x0] %vm1732, %v3312
    %v3317 = vcombine.high %v3293, %v3293
    %v3319 = vunpack.c.l.s4 1966171168
    %v3320 = vunpack.c.0.s8 %v3319
    %v3321 = vlaneseq
    %v3322 = vshrl.u32 %v3321, 7
    %v3323 = vsub.s32 %v3320, %v3322
    %v3324 = vrot.slane %v3317, %v3323
    %s3326 = scalar_lea.vmem [#allocation3], 19
    %3327 = vst.msk [vmem:[%s3326] ss:$8 sm:$0x3] %vm1732, %v3324
    %3328 = vst.msk [vmem:[%s3326] ss:$8 sm:$0x0] %vm1732, %v3324
    %v3329 = vcombine.high %v3281, %v3281
    %s3331 = scalar_lea.vmem [#allocation3], 20
    %3332 = vst.msk [vmem:[%s3331] ss:$8 sm:$0x3] %vm1732, %v3329
    %3333 = vst.msk [vmem:[%s3331] ss:$8 sm:$0x0] %vm1732, %v3329
    %v3334 = vcombine.high %v3300, %v3300
    %s3336 = scalar_lea.vmem [#allocation3], 21
    %3337 = vst.msk [vmem:[%s3336] ss:$8 sm:$0x3] %vm1732, %v3334
    %3338 = vst.msk [vmem:[%s3336] ss:$8 sm:$0x0] %vm1732, %v3334
    %v3339 = vcombine.high %v3312, %v3312
    %s3341 = scalar_lea.vmem [#allocation3], 22
    %3342 = vst.msk [vmem:[%s3341] ss:$8 sm:$0x3] %vm1732, %v3339
    %3343 = vst.msk [vmem:[%s3341] ss:$8 sm:$0x0] %vm1732, %v3339
    %v3344 = vcombine.high %v3324, %v3324
    %s3346 = scalar_lea.vmem [#allocation3], 23
    %3347 = vst.msk [vmem:[%s3346] ss:$8 sm:$0x3] %vm1732, %v3344
    %3348 = vst.msk [vmem:[%s3346] ss:$8 sm:$0x0] %vm1732, %v3344
    %v3351 = vcombine.low %v3168, %v3169
    %v3353 = vunpack.c.l.s4 1966171168
    %v3354 = vunpack.c.0.s8 %v3353
    %v3355 = vlaneseq
    %v3356 = vshrl.u32 %v3355, 7
    %v3357 = vsub.s32 %v3354, %v3356
    %v3358 = vrot.slane %v3351, %v3357
    %v3360 = vunpack.c.l.s4 1966171168
    %v3361 = vunpack.c.0.s8 %v3360
    %v3362 = vlaneseq
    %v3363 = vshrl.u32 %v3362, 7
    %v3364 = vsub.s32 %v3361, %v3363
    %v3365 = vrot.slane %v3358, %v3364
    %s3367 = scalar_lea.vmem [#allocation3], 33
    %3368 = vst.msk [vmem:[%s3367] ss:$8 sm:$0x3] %vm1732, %v3365
    %3369 = vst.msk [vmem:[%s3367] ss:$8 sm:$0x0] %vm1732, %v3365
    %v3372 = vcombine.low %v3170, %v3171
    %v3374 = vunpack.c.l.s4 1966171168
    %v3375 = vunpack.c.0.s8 %v3374
    %v3376 = vlaneseq
    %v3377 = vshrl.u32 %v3376, 7
    %v3378 = vsub.s32 %v3375, %v3377
    %v3379 = vrot.slane %v3372, %v3378
    %v3381 = vunpack.c.l.s4 1966171168
    %v3382 = vunpack.c.0.s8 %v3381
    %v3383 = vlaneseq
    %v3384 = vshrl.u32 %v3383, 7
    %v3385 = vsub.s32 %v3382, %v3384
    %v3386 = vrot.slane %v3379, %v3385
    %s3388 = scalar_lea.vmem [#allocation3], 34
    %3389 = vst.msk [vmem:[%s3388] ss:$8 sm:$0x3] %vm1732, %v3386
    %3390 = vst.msk [vmem:[%s3388] ss:$8 sm:$0x0] %vm1732, %v3386
    %v3391 = vcombine.high %v3358, %v3358
    %v3393 = vunpack.c.l.s4 1966171168
    %v3394 = vunpack.c.0.s8 %v3393
    %v3395 = vlaneseq
    %v3396 = vshrl.u32 %v3395, 7
    %v3397 = vsub.s32 %v3394, %v3396
    %v3398 = vrot.slane %v3391, %v3397
    %s3400 = scalar_lea.vmem [#allocation3], 35
    %3401 = vst.msk [vmem:[%s3400] ss:$8 sm:$0x3] %vm1732, %v3398
    %3402 = vst.msk [vmem:[%s3400] ss:$8 sm:$0x0] %vm1732, %v3398
    %v3403 = vcombine.high %v3379, %v3379
    %v3405 = vunpack.c.l.s4 1966171168
    %v3406 = vunpack.c.0.s8 %v3405
    %v3407 = vlaneseq
    %v3408 = vshrl.u32 %v3407, 7
    %v3409 = vsub.s32 %v3406, %v3408
    %v3410 = vrot.slane %v3403, %v3409
    %s3412 = scalar_lea.vmem [#allocation3], 36
    %3413 = vst.msk [vmem:[%s3412] ss:$8 sm:$0x3] %vm1732, %v3410
    %3414 = vst.msk [vmem:[%s3412] ss:$8 sm:$0x0] %vm1732, %v3410
    %v3415 = vcombine.high %v3365, %v3365
    %s3417 = scalar_lea.vmem [#allocation3], 37
    %3418 = vst.msk [vmem:[%s3417] ss:$8 sm:$0x3] %vm1732, %v3415
    %3419 = vst.msk [vmem:[%s3417] ss:$8 sm:$0x0] %vm1732, %v3415
    %v3420 = vcombine.high %v3386, %v3386
    %s3422 = scalar_lea.vmem [#allocation3], 38
    %3423 = vst.msk [vmem:[%s3422] ss:$8 sm:$0x3] %vm1732, %v3420
    %3424 = vst.msk [vmem:[%s3422] ss:$8 sm:$0x0] %vm1732, %v3420
    %v3425 = vcombine.high %v3398, %v3398
    %s3427 = scalar_lea.vmem [#allocation3], 39
    %3428 = vst.msk [vmem:[%s3427] ss:$8 sm:$0x3] %vm1732, %v3425
    %3429 = vst.msk [vmem:[%s3427] ss:$8 sm:$0x0] %vm1732, %v3425
    %v3430 = vcombine.high %v3410, %v3410
    %s3432 = scalar_lea.vmem [#allocation3], 48
    %3433 = vst.msk [vmem:[%s3432] ss:$8 sm:$0x3] %vm1732, %v3430
    %3434 = vst.msk [vmem:[%s3432] ss:$8 sm:$0x0] %vm1732, %v3430
    %v3435 = vcombine.high %v3168, %v3169
    %v3437 = vunpack.c.l.s4 1966171168
    %v3438 = vunpack.c.0.s8 %v3437
    %v3439 = vlaneseq
    %v3440 = vshrl.u32 %v3439, 7
    %v3441 = vsub.s32 %v3438, %v3440
    %v3442 = vrot.slane %v3435, %v3441
    %v3444 = vunpack.c.l.s4 1966171168
    %v3445 = vunpack.c.0.s8 %v3444
    %v3446 = vlaneseq
    %v3447 = vshrl.u32 %v3446, 7
    %v3448 = vsub.s32 %v3445, %v3447
    %v3449 = vrot.slane %v3442, %v3448
    %s3451 = scalar_lea.vmem [#allocation3], 49
    %3452 = vst.msk [vmem:[%s3451] ss:$8 sm:$0x3] %vm1732, %v3449
    %3453 = vst.msk [vmem:[%s3451] ss:$8 sm:$0x0] %vm1732, %v3449
    %v3454 = vcombine.high %v3170, %v3171
    %v3456 = vunpack.c.l.s4 1966171168
    %v3457 = vunpack.c.0.s8 %v3456
    %v3458 = vlaneseq
    %v3459 = vshrl.u32 %v3458, 7
    %v3460 = vsub.s32 %v3457, %v3459
    %v3461 = vrot.slane %v3454, %v3460
    %v3463 = vunpack.c.l.s4 1966171168
    %v3464 = vunpack.c.0.s8 %v3463
    %v3465 = vlaneseq
    %v3466 = vshrl.u32 %v3465, 7
    %v3467 = vsub.s32 %v3464, %v3466
    %v3468 = vrot.slane %v3461, %v3467
    %s3470 = scalar_lea.vmem [#allocation3], 50
    %3471 = vst.msk [vmem:[%s3470] ss:$8 sm:$0x3] %vm1732, %v3468
    %3472 = vst.msk [vmem:[%s3470] ss:$8 sm:$0x0] %vm1732, %v3468
    %v3473 = vcombine.high %v3442, %v3442
    %v3475 = vunpack.c.l.s4 1966171168
    %v3476 = vunpack.c.0.s8 %v3475
    %v3477 = vlaneseq
    %v3478 = vshrl.u32 %v3477, 7
    %v3479 = vsub.s32 %v3476, %v3478
    %v3480 = vrot.slane %v3473, %v3479
    %s3482 = scalar_lea.vmem [#allocation3], 51
    %3483 = vst.msk [vmem:[%s3482] ss:$8 sm:$0x3] %vm1732, %v3480
    %3484 = vst.msk [vmem:[%s3482] ss:$8 sm:$0x0] %vm1732, %v3480
    %v3485 = vcombine.high %v3461, %v3461
    %v3487 = vunpack.c.l.s4 1966171168
    %v3488 = vunpack.c.0.s8 %v3487
    %v3489 = vlaneseq
    %v3490 = vshrl.u32 %v3489, 7
    %v3491 = vsub.s32 %v3488, %v3490
    %v3492 = vrot.slane %v3485, %v3491
    %s3494 = scalar_lea.vmem [#allocation3], 52
    %3495 = vst.msk [vmem:[%s3494] ss:$8 sm:$0x3] %vm1732, %v3492
    %3496 = vst.msk [vmem:[%s3494] ss:$8 sm:$0x0] %vm1732, %v3492
    %v3497 = vcombine.high %v3449, %v3449
    %s3499 = scalar_lea.vmem [#allocation3], 53
    %3500 = vst.msk [vmem:[%s3499] ss:$8 sm:$0x3] %vm1732, %v3497
    %3501 = vst.msk [vmem:[%s3499] ss:$8 sm:$0x0] %vm1732, %v3497
    %v3502 = vcombine.high %v3468, %v3468
    %s3504 = scalar_lea.vmem [#allocation3], 54
    %3505 = vst.msk [vmem:[%s3504] ss:$8 sm:$0x3] %vm1732, %v3502
    %3506 = vst.msk [vmem:[%s3504] ss:$8 sm:$0x0] %vm1732, %v3502
    %v3507 = vcombine.high %v3480, %v3480
    %s3509 = scalar_lea.vmem [#allocation3], 55
    %3510 = vst.msk [vmem:[%s3509] ss:$8 sm:$0x3] %vm1732, %v3507
    %3511 = vst.msk [vmem:[%s3509] ss:$8 sm:$0x0] %vm1732, %v3507
    %v3512 = vcombine.high %v3492, %v3492
    %s3514 = scalar_lea.vmem [#allocation3], 64
    %3515 = vst.msk [vmem:[%s3514] ss:$8 sm:$0x3] %vm1732, %v3512
    %3516 = vst.msk [vmem:[%s3514] ss:$8 sm:$0x0] %vm1732, %v3512
    %v3517 = vld [vmem:[#allocation3] sm:$0xff]
    %v3518 = vld [vmem:[#allocation3 + $0x8] sm:$0xff]
    %v3519 = vld [vmem:[#allocation3 + $0x10] sm:$0xff]
    %v3520 = vld [vmem:[#allocation3 + $0x18] sm:$0xff]
    %v3521 = vld [vmem:[#allocation3 + $0x20] sm:$0xfe]
    %v3522 = vld [vmem:[#allocation3 + $0x28] sm:$0xfe]
    %v3523 = vld [vmem:[#allocation3 + $0x30] sm:$0xff]
    %v3524 = vld [vmem:[#allocation3 + $0x38] sm:$0xff]
    %v3525 = vld [vmem:[#allocation3 + $0x40] sm:$0x1]
    %v3526 = vld [vmem:[#allocation3 + $0x48] sm:$0x1]
    %v3533 = vrot.slane %v3521, 1
    %v3534 = vrot.slane %v3523, 1
    %v3535 = vsel %vm1988, %v3533, %v3534
    %v3536 = vrot.slane %v3522, 1
    %v3537 = vrot.slane %v3524, 1
    %v3538 = vsel %vm1988, %v3536, %v3537
    %v3539 = vrot.slane %v3525, 1
    %v3540 = vsel %vm1988, %v3534, %v3539
    %v3541 = vrot.slane %v3526, 1
    %v3542 = vsel %vm1988, %v3537, %v3541
    %v3547 = vld [vmem:[#allocation3] sm:$0xfe]
    %v3548 = vld [vmem:[#allocation3 + $0x8] sm:$0xfe]
    %v3549 = vld [vmem:[#allocation3 + $0x20] sm:$0x1]
    %v3550 = vld [vmem:[#allocation3 + $0x28] sm:$0x1]
    %v3551 = vld [vmem:[#allocation3 + $0x20] sm:$0xfc]
    %v3552 = vld [vmem:[#allocation3 + $0x28] sm:$0xfc]
    %v3553 = vld [vmem:[#allocation3 + $0x40] sm:$0x3]
    %v3554 = vld [vmem:[#allocation3 + $0x48] sm:$0x3]
    %v3561 = vrot.slane %v3547, 1
    %v3562 = vrot.slane %v3519, 1
    %v3563 = vsel %vm1988, %v3561, %v3562
    %v3564 = vrot.slane %v3548, 1
    %v3565 = vrot.slane %v3520, 1
    %v3566 = vsel %vm1988, %v3564, %v3565
    %v3567 = vrot.slane %v3549, 1
    %v3568 = vsel %vm1988, %v3562, %v3567
    %v3569 = vrot.slane %v3550, 1
    %v3570 = vsel %vm1988, %v3565, %v3569
    %v3579 = vrot.slane %v3551, 2
    %v3580 = vrot.slane %v3523, 2
    %v3581 = vsel %vm2021, %v3579, %v3580
    %v3582 = vrot.slane %v3552, 2
    %v3583 = vrot.slane %v3524, 2
    %v3584 = vsel %vm2021, %v3582, %v3583
    %v3585 = vrot.slane %v3553, 2
    %v3586 = vsel %vm2021, %v3580, %v3585
    %v3587 = vrot.slane %v3554, 2
    %v3588 = vsel %vm2021, %v3583, %v3587
    %v3593 = vpack.c.bf16 %v3519, %v3517
    %v3594 = vpack.c.bf16 %v3520, %v3518
    %v3595 = vpack.c.bf16 %v3568, %v3563
    %v3596 = vpack.c.bf16 %v3570, %v3566
    %v3597 = vpack.c.bf16 %v3540, %v3535
    %v3598 = vpack.c.bf16 %v3542, %v3538
    %v3599 = vpack.c.bf16 %v3586, %v3581
    %v3600 = vpack.c.bf16 %v3588, %v3584
    %v3601 = vld [vmem:[#allocation11] sm:$0xff]
    %v3602 = vld [vmem:[#allocation11 + $0x8] sm:$0xff]
    %v3603 = vld [vmem:[#allocation11 + $0x10] sm:$0xff]
    %v3604 = vld [vmem:[#allocation11 + $0x18] sm:$0xff]
    %v3605 = vld [vmem:[#allocation11 + $0x20] sm:$0xff]
    %v3606 = vld [vmem:[#allocation11 + $0x28] sm:$0xff]
    %v3607 = vld [vmem:[#allocation11 + $0x30] sm:$0xff]
    %v3608 = vld [vmem:[#allocation11 + $0x38] sm:$0xff]
    %v3609 = vld [vmem:[#allocation11 + $0x40] sm:$0xff]
    %v3610 = vld [vmem:[#allocation11 + $0x48] sm:$0xff]
    %v3611 = vld [vmem:[#allocation11 + $0x50] sm:$0xff]
    %v3612 = vld [vmem:[#allocation11 + $0x58] sm:$0xff]
    %v3613 = vld [vmem:[#allocation11 + $0x60] sm:$0xff]
    %v3614 = vld [vmem:[#allocation11 + $0x68] sm:$0xff]
    %v3615 = vld [vmem:[#allocation11 + $0x70] sm:$0xff]
    %v3616 = vld [vmem:[#allocation11 + $0x78] sm:$0xff]
    %v3617 = vld [vmem:[#allocation11 + $0x80] sm:$0xff]
    %v3618 = vld [vmem:[#allocation11 + $0x88] sm:$0xff]
    %v3619 = vld [vmem:[#allocation11 + $0x90] sm:$0xff]
    %v3620 = vld [vmem:[#allocation11 + $0x98] sm:$0xff]
    %v3621 = vld [vmem:[#allocation11 + $0xa0] sm:$0xff]
    %v3622 = vld [vmem:[#allocation11 + $0xa8] sm:$0xff]
    %v3623 = vld [vmem:[#allocation11 + $0xb0] sm:$0xff]
    %v3624 = vld [vmem:[#allocation11 + $0xb8] sm:$0xff]
    %v3625 = vld [vmem:[#allocation11 + $0xc0] sm:$0xff]
    %v3626 = vld [vmem:[#allocation11 + $0xc8] sm:$0xff]
    %v3627 = vld [vmem:[#allocation11 + $0xd0] sm:$0xff]
    %v3628 = vld [vmem:[#allocation11 + $0xd8] sm:$0xff]
    %v3629 = vld [vmem:[#allocation11 + $0xe0] sm:$0xff]
    %v3630 = vld [vmem:[#allocation11 + $0xe8] sm:$0xff]
    %v3631 = vld [vmem:[#allocation11 + $0xf0] sm:$0xff]
    %v3632 = vld [vmem:[#allocation11 + $0xf8] sm:$0xff]
    %v3633 = vld [vmem:[#allocation11 + $0x100] sm:$0xff]
    %v3634 = vld [vmem:[#allocation11 + $0x108] sm:$0xff]
    %v3635 = vld [vmem:[#allocation11 + $0x110] sm:$0xff]
    %v3636 = vld [vmem:[#allocation11 + $0x118] sm:$0xff]
    %v3637 = vld [vmem:[#allocation11 + $0x120] sm:$0xff]
    %v3638 = vld [vmem:[#allocation11 + $0x128] sm:$0xff]
    %v3639 = vld [vmem:[#allocation11 + $0x130] sm:$0xff]
    %v3640 = vld [vmem:[#allocation11 + $0x138] sm:$0xff]
    %v3641 = vld [vmem:[#allocation11 + $0x140] sm:$0xff]
    %v3642 = vld [vmem:[#allocation11 + $0x148] sm:$0xff]
    %v3643 = vld [vmem:[#allocation11 + $0x150] sm:$0xff]
    %v3644 = vld [vmem:[#allocation11 + $0x158] sm:$0xff]
    %v3645 = vld [vmem:[#allocation11 + $0x160] sm:$0xff]
    %v3646 = vld [vmem:[#allocation11 + $0x168] sm:$0xff]
    %v3647 = vld [vmem:[#allocation11 + $0x170] sm:$0xff]
    %v3648 = vld [vmem:[#allocation11 + $0x178] sm:$0xff]
    %v3649 = vld [vmem:[#allocation11 + $0x180] sm:$0xff]
    %v3650 = vld [vmem:[#allocation11 + $0x188] sm:$0xff]
    %v3651 = vld [vmem:[#allocation11 + $0x190] sm:$0xff]
    %v3652 = vld [vmem:[#allocation11 + $0x198] sm:$0xff]
    %v3653 = vld [vmem:[#allocation11 + $0x1a0] sm:$0xff]
    %v3654 = vld [vmem:[#allocation11 + $0x1a8] sm:$0xff]
    %v3655 = vld [vmem:[#allocation11 + $0x1b0] sm:$0xff]
    %v3656 = vld [vmem:[#allocation11 + $0x1b8] sm:$0xff]
    %v3657 = vld [vmem:[#allocation11 + $0x1c0] sm:$0xff]
    %v3658 = vld [vmem:[#allocation11 + $0x1c8] sm:$0xff]
    %v3659 = vld [vmem:[#allocation11 + $0x1d0] sm:$0xff]
    %v3660 = vld [vmem:[#allocation11 + $0x1d8] sm:$0xff]
    %v3661 = vld [vmem:[#allocation11 + $0x1e0] sm:$0xff]
    %v3662 = vld [vmem:[#allocation11 + $0x1e8] sm:$0xff]
    %v3663 = vld [vmem:[#allocation11 + $0x1f0] sm:$0xff]
    %v3664 = vld [vmem:[#allocation11 + $0x1f8] sm:$0xff]
    %v3729 = vunpack.c.l.b16 %v3601
    %v3730 = vunpack.c.h.b16 %v3601
    %v3731 = vunpack.c.l.b16 %v3602
    %v3732 = vunpack.c.h.b16 %v3602
    %v3733 = vunpack.c.l.b16 %v3603
    %v3734 = vunpack.c.h.b16 %v3603
    %v3735 = vunpack.c.l.b16 %v3604
    %v3736 = vunpack.c.h.b16 %v3604
    %v3737 = vunpack.c.l.b16 %v3605
    %v3738 = vunpack.c.h.b16 %v3605
    %v3739 = vunpack.c.l.b16 %v3606
    %v3740 = vunpack.c.h.b16 %v3606
    %v3741 = vunpack.c.l.b16 %v3607
    %v3742 = vunpack.c.h.b16 %v3607
    %v3743 = vunpack.c.l.b16 %v3608
    %v3744 = vunpack.c.h.b16 %v3608
    %v3745 = vunpack.c.l.b16 %v3609
    %v3746 = vunpack.c.h.b16 %v3609
    %v3747 = vunpack.c.l.b16 %v3610
    %v3748 = vunpack.c.h.b16 %v3610
    %v3749 = vunpack.c.l.b16 %v3611
    %v3750 = vunpack.c.h.b16 %v3611
    %v3751 = vunpack.c.l.b16 %v3612
    %v3752 = vunpack.c.h.b16 %v3612
    %v3753 = vunpack.c.l.b16 %v3613
    %v3754 = vunpack.c.h.b16 %v3613
    %v3755 = vunpack.c.l.b16 %v3614
    %v3756 = vunpack.c.h.b16 %v3614
    %v3757 = vunpack.c.l.b16 %v3615
    %v3758 = vunpack.c.h.b16 %v3615
    %v3759 = vunpack.c.l.b16 %v3616
    %v3760 = vunpack.c.h.b16 %v3616
    %v3761 = vunpack.c.l.b16 %v3617
    %v3762 = vunpack.c.h.b16 %v3617
    %v3763 = vunpack.c.l.b16 %v3618
    %v3764 = vunpack.c.h.b16 %v3618
    %v3765 = vunpack.c.l.b16 %v3619
    %v3766 = vunpack.c.h.b16 %v3619
    %v3767 = vunpack.c.l.b16 %v3620
    %v3768 = vunpack.c.h.b16 %v3620
    %v3769 = vunpack.c.l.b16 %v3621
    %v3770 = vunpack.c.h.b16 %v3621
    %v3771 = vunpack.c.l.b16 %v3622
    %v3772 = vunpack.c.h.b16 %v3622
    %v3773 = vunpack.c.l.b16 %v3623
    %v3774 = vunpack.c.h.b16 %v3623
    %v3775 = vunpack.c.l.b16 %v3624
    %v3776 = vunpack.c.h.b16 %v3624
    %v3777 = vunpack.c.l.b16 %v3625
    %v3778 = vunpack.c.h.b16 %v3625
    %v3779 = vunpack.c.l.b16 %v3626
    %v3780 = vunpack.c.h.b16 %v3626
    %v3781 = vunpack.c.l.b16 %v3627
    %v3782 = vunpack.c.h.b16 %v3627
    %v3783 = vunpack.c.l.b16 %v3628
    %v3784 = vunpack.c.h.b16 %v3628
    %v3785 = vunpack.c.l.b16 %v3629
    %v3786 = vunpack.c.h.b16 %v3629
    %v3787 = vunpack.c.l.b16 %v3630
    %v3788 = vunpack.c.h.b16 %v3630
    %v3789 = vunpack.c.l.b16 %v3631
    %v3790 = vunpack.c.h.b16 %v3631
    %v3791 = vunpack.c.l.b16 %v3632
    %v3792 = vunpack.c.h.b16 %v3632
    %v3793 = vunpack.c.l.b16 %v3633
    %v3794 = vunpack.c.h.b16 %v3633
    %v3795 = vunpack.c.l.b16 %v3634
    %v3796 = vunpack.c.h.b16 %v3634
    %v3797 = vunpack.c.l.b16 %v3635
    %v3798 = vunpack.c.h.b16 %v3635
    %v3799 = vunpack.c.l.b16 %v3636
    %v3800 = vunpack.c.h.b16 %v3636
    %v3801 = vunpack.c.l.b16 %v3637
    %v3802 = vunpack.c.h.b16 %v3637
    %v3803 = vunpack.c.l.b16 %v3638
    %v3804 = vunpack.c.h.b16 %v3638
    %v3805 = vunpack.c.l.b16 %v3639
    %v3806 = vunpack.c.h.b16 %v3639
    %v3807 = vunpack.c.l.b16 %v3640
    %v3808 = vunpack.c.h.b16 %v3640
    %v3809 = vunpack.c.l.b16 %v3641
    %v3810 = vunpack.c.h.b16 %v3641
    %v3811 = vunpack.c.l.b16 %v3642
    %v3812 = vunpack.c.h.b16 %v3642
    %v3813 = vunpack.c.l.b16 %v3643
    %v3814 = vunpack.c.h.b16 %v3643
    %v3815 = vunpack.c.l.b16 %v3644
    %v3816 = vunpack.c.h.b16 %v3644
    %v3817 = vunpack.c.l.b16 %v3645
    %v3818 = vunpack.c.h.b16 %v3645
    %v3819 = vunpack.c.l.b16 %v3646
    %v3820 = vunpack.c.h.b16 %v3646
    %v3821 = vunpack.c.l.b16 %v3647
    %v3822 = vunpack.c.h.b16 %v3647
    %v3823 = vunpack.c.l.b16 %v3648
    %v3824 = vunpack.c.h.b16 %v3648
    %v3825 = vunpack.c.l.b16 %v3649
    %v3826 = vunpack.c.h.b16 %v3649
    %v3827 = vunpack.c.l.b16 %v3650
    %v3828 = vunpack.c.h.b16 %v3650
    %v3829 = vunpack.c.l.b16 %v3651
    %v3830 = vunpack.c.h.b16 %v3651
    %v3831 = vunpack.c.l.b16 %v3652
    %v3832 = vunpack.c.h.b16 %v3652
    %v3833 = vunpack.c.l.b16 %v3653
    %v3834 = vunpack.c.h.b16 %v3653
    %v3835 = vunpack.c.l.b16 %v3654
    %v3836 = vunpack.c.h.b16 %v3654
    %v3837 = vunpack.c.l.b16 %v3655
    %v3838 = vunpack.c.h.b16 %v3655
    %v3839 = vunpack.c.l.b16 %v3656
    %v3840 = vunpack.c.h.b16 %v3656
    %v3841 = vunpack.c.l.b16 %v3657
    %v3842 = vunpack.c.h.b16 %v3657
    %v3843 = vunpack.c.l.b16 %v3658
    %v3844 = vunpack.c.h.b16 %v3658
    %v3845 = vunpack.c.l.b16 %v3659
    %v3846 = vunpack.c.h.b16 %v3659
    %v3847 = vunpack.c.l.b16 %v3660
    %v3848 = vunpack.c.h.b16 %v3660
    %v3849 = vunpack.c.l.b16 %v3661
    %v3850 = vunpack.c.h.b16 %v3661
    %v3851 = vunpack.c.l.b16 %v3662
    %v3852 = vunpack.c.h.b16 %v3662
    %v3853 = vunpack.c.l.b16 %v3663
    %v3854 = vunpack.c.h.b16 %v3663
    %v3855 = vunpack.c.l.b16 %v3664
    %v3856 = vunpack.c.h.b16 %v3664
    %v3857 = vpack.c.b16 %v3731, %v3729
    %v3858 = vpack.c.b16 %v3732, %v3730
    %v3859 = vpack.c.b16 %v3735, %v3733
    %v3860 = vpack.c.b16 %v3736, %v3734
    %v3861 = vpack.c.b16 %v3739, %v3737
    %v3862 = vpack.c.b16 %v3740, %v3738
    %v3863 = vpack.c.b16 %v3743, %v3741
    %v3864 = vpack.c.b16 %v3744, %v3742
    %v3865 = vpack.c.b16 %v3747, %v3745
    %v3866 = vpack.c.b16 %v3748, %v3746
    %v3867 = vpack.c.b16 %v3751, %v3749
    %v3868 = vpack.c.b16 %v3752, %v3750
    %v3869 = vpack.c.b16 %v3755, %v3753
    %v3870 = vpack.c.b16 %v3756, %v3754
    %v3871 = vpack.c.b16 %v3759, %v3757
    %v3872 = vpack.c.b16 %v3760, %v3758
    %v3873 = vpack.c.b16 %v3763, %v3761
    %v3874 = vpack.c.b16 %v3764, %v3762
    %v3875 = vpack.c.b16 %v3767, %v3765
    %v3876 = vpack.c.b16 %v3768, %v3766
    %v3877 = vpack.c.b16 %v3771, %v3769
    %v3878 = vpack.c.b16 %v3772, %v3770
    %v3879 = vpack.c.b16 %v3775, %v3773
    %v3880 = vpack.c.b16 %v3776, %v3774
    %v3881 = vpack.c.b16 %v3779, %v3777
    %v3882 = vpack.c.b16 %v3780, %v3778
    %v3883 = vpack.c.b16 %v3783, %v3781
    %v3884 = vpack.c.b16 %v3784, %v3782
    %v3885 = vpack.c.b16 %v3787, %v3785
    %v3886 = vpack.c.b16 %v3788, %v3786
    %v3887 = vpack.c.b16 %v3791, %v3789
    %v3888 = vpack.c.b16 %v3792, %v3790
    %v3889 = vpack.c.b16 %v3795, %v3793
    %v3890 = vpack.c.b16 %v3796, %v3794
    %v3891 = vpack.c.b16 %v3799, %v3797
    %v3892 = vpack.c.b16 %v3800, %v3798
    %v3893 = vpack.c.b16 %v3803, %v3801
    %v3894 = vpack.c.b16 %v3804, %v3802
    %v3895 = vpack.c.b16 %v3807, %v3805
    %v3896 = vpack.c.b16 %v3808, %v3806
    %v3897 = vpack.c.b16 %v3811, %v3809
    %v3898 = vpack.c.b16 %v3812, %v3810
    %v3899 = vpack.c.b16 %v3815, %v3813
    %v3900 = vpack.c.b16 %v3816, %v3814
    %v3901 = vpack.c.b16 %v3819, %v3817
    %v3902 = vpack.c.b16 %v3820, %v3818
    %v3903 = vpack.c.b16 %v3823, %v3821
    %v3904 = vpack.c.b16 %v3824, %v3822
    %v3905 = vpack.c.b16 %v3827, %v3825
    %v3906 = vpack.c.b16 %v3828, %v3826
    %v3907 = vpack.c.b16 %v3831, %v3829
    %v3908 = vpack.c.b16 %v3832, %v3830
    %v3909 = vpack.c.b16 %v3835, %v3833
    %v3910 = vpack.c.b16 %v3836, %v3834
    %v3911 = vpack.c.b16 %v3839, %v3837
    %v3912 = vpack.c.b16 %v3840, %v3838
    %v3913 = vpack.c.b16 %v3843, %v3841
    %v3914 = vpack.c.b16 %v3844, %v3842
    %v3915 = vpack.c.b16 %v3847, %v3845
    %v3916 = vpack.c.b16 %v3848, %v3846
    %v3917 = vpack.c.b16 %v3851, %v3849
    %v3918 = vpack.c.b16 %v3852, %v3850
    %v3919 = vpack.c.b16 %v3855, %v3853
    %v3920 = vpack.c.b16 %v3856, %v3854
    %3985 = vmatprep.subr.bf16.mxu0 %v3872
    %3986 = vmatpush1.bf16.msra.mxu0 %v3871
    %3987 = vmatprep.subr.bf16.mxu0 %v3870
    %3988 = vmatpush1.bf16.msra.mxu0 %v3869
    %3989 = vmatprep.subr.bf16.mxu0 %v3868
    %3990 = vmatpush1.bf16.msra.mxu0 %v3867
    %3991 = vmatprep.subr.bf16.mxu0 %v3866
    %3992 = vmatpush1.bf16.msra.mxu0 %v3865
    %3993 = vmatprep.subr.bf16.mxu0 %v3864
    %3994 = vmatpush1.bf16.msra.mxu0 %v3863
    %3995 = vmatprep.subr.bf16.mxu0 %v3862
    %3996 = vmatpush1.bf16.msra.mxu0 %v3861
    %3997 = vmatprep.subr.bf16.mxu0 %v3860
    %3998 = vmatpush1.bf16.msra.mxu0 %v3859
    %3999 = vmatprep.subr.bf16.mxu0 %v3858
    %4000 = vmatpush1.bf16.msra.mxu0 %v3857
    %4001 = vmatprep.subr.bf16.mxu0 %v3888
    %4002 = vmatpush2.bf16.msra.mxu0 %v3887
    %4003 = vmatprep.subr.bf16.mxu0 %v3886
    %4004 = vmatpush2.bf16.msra.mxu0 %v3885
    %4005 = vmatprep.subr.bf16.mxu0 %v3884
    %4006 = vmatpush2.bf16.msra.mxu0 %v3883
    %4007 = vmatprep.subr.bf16.mxu0 %v3882
    %4008 = vmatpush2.bf16.msra.mxu0 %v3881
    %4009 = vmatprep.subr.bf16.mxu0 %v3880
    %4010 = vmatpush2.bf16.msra.mxu0 %v3879
    %4011 = vmatprep.subr.bf16.mxu0 %v3878
    %4012 = vmatpush2.bf16.msra.mxu0 %v3877
    %4013 = vmatprep.subr.bf16.mxu0 %v3876
    %4014 = vmatpush2.bf16.msra.mxu0 %v3875
    %4015 = vmatprep.subr.bf16.mxu0 %v3874
    %4016 = vmatpush2.bf16.msra.mxu0 %v3873
    %4017 = vmatprep.mubr.bf16.mxu0 %v3594
    %4018 = vmatmul.mubr.bf16.gmra.mxu0 %v3593
    %v4019 = vpop.f32.mrf.mxu0
    %v4020 = vadd.f32 0.0, %v4019
    %v4021 = vpop.f32.mrf.mxu0
    %v4022 = vadd.f32 0.0, %v4021
    %v4023 = vpop.f32.mrf.mxu0
    %v4024 = vadd.f32 0.0, %v4023
    %v4025 = vpop.f32.mrf.mxu0
    %v4026 = vadd.f32 0.0, %v4025
    %4027 = vmatprep.mubr.bf16.mxu0 %v3598
    %4028 = vmatmul.mubr.bf16.gmra.mxu0 %v3597
    %v4029 = vpop.f32.mrf.mxu0
    %v4030 = vadd.f32 0.0, %v4029
    %v4031 = vpop.f32.mrf.mxu0
    %v4032 = vadd.f32 0.0, %v4031
    %v4033 = vpop.f32.mrf.mxu0
    %v4034 = vadd.f32 0.0, %v4033
    %v4035 = vpop.f32.mrf.mxu0
    %v4036 = vadd.f32 0.0, %v4035
    %4037 = vdwg.mxu0
    %4038 = vmatprep.subr.bf16.mxu0 %v3904
    %4039 = vmatpush1.bf16.msra.mxu0 %v3903
    %4040 = vmatprep.subr.bf16.mxu0 %v3902
    %4041 = vmatpush1.bf16.msra.mxu0 %v3901
    %4042 = vmatprep.subr.bf16.mxu0 %v3900
    %4043 = vmatpush1.bf16.msra.mxu0 %v3899
    %4044 = vmatprep.subr.bf16.mxu0 %v3898
    %4045 = vmatpush1.bf16.msra.mxu0 %v3897
    %4046 = vmatprep.subr.bf16.mxu0 %v3896
    %4047 = vmatpush1.bf16.msra.mxu0 %v3895
    %4048 = vmatprep.subr.bf16.mxu0 %v3894
    %4049 = vmatpush1.bf16.msra.mxu0 %v3893
    %4050 = vmatprep.subr.bf16.mxu0 %v3892
    %4051 = vmatpush1.bf16.msra.mxu0 %v3891
    %4052 = vmatprep.subr.bf16.mxu0 %v3890
    %4053 = vmatpush1.bf16.msra.mxu0 %v3889
    %4054 = vmatprep.subr.bf16.mxu0 %v3920
    %4055 = vmatpush2.bf16.msra.mxu0 %v3919
    %4056 = vmatprep.subr.bf16.mxu0 %v3918
    %4057 = vmatpush2.bf16.msra.mxu0 %v3917
    %4058 = vmatprep.subr.bf16.mxu0 %v3916
    %4059 = vmatpush2.bf16.msra.mxu0 %v3915
    %4060 = vmatprep.subr.bf16.mxu0 %v3914
    %4061 = vmatpush2.bf16.msra.mxu0 %v3913
    %4062 = vmatprep.subr.bf16.mxu0 %v3912
    %4063 = vmatpush2.bf16.msra.mxu0 %v3911
    %4064 = vmatprep.subr.bf16.mxu0 %v3910
    %4065 = vmatpush2.bf16.msra.mxu0 %v3909
    %4066 = vmatprep.subr.bf16.mxu0 %v3908
    %4067 = vmatpush2.bf16.msra.mxu0 %v3907
    %4068 = vmatprep.subr.bf16.mxu0 %v3906
    %4069 = vmatpush2.bf16.msra.mxu0 %v3905
    %4070 = vmatprep.mubr.bf16.mxu0 %v3596
    %4071 = vmatmul.mubr.bf16.gmra.mxu0 %v3595
    %v4072 = vpop.f32.mrf.mxu0
    %v4073 = vadd.f32 %v4020, %v4072
    %v4074 = vpop.f32.mrf.mxu0
    %v4075 = vadd.f32 %v4022, %v4074
    %v4076 = vpop.f32.mrf.mxu0
    %v4077 = vadd.f32 %v4024, %v4076
    %v4078 = vpop.f32.mrf.mxu0
    %v4079 = vadd.f32 %v4026, %v4078
    %4080 = vmatprep.mubr.bf16.mxu0 %v3600
    %4081 = vmatmul.mubr.bf16.gmra.mxu0 %v3599
    %v4082 = vpop.f32.mrf.mxu0
    %v4083 = vadd.f32 %v4030, %v4082
    %v4084 = vpop.f32.mrf.mxu0
    %v4085 = vadd.f32 %v4032, %v4084
    %v4086 = vpop.f32.mrf.mxu0
    %v4087 = vadd.f32 %v4034, %v4086
    %v4088 = vpop.f32.mrf.mxu0
    %v4089 = vadd.f32 %v4036, %v4088
    %4090 = vdwg.mxu0
    %v4091 = vld [vmem:[%s9] sm:$0x1]
    %v4092 = vld [vmem:[%s10] sm:$0x1]
    %v4093 = vadd.f32 %v4073, %v4077
    %v4094 = vadd.f32 %v4093, %v4083
    %v4095 = vadd.f32 %v4094, %v4087
    %v4096 = vrot.slane %v4095, 4
    %v4097 = vadd.f32 %v4095, %v4096
    %v4098 = vrot.slane %v4097, 2
    %v4099 = vadd.f32 %v4097, %v4098
    %v4100 = vrot.slane %v4099, 1
    %v4101 = vadd.f32 %v4099, %v4100
    %v4102 = vadd.f32 %v4075, %v4079
    %v4103 = vadd.f32 %v4102, %v4085
    %v4104 = vadd.f32 %v4103, %v4089
    %v4105 = vrot.slane %v4104, 4
    %v4106 = vadd.f32 %v4104, %v4105
    %v4107 = vrot.slane %v4106, 2
    %v4108 = vadd.f32 %v4106, %v4107
    %v4109 = vrot.slane %v4108, 1
    %v4110 = vadd.f32 %v4108, %v4109
    %v4111 = vmul.f32 %v4073, %v4073
    %v4112 = vmul.f32 %v4075, %v4075
    %v4113 = vmul.f32 %v4077, %v4077
    %v4114 = vmul.f32 %v4079, %v4079
    %v4115 = vmul.f32 %v4083, %v4083
    %v4116 = vmul.f32 %v4085, %v4085
    %v4117 = vmul.f32 %v4087, %v4087
    %v4118 = vmul.f32 %v4089, %v4089
    %v4119 = vadd.f32 %v4111, %v4113
    %v4120 = vadd.f32 %v4119, %v4115
    %v4121 = vadd.f32 %v4120, %v4117
    %v4122 = vrot.slane %v4121, 4
    %v4123 = vadd.f32 %v4121, %v4122
    %v4124 = vrot.slane %v4123, 2
    %v4125 = vadd.f32 %v4123, %v4124
    %v4126 = vrot.slane %v4125, 1
    %v4127 = vadd.f32 %v4125, %v4126
    %v4128 = vadd.f32 %v4112, %v4114
    %v4129 = vadd.f32 %v4128, %v4116
    %v4130 = vadd.f32 %v4129, %v4118
    %v4131 = vrot.slane %v4130, 4
    %v4132 = vadd.f32 %v4130, %v4131
    %v4133 = vrot.slane %v4132, 2
    %v4134 = vadd.f32 %v4132, %v4133
    %v4135 = vrot.slane %v4134, 1
    %v4136 = vadd.f32 %v4134, %v4135
    %v4137 = vadd.f32 %v4101, %v4110
    %v4138 = vadd.f32 %v4127, %v4136
    %4140 = vrot.lane.b32.xlu0 %v4137, 64
    %v4141 = vpop.permute.xlu0 %4140
    %v4143 = vadd.f32 %v4137, %v4141
    %4145 = vrot.lane.b32.xlu0 %v4138, 64
    %v4146 = vpop.permute.xlu0 %4145
    %v4148 = vadd.f32 %v4138, %v4146
    %4150 = vrot.lane.b32.xlu0 %v4143, 96
    %v4151 = vpop.permute.xlu0 %4150
    %v4153 = vadd.f32 %v4143, %v4151
    %4155 = vrot.lane.b32.xlu0 %v4148, 96
    %v4156 = vpop.permute.xlu0 %4155
    %v4158 = vadd.f32 %v4148, %v4156
    %4160 = vrot.lane.b32.xlu0 %v4153, 112
    %v4161 = vpop.permute.xlu0 %4160
    %v4163 = vadd.f32 %v4153, %v4161
    %4165 = vrot.lane.b32.xlu0 %v4158, 112
    %v4166 = vpop.permute.xlu0 %4165
    %v4168 = vadd.f32 %v4158, %v4166
    %4170 = vrot.lane.b32.xlu0 %v4163, 120
    %v4171 = vpop.permute.xlu0 %4170
    %v4173 = vadd.f32 %v4163, %v4171
    %4175 = vrot.lane.b32.xlu0 %v4168, 120
    %v4176 = vpop.permute.xlu0 %4175
    %v4178 = vadd.f32 %v4168, %v4176
    %4180 = vrot.lane.b32.xlu0 %v4173, 124
    %v4181 = vpop.permute.xlu0 %4180
    %v4183 = vadd.f32 %v4173, %v4181
    %4185 = vrot.lane.b32.xlu0 %v4178, 124
    %v4186 = vpop.permute.xlu0 %4185
    %v4188 = vadd.f32 %v4178, %v4186
    %v4189 = vmul.f32 %v4183, 0.00048828125
    %v4190 = vmul.f32 %v4188, 0.00048828125
    %v4191 = vmul.f32 %v4189, %v4189
    %v4192 = vsub.f32 %v4190, %v4191
    %v4193 = vadd.f32 %v4192, 1e-05
    %v4194 = vrsqrt.pop %v4193
    %v4195 = vmul.f32 %v4091, %v4194
    %v4196 = vmul.f32 %v4189, %v4195
    %v4197 = vsub.f32 %v4092, %v4196
    %v4199 = vlaneseq
    %v4200 = vshrl.u32 %v4199, 7
    %v4201 = vsub.s32 0, %v4200
    %v4202 = vrot.slane %v4195, %v4201
    %4203 = vrot.lane.b32.xlu0 %v4202, 4
    %v4204 = vpop.permute.xlu0 %4203
    %vm4206 = vcmask 31744
    %v4207 = vsel %vm4206, %v4195, %v4204
    %v4209 = vlaneseq
    %v4210 = vshrl.u32 %v4209, 7
    %v4211 = vsub.s32 0, %v4210
    %v4212 = vrot.slane %v4197, %v4211
    %4213 = vrot.lane.b32.xlu0 %v4212, 4
    %v4214 = vpop.permute.xlu0 %4213
    %v4216 = vsel %vm4206, %v4197, %v4214
    %4218 = vrot.lane.b32.xlu0 %v4207, 8
    %v4219 = vpop.permute.xlu0 %4218
    %vm4221 = vcmask 64512
    %v4222 = vsel %vm4221, %v4207, %v4219
    %4224 = vrot.lane.b32.xlu0 %v4216, 8
    %v4225 = vpop.permute.xlu0 %4224
    %v4227 = vsel %vm4221, %v4216, %v4225
    %4229 = vrot.lane.b32.xlu0 %v4222, 16
    %v4230 = vpop.permute.xlu0 %4229
    %v4232 = vsel %vm3093, %v4222, %v4230
    %4234 = vrot.lane.b32.xlu0 %v4227, 16
    %v4235 = vpop.permute.xlu0 %4234
    %v4237 = vsel %vm3093, %v4227, %v4235
    %4239 = vrot.lane.b32.xlu0 %v4232, 32
    %v4240 = vpop.permute.xlu0 %4239
    %v4242 = vsel %vm1595, %v4232, %v4240
    %4244 = vrot.lane.b32.xlu0 %v4237, 32
    %v4245 = vpop.permute.xlu0 %4244
    %v4247 = vsel %vm1595, %v4237, %v4245
    %4249 = vrot.lane.b32.xlu0 %v4242, 64
    %v4250 = vpop.permute.xlu0 %4249
    %v4252 = vsel %vm1610, %v4242, %v4250
    %4254 = vrot.lane.b32.xlu0 %v4247, 64
    %v4255 = vpop.permute.xlu0 %4254
    %v4257 = vsel %vm1610, %v4247, %v4255
    %v4258 = vlaneseq
    %v4259 = vshrl.u32 %v4258, 7
    %v4260 = vsub.s32 0, %v4259
    %v4261 = vrot.slane %v4252, %v4260
    %v4262 = vmul.f32 %v4073, %v4261
    %v4263 = vmul.f32 %v4075, %v4261
    %v4264 = vmul.f32 %v4077, %v4261
    %v4265 = vmul.f32 %v4079, %v4261
    %v4266 = vmul.f32 %v4083, %v4261
    %v4267 = vmul.f32 %v4085, %v4261
    %v4268 = vmul.f32 %v4087, %v4261
    %v4269 = vmul.f32 %v4089, %v4261
    %v4270 = vlaneseq
    %v4271 = vshrl.u32 %v4270, 7
    %v4272 = vsub.s32 0, %v4271
    %v4273 = vrot.slane %v4257, %v4272
    %v4274 = vadd.f32 %v4262, %v4273
    %v4275 = vadd.f32 %v4263, %v4273
    %v4276 = vadd.f32 %v4264, %v4273
    %v4277 = vadd.f32 %v4265, %v4273
    %v4278 = vadd.f32 %v4266, %v4273
    %v4279 = vadd.f32 %v4267, %v4273
    %v4280 = vadd.f32 %v4268, %v4273
    %v4281 = vadd.f32 %v4269, %v4273
    %vm4282 = vcmp.gt.f32.partialorder %v4274, 0.0
    %vm4283 = vcmp.gt.f32.partialorder %v4275, 0.0
    %vm4284 = vcmp.gt.f32.partialorder %v4276, 0.0
    %vm4285 = vcmp.gt.f32.partialorder %v4277, 0.0
    %vm4286 = vcmp.gt.f32.partialorder %v4278, 0.0
    %vm4287 = vcmp.gt.f32.partialorder %v4279, 0.0
    %vm4288 = vcmp.gt.f32.partialorder %v4280, 0.0
    %vm4289 = vcmp.gt.f32.partialorder %v4281, 0.0
    %v4290 = vmul.f32 %v4274, 0.2
    %v4291 = vmul.f32 %v4275, 0.2
    %v4292 = vmul.f32 %v4276, 0.2
    %v4293 = vmul.f32 %v4277, 0.2
    %v4294 = vmul.f32 %v4278, 0.2
    %v4295 = vmul.f32 %v4279, 0.2
    %v4296 = vmul.f32 %v4280, 0.2
    %v4297 = vmul.f32 %v4281, 0.2
    %v4298 = vsel %vm4282, %v4274, %v4290
    %v4299 = vsel %vm4283, %v4275, %v4291
    %v4300 = vsel %vm4284, %v4276, %v4292
    %v4301 = vsel %vm4285, %v4277, %v4293
    %v4302 = vsel %vm4286, %v4278, %v4294
    %v4303 = vsel %vm4287, %v4279, %v4295
    %v4304 = vsel %vm4288, %v4280, %v4296
    %v4305 = vsel %vm4289, %v4281, %v4297
    %4306 = vst [vmem:[%s11] sm:$0x1] %v4298
    %4307 = vst [vmem:[%s11 + $0x1] sm:$0x1] %v4299
    %4308 = vst [vmem:[%s11 + $0x1] sm:$0x2] %v4298
    %4309 = vst [vmem:[%s11 + $0x2] sm:$0x2] %v4299
    %4310 = vst [vmem:[%s11 + $0x2] sm:$0x4] %v4298
    %4311 = vst [vmem:[%s11 + $0x3] sm:$0x4] %v4299
    %4312 = vst [vmem:[%s11 + $0x3] sm:$0x8] %v4298
    %4313 = vst [vmem:[%s11 + $0x4] sm:$0x8] %v4299
    %4314 = vst [vmem:[%s11 + $0x4] sm:$0x10] %v4298
    %4315 = vst [vmem:[%s11 + $0x5] sm:$0x10] %v4299
    %4316 = vst [vmem:[%s11 + $0x5] sm:$0x20] %v4298
    %4317 = vst [vmem:[%s11 + $0x6] sm:$0x20] %v4299
    %4318 = vst [vmem:[%s11 + $0x6] sm:$0x40] %v4298
    %4319 = vst [vmem:[%s11 + $0x7] sm:$0x40] %v4299
    %4320 = vst [vmem:[%s11 + $0x7] sm:$0x80] %v4298
    %4321 = vst [vmem:[%s11 + $0x8] sm:$0x80] %v4299
    %4322 = vst [vmem:[%s11 + $0x10] sm:$0x1] %v4300
    %4323 = vst [vmem:[%s11 + $0x11] sm:$0x1] %v4301
    %4324 = vst [vmem:[%s11 + $0x11] sm:$0x2] %v4300
    %4325 = vst [vmem:[%s11 + $0x12] sm:$0x2] %v4301
    %4326 = vst [vmem:[%s11 + $0x12] sm:$0x4] %v4300
    %4327 = vst [vmem:[%s11 + $0x13] sm:$0x4] %v4301
    %4328 = vst [vmem:[%s11 + $0x13] sm:$0x8] %v4300
    %4329 = vst [vmem:[%s11 + $0x14] sm:$0x8] %v4301
    %4330 = vst [vmem:[%s11 + $0x14] sm:$0x10] %v4300
    %4331 = vst [vmem:[%s11 + $0x15] sm:$0x10] %v4301
    %4332 = vst [vmem:[%s11 + $0x15] sm:$0x20] %v4300
    %4333 = vst [vmem:[%s11 + $0x16] sm:$0x20] %v4301
    %4334 = vst [vmem:[%s11 + $0x16] sm:$0x40] %v4300
    %4335 = vst [vmem:[%s11 + $0x17] sm:$0x40] %v4301
    %4336 = vst [vmem:[%s11 + $0x17] sm:$0x80] %v4300
    %4337 = vst [vmem:[%s11 + $0x18] sm:$0x80] %v4301
    %4338 = vst [vmem:[%s11 + $0x20] sm:$0x1] %v4302
    %4339 = vst [vmem:[%s11 + $0x21] sm:$0x1] %v4303
    %4340 = vst [vmem:[%s11 + $0x21] sm:$0x2] %v4302
    %4341 = vst [vmem:[%s11 + $0x22] sm:$0x2] %v4303
    %4342 = vst [vmem:[%s11 + $0x22] sm:$0x4] %v4302
    %4343 = vst [vmem:[%s11 + $0x23] sm:$0x4] %v4303
    %4344 = vst [vmem:[%s11 + $0x23] sm:$0x8] %v4302
    %4345 = vst [vmem:[%s11 + $0x24] sm:$0x8] %v4303
    %4346 = vst [vmem:[%s11 + $0x24] sm:$0x10] %v4302
    %4347 = vst [vmem:[%s11 + $0x25] sm:$0x10] %v4303
    %4348 = vst [vmem:[%s11 + $0x25] sm:$0x20] %v4302
    %4349 = vst [vmem:[%s11 + $0x26] sm:$0x20] %v4303
    %4350 = vst [vmem:[%s11 + $0x26] sm:$0x40] %v4302
    %4351 = vst [vmem:[%s11 + $0x27] sm:$0x40] %v4303
    %4352 = vst [vmem:[%s11 + $0x27] sm:$0x80] %v4302
    %4353 = vst [vmem:[%s11 + $0x28] sm:$0x80] %v4303
    %4354 = vst [vmem:[%s11 + $0x30] sm:$0x1] %v4304
    %4355 = vst [vmem:[%s11 + $0x31] sm:$0x1] %v4305
    %4356 = vst [vmem:[%s11 + $0x31] sm:$0x2] %v4304
    %4357 = vst [vmem:[%s11 + $0x32] sm:$0x2] %v4305
    %4358 = vst [vmem:[%s11 + $0x32] sm:$0x4] %v4304
    %4359 = vst [vmem:[%s11 + $0x33] sm:$0x4] %v4305
    %4360 = vst [vmem:[%s11 + $0x33] sm:$0x8] %v4304
    %4361 = vst [vmem:[%s11 + $0x34] sm:$0x8] %v4305
    %4362 = vst [vmem:[%s11 + $0x34] sm:$0x10] %v4304
    %4363 = vst [vmem:[%s11 + $0x35] sm:$0x10] %v4305
    %4364 = vst [vmem:[%s11 + $0x35] sm:$0x20] %v4304
    %4365 = vst [vmem:[%s11 + $0x36] sm:$0x20] %v4305
    %4366 = vst [vmem:[%s11 + $0x36] sm:$0x40] %v4304
    %4367 = vst [vmem:[%s11 + $0x37] sm:$0x40] %v4305
    %4368 = vst [vmem:[%s11 + $0x37] sm:$0x80] %v4304
    %4369 = vst [vmem:[%s11 + $0x38] sm:$0x80] %v4305
    // Predicated region
    $region66: #{generator_forward.1} parent=1 // pred_check
      _
    $region67: #{generator_forward.1} parent=1 // pred_check_branch
      %4371 = sbr.rel (0) target = $region69
    $region68: #{generator_forward.1} parent=1 // pred_region
      _
    $region69: #{generator_forward.1} parent=1 // pred_fallthru
      _
    // Predicated region
    $region70: #{generator_forward.1} parent=1 // pred_check
      _
    $region71: #{generator_forward.1} parent=1 // pred_check_branch
      %4373 = sbr.rel (0) target = $region73
    $region72: #{generator_forward.1} parent=1 // pred_region
      _
    $region73: #{generator_forward.1} parent=1 // pred_fallthru
      _
    %4374 = vsyncpa [#allocation5], 1
    %4375 = vsyncpa [#allocation7], 1
    %4376 = vsyncpa [#allocation10], 1

</llo_original>
